<compile_context>
chip_gen: v7x
topology: tpu7x:2x2x1
jax: 0.10.0
libtpu: 0.0.40
codegen_flags: <defaults>
</compile_context>

<pallas_src>
import functools

import numpy as np
import jax
import jax.numpy as jnp
from jax.experimental import pallas as pl
from jax.experimental.pallas import tpu as pltpu


# ------------------------------ Pallas kernel -------------------------------

def bottleneck_kernel(x_ref, w1_ref, s1_ref, b1_ref,
                      w2_ref, s2_ref, b2_ref,
                      w3_ref, s3_ref, b3_ref,
                      o_ref, h1p_ref, *, H, W, chunk, off):
    """One (image, row-chunk) grid step.

    x_ref  : (H*W, Cin)         flattened NHWC image (batch dim squeezed)
    w1_ref : (Cin, P)           conv1 weight, pre-transposed
    w2_ref : (3, 3P, P)         conv2 weight as (kx, ky*Cin, Cout)
    w3_ref : (P, 4P)            conv3 weight, pre-transposed
    s*/b*  : (1, C) f32         folded BatchNorm scale / bias
    o_ref  : (chunk*W, 4P)      output rows of this chunk (lane-dense)
    h1p_ref: (H+2, W+2*off, P)  persistent halo scratch for conv1 output
    """
    rc = pl.program_id(1)
    P = w1_ref.shape[1]

    # ---- once per image (rc == 0): conv1 (1x1) + bn1 + relu -> halo scratch.
    # Keyed on the row-chunk ("arbitrary") axis, NOT the batch axis, so it is
    # megacore-safe: every core runs rc == 0 for each of its own images.
    @pl.when(rc == 0)
    def _():
        h1 = jnp.dot(x_ref[...], w1_ref[...],
                     preferred_element_type=jnp.float32)
        h1 = jnp.maximum(h1 * s1_ref[...] + b1_ref[...], 0.0)
        # interior at column offset `off` (multiple of 8) -> aligned store
        h1p_ref[1:H + 1, off:off + W, :] = (
            h1.reshape(H, W, P).astype(h1p_ref.dtype))
        # zero only the halo border: 2 full rows + two aligned 8-wide bands
        zrow = jnp.zeros((h1p_ref.shape[1], P), h1p_ref.dtype)
        h1p_ref[0, :, :] = zrow
        h1p_ref[H + 1, :, :] = zrow
        zcol = jnp.zeros((H, off, P), h1p_ref.dtype)
        h1p_ref[1:H + 1, 0:off, :] = zcol
        h1p_ref[1:H + 1, off + W:off + W + off, :] = zcol

    # ---- every step: conv2 (3x3) + bn2 + relu, conv3 (1x1) + bn3 + add + relu
    r0 = rc * chunk                         # first output row of this chunk
    # Fold the 3 ky taps into the contraction: axis-0 scratch slices are
    # layout-free; the lane concat gives a K = 3P MXU feed.
    cat = jnp.concatenate(
        [h1p_ref[pl.ds(r0 + ky, chunk), :, :] for ky in range(3)], axis=-1)

    acc2 = jnp.zeros((chunk * W, P), jnp.float32)
    for kx in range(3):                     # 3 matmuls, K = 3P each
        patch = cat[:, off - 1 + kx:off - 1 + kx + W, :]
        acc2 = acc2 + jnp.dot(patch.reshape(chunk * W, 3 * P), w2_ref[kx],
                              preferred_element_type=jnp.float32)
    h2 = jnp.maximum(acc2 * s2_ref[...] + b2_ref[...], 0.0)

    acc3 = jnp.dot(h2.astype(w3_ref.dtype), w3_ref[...],
                   preferred_element_type=jnp.float32)
    res_start = pl.multiple_of(r0 * W, chunk * W)
    res = x_ref[pl.ds(res_start, chunk * W), :].astype(jnp.float32)
    out = jnp.maximum(acc3 * s3_ref[...] + b3_ref[...] + res, 0.0)
    o_ref[...] = out.astype(o_ref.dtype)    # one lane-dense unmasked store


# ------------------------------ JAX wrapper ----------------------------------

def _fold_bn(gamma, beta, mean, var, eps=1e-5):
    scale = gamma / jnp.sqrt(var + eps)
    bias = beta - mean * scale
    return (scale.reshape(1, -1).astype(jnp.float32),
            bias.reshape(1, -1).astype(jnp.float32))


def _pick_chunk(h, w):
    """Largest proper divisor of H whose chunk*W is sublane-aligned.

    chunk < H gives the pipeline >= 2 grid steps per image; chunk*W % 8 == 0
    keeps the output block legal / stores unmasked.  Falls back to the whole
    image (block == full dim is always legal, e.g. 7x7 stages)."""
    for c in range(h // 2, 0, -1):
        if h % c == 0 and (c * w) % 8 == 0:
            return c
    return h


def _vmem_limit_bytes():
    """Gen-aware VMEM budget: 3/4 of physical (~96 MiB v5e/v6e, ~48 MiB v7x)."""
    try:
        cap = pltpu.get_tpu_info().vmem_capacity_bytes
    except Exception:
        cap = 64 * 1024 * 1024
    return int(cap * 3 // 4)


def bottleneck_forward_nhwc(x_nhwc, p, *, compute_dtype=None):
    """Fused Bottleneck forward (stride=1, downsample=None), NHWC in / out."""
    N, H, W, Cin = x_nhwc.shape
    planes = p['w1'].shape[0]
    Cout = planes * 4
    assert Cin == Cout, "stride=1 / no-downsample bottleneck requires Cin == 4*planes"
    cdt = jnp.dtype(compute_dtype) if compute_dtype is not None else x_nhwc.dtype

    OFF = 8                                  # aligned interior column offset
    chunk = _pick_chunk(H, W)
    RC = H // chunk
    CHW = chunk * W

    # Lane-dense (rows, C) slabs; the (N,H,W,C)->(N,H*W,C) reshape is free.
    x2d = x_nhwc.reshape(N, H * W, Cin).astype(cdt)

    # Pre-transposed weights: every contraction is (M, K) @ (K, N).
    w1 = p['w1'][:, :, 0, 0].T.astype(cdt)                         # (Cin, P)
    w2 = jnp.transpose(p['w2'], (3, 2, 1, 0)).reshape(
        3, 3 * planes, planes).astype(cdt)                         # (kx, 3P, P)
    w3 = p['w3'][:, :, 0, 0].T.astype(cdt)                         # (P, 4P)
    s1, b1 = _fold_bn(p['g1'], p['b1'], p['m1'], p['v1'])
    s2, b2 = _fold_bn(p['g2'], p['b2'], p['m2'], p['v2'])
    s3, b3 = _fold_bn(p['g3'], p['b3'], p['m3'], p['v3'])

    kernel = functools.partial(bottleneck_kernel, H=H, W=W, chunk=chunk, off=OFF)

    def build(single_buffer_weights):
        def wspec(shape):
            ndim = len(shape)
            imap = lambda n, rc: (0,) * ndim
            if single_buffer_weights:
                # constant-index weights/scales never re-DMA -> 1 buffer saves
                # VMEM for the big-channel stages (matters on v7x's 64 MiB).
                return pl.BlockSpec(shape, imap, pipeline_mode=pl.Buffered(1))
            return pl.BlockSpec(shape, imap)

        return pl.pallas_call(
            kernel,
            out_shape=jax.ShapeDtypeStruct((N, H * W, Cout), cdt),
            grid=(N, RC),
            in_specs=[
                pl.BlockSpec((None, H * W, Cin), lambda n, rc: (n, 0, 0)),   # x
                wspec((Cin, planes)),                                        # w1
                wspec((1, planes)), wspec((1, planes)),                      # s1,b1
                wspec((3, 3 * planes, planes)),                              # w2
                wspec((1, planes)), wspec((1, planes)),                      # s2,b2
                wspec((planes, Cout)),                                       # w3
                wspec((1, Cout)), wspec((1, Cout)),                          # s3,b3
            ],
            out_specs=pl.BlockSpec((None, CHW, Cout), lambda n, rc: (n, rc, 0)),
            scratch_shapes=[pltpu.VMEM((H + 2, W + 2 * OFF, planes), cdt)],
            compiler_params=pltpu.CompilerParams(
                dimension_semantics=("parallel", "arbitrary"),
                vmem_limit_bytes=_vmem_limit_bytes(),
            ),
        )

    args = (x2d, w1, s1, b1, w2, s2, b2, w3, s3, b3)
    try:
        out2d = jax.block_until_ready(build(True)(*args))
    except Exception:
        # pipeline_mode / Buffered(1) not supported here: default buffering.
        out2d = build(False)(*args)
    return out2d.reshape(N, H, W, Cout)


def bottleneck_forward_nchw(x_nchw, p, *, compute_dtype=None):
    """Drop-in (PyTorch NCHW) adapter.  In a full network keep activations
    NHWC and call bottleneck_forward_nhwc directly — these two transposes are
    the only NCHW<->NHWC HBM passes and exist purely for reference parity."""
    x_nhwc = jnp.transpose(x_nchw, (0, 2, 3, 1))
    out = bottleneck_forward_nhwc(x_nhwc, p, compute_dtype=compute_dtype)
    return jnp.transpose(out, (0, 3, 1, 2))


# ------------------------------ pure-JAX reference ---------------------------

def bottleneck_ref(x, p, eps=1e-5):
    def bn(y, g, b, m, v):
        s = (g / jnp.sqrt(v + eps))[None, :, None, None]
        return (y - m[None, :, None, None]) * s + b[None, :, None, None]

    dn = ('NCHW', 'OIHW', 'NCHW')
    hi = jax.lax.Precision.HIGHEST
    out = jax.lax.conv_general_dilated(x, p['w1'], (1, 1), 'VALID',
                                       dimension_numbers=dn, precision=hi)
    out = jax.nn.relu(bn(out, p['g1'], p['b1'], p['m1'], p['v1']))
    out = jax.lax.conv_general_dilated(out, p['w2'], (1, 1),
                                       [(1, 1), (1, 1)],
                                       dimension_numbers=dn, precision=hi)
    out = jax.nn.relu(bn(out, p['g2'], p['b2'], p['m2'], p['v2']))
    out = jax.lax.conv_general_dilated(out, p['w3'], (1, 1), 'VALID',
                                       dimension_numbers=dn, precision=hi)
    out = bn(out, p['g3'], p['b3'], p['m3'], p['v3'])
    return jax.nn.relu(out + x)


# ----------------------------------- main ------------------------------------

if __name__ == "__main__":
    # Small but lane-sensible config: Cout = 4*planes = 128 (lane-dense output)
    inplanes, planes = 128, 32
    N, H, W = 2, 16, 16

    key = jax.random.PRNGKey(0)
    ks = jax.random.split(key, 8)
    x = jax.random.normal(ks[0], (N, inplanes, H, W), jnp.float32)

    def bn_params(k, c):
        k1, k2, k3, k4 = jax.random.split(k, 4)
        return (jax.random.normal(k1, (c,), jnp.float32) * 0.1 + 1.0,    # gamma
                jax.random.normal(k2, (c,), jnp.float32) * 0.1,          # beta
                jax.random.normal(k3, (c,), jnp.float32) * 0.1,          # mean
                jnp.abs(jax.random.normal(k4, (c,), jnp.float32)) + 0.5) # var

    g1, b1, m1, v1 = bn_params(ks[4], planes)
    g2, b2, m2, v2 = bn_params(ks[5], planes)
    g3, b3, m3, v3 = bn_params(ks[6], planes * 4)

    params = {
        'w1': jax.random.normal(ks[1], (planes, inplanes, 1, 1),
                                jnp.float32) / np.sqrt(inplanes),
        'w2': jax.random.normal(ks[2], (planes, planes, 3, 3),
                                jnp.float32) / np.sqrt(9 * planes),
        'w3': jax.random.normal(ks[3], (planes * 4, planes, 1, 1),
                                jnp.float32) / np.sqrt(planes),
        'g1': g1, 'b1': b1, 'm1': m1, 'v1': v1,
        'g2': g2, 'b2': b2, 'm2': m2, 'v2': v2,
        'g3': g3, 'b3': b3, 'm3': m3, 'v3': v3,
    }

    # f32 path: strict check against the f32 reference.
    out = bottleneck_forward_nchw(x, params)
    out = jax.block_until_ready(out)
    ref = bottleneck_ref(x, params)
    np.testing.assert_allclose(np.asarray(out), np.asarray(ref),
                               rtol=1e-3, atol=1e-3)

    # bf16 MXU-feed path (review item): loose sanity check vs the f32 ref.
    out_bf16 = bottleneck_forward_nchw(x, params, compute_dtype=jnp.bfloat16)
    out_bf16 = np.asarray(jax.block_until_ready(out_bf16)).astype(np.float32)
    ref_np = np.asarray(ref)
    err = float(np.max(np.abs(out_bf16 - ref_np)))
    assert np.isfinite(err) and err <= 0.1 * float(np.max(np.abs(ref_np))) + 0.1, \
        f"bf16 path diverged too far from reference: max abs diff {err}"

    print("KERNEL_OK")
</pallas_src>

<mosaic_0001>
module attributes {stable_mosaic.version = 11 : i64} {
  func.func @bottleneck_kernel(%arg0: i32, %arg1: i32, %arg2: memref<1x256x128xf32, #tpu.memory_space<vmem>>, %arg3: memref<128x32xf32, #tpu.memory_space<vmem>>, %arg4: memref<1x32xf32, #tpu.memory_space<vmem>>, %arg5: memref<1x32xf32, #tpu.memory_space<vmem>>, %arg6: memref<3x96x32xf32, #tpu.memory_space<vmem>>, %arg7: memref<1x32xf32, #tpu.memory_space<vmem>>, %arg8: memref<1x32xf32, #tpu.memory_space<vmem>>, %arg9: memref<32x128xf32, #tpu.memory_space<vmem>>, %arg10: memref<1x128xf32, #tpu.memory_space<vmem>>, %arg11: memref<1x128xf32, #tpu.memory_space<vmem>>, %arg12: memref<1x128x128xf32, #tpu.memory_space<vmem>>, %arg13: memref<18x32x32xf32, #tpu.memory_space<vmem>>) attributes {dimension_semantics = [#tpu.dimension_semantics<parallel>, #tpu.dimension_semantics<arbitrary>], iteration_bounds = array<i64: 2, 2>, scalar_prefetch = 0 : i64, scratch_operands = 1 : i64, tpu.core_type = #tpu.core_type<tc>, window_params = [{transform_indices = @transform_0, window_bounds = array<i64: 1, 256, 128>}, {pipeline_mode = #tpu.pipeline_mode<synchronous>, transform_indices = @transform_1, window_bounds = array<i64: 128, 32>}, {pipeline_mode = #tpu.pipeline_mode<synchronous>, transform_indices = @transform_2, window_bounds = array<i64: 1, 32>}, {pipeline_mode = #tpu.pipeline_mode<synchronous>, transform_indices = @transform_3, window_bounds = array<i64: 1, 32>}, {pipeline_mode = #tpu.pipeline_mode<synchronous>, transform_indices = @transform_4, window_bounds = array<i64: 3, 96, 32>}, {pipeline_mode = #tpu.pipeline_mode<synchronous>, transform_indices = @transform_5, window_bounds = array<i64: 1, 32>}, {pipeline_mode = #tpu.pipeline_mode<synchronous>, transform_indices = @transform_6, window_bounds = array<i64: 1, 32>}, {pipeline_mode = #tpu.pipeline_mode<synchronous>, transform_indices = @transform_7, window_bounds = array<i64: 32, 128>}, {pipeline_mode = #tpu.pipeline_mode<synchronous>, transform_indices = @transform_8, window_bounds = array<i64: 1, 128>}, {pipeline_mode = #tpu.pipeline_mode<synchronous>, transform_indices = @transform_9, window_bounds = array<i64: 1, 128>}, {transform_indices = @transform_10, window_bounds = array<i64: 1, 128, 128>}]} {
    %c0_i32 = arith.constant 0 : i32
    %0 = arith.cmpi eq, %arg1, %c0_i32 : i32
    %1 = arith.extui %0 : i1 to i32
    %c0_i32_0 = arith.constant 0 : i32
    %2 = arith.cmpi ne, %1, %c0_i32_0 : i32
    scf.if %2 {
      %c0_35 = arith.constant 0 : index
      %c0_36 = arith.constant 0 : index
      %c0_37 = arith.constant 0 : index
      %60 = vector.load %arg2[%c0_35, %c0_36, %c0_37] : memref<1x256x128xf32, #tpu.memory_space<vmem>>, vector<1x256x128xf32>
      %61 = vector.shape_cast %60 : vector<1x256x128xf32> to vector<256x128xf32>
      %c0_38 = arith.constant 0 : index
      %c0_39 = arith.constant 0 : index
      %62 = vector.load %arg3[%c0_38, %c0_39] : memref<128x32xf32, #tpu.memory_space<vmem>>, vector<128x32xf32>
      %cst_40 = arith.constant dense<0.000000e+00> : vector<256x32xf32>
      %63 = tpu.matmul %61, %62, %cst_40 {dimension_numbers = #tpu.dot_dimension_numbers<[1], [0], [0], [1], [0, 0, 1, 1], [], []>} : vector<256x128xf32>, vector<128x32xf32>, vector<256x32xf32> -> vector<256x32xf32>
      %c0_41 = arith.constant 0 : index
      %c0_42 = arith.constant 0 : index
      %64 = vector.load %arg4[%c0_41, %c0_42] : memref<1x32xf32, #tpu.memory_space<vmem>>, vector<1x32xf32>
      %65 = vector.broadcast %64 : vector<1x32xf32> to vector<256x32xf32>
      %66 = arith.mulf %63, %65 : vector<256x32xf32>
      %c0_43 = arith.constant 0 : index
      %c0_44 = arith.constant 0 : index
      %67 = vector.load %arg5[%c0_43, %c0_44] : memref<1x32xf32, #tpu.memory_space<vmem>>, vector<1x32xf32>
      %68 = vector.broadcast %67 : vector<1x32xf32> to vector<256x32xf32>
      %69 = arith.addf %66, %68 : vector<256x32xf32>
      %cst_45 = arith.constant 0.000000e+00 : f32
      %70 = vector.broadcast %cst_45 : f32 to vector<256x32xf32>
      %71 = arith.maximumf %69, %70 : vector<256x32xf32>
      %72 = vector.shape_cast %71 : vector<256x32xf32> to vector<16x16x32xf32>
      %c1_46 = arith.constant 1 : index
      %c8 = arith.constant 8 : index
      %c0_47 = arith.constant 0 : index
      %73 = vector.load %arg13[%c1_46, %c8, %c0_47] : memref<18x32x32xf32, #tpu.memory_space<vmem>>, vector<16x16x32xf32>
      tpu.vector_store %arg13[%c1_46, %c8, %c0_47], %72 {strides = array<i32>} : memref<18x32x32xf32, #tpu.memory_space<vmem>>, vector<16x16x32xf32>,
      %cst_48 = arith.constant 0.000000e+00 : f32
      %74 = vector.broadcast %cst_48 : f32 to vector<32x32xf32>
      %c0_49 = arith.constant 0 : index
      %c0_50 = arith.constant 0 : index
      %c0_51 = arith.constant 0 : index
      %75 = vector.load %arg13[%c0_49, %c0_50, %c0_51] : memref<18x32x32xf32, #tpu.memory_space<vmem>>, vector<1x32x32xf32>
      %76 = vector.shape_cast %75 : vector<1x32x32xf32> to vector<32x32xf32>
      %77 = vector.shape_cast %74 : vector<32x32xf32> to vector<1x32x32xf32>
      tpu.vector_store %arg13[%c0_49, %c0_50, %c0_51], %77 {strides = array<i32>} : memref<18x32x32xf32, #tpu.memory_space<vmem>>, vector<1x32x32xf32>,
      %c17 = arith.constant 17 : index
      %c0_52 = arith.constant 0 : index
      %c0_53 = arith.constant 0 : index
      %78 = vector.load %arg13[%c17, %c0_52, %c0_53] : memref<18x32x32xf32, #tpu.memory_space<vmem>>, vector<1x32x32xf32>
      %79 = vector.shape_cast %78 : vector<1x32x32xf32> to vector<32x32xf32>
      %80 = vector.shape_cast %74 : vector<32x32xf32> to vector<1x32x32xf32>
      tpu.vector_store %arg13[%c17, %c0_52, %c0_53], %80 {strides = array<i32>} : memref<18x32x32xf32, #tpu.memory_space<vmem>>, vector<1x32x32xf32>,
      %cst_54 = arith.constant 0.000000e+00 : f32
      %81 = vector.broadcast %cst_54 : f32 to vector<16x8x32xf32>
      %c1_55 = arith.constant 1 : index
      %c0_56 = arith.constant 0 : index
      %c0_57 = arith.constant 0 : index
      %82 = vector.load %arg13[%c1_55, %c0_56, %c0_57] : memref<18x32x32xf32, #tpu.memory_space<vmem>>, vector<16x8x32xf32>
      tpu.vector_store %arg13[%c1_55, %c0_56, %c0_57], %81 {strides = array<i32>} : memref<18x32x32xf32, #tpu.memory_space<vmem>>, vector<16x8x32xf32>,
      %c1_58 = arith.constant 1 : index
      %c24 = arith.constant 24 : index
      %c0_59 = arith.constant 0 : index
      %83 = vector.load %arg13[%c1_58, %c24, %c0_59] : memref<18x32x32xf32, #tpu.memory_space<vmem>>, vector<16x8x32xf32>
      tpu.vector_store %arg13[%c1_58, %c24, %c0_59], %81 {strides = array<i32>} : memref<18x32x32xf32, #tpu.memory_space<vmem>>, vector<16x8x32xf32>,
    } else {
    }
    %c8_i32 = arith.constant 8 : i32
    %3 = arith.muli %arg1, %c8_i32 : i32
    %c0_i32_1 = arith.constant 0 : i32
    %4 = arith.addi %3, %c0_i32_1 : i32
    %5 = arith.index_cast %4 : i32 to index
    %c0 = arith.constant 0 : index
    %c0_2 = arith.constant 0 : index
    %6 = vector.load %arg13[%5, %c0, %c0_2] : memref<18x32x32xf32, #tpu.memory_space<vmem>>, vector<8x32x32xf32>
    %c1_i32 = arith.constant 1 : i32
    %7 = arith.addi %3, %c1_i32 : i32
    %8 = arith.index_cast %7 : i32 to index
    %c0_3 = arith.constant 0 : index
    %c0_4 = arith.constant 0 : index
    %9 = vector.load %arg13[%8, %c0_3, %c0_4] : memref<18x32x32xf32, #tpu.memory_space<vmem>>, vector<8x32x32xf32>
    %c2_i32 = arith.constant 2 : i32
    %10 = arith.addi %3, %c2_i32 : i32
    %11 = arith.index_cast %10 : i32 to index
    %c0_5 = arith.constant 0 : index
    %c0_6 = arith.constant 0 : index
    %12 = vector.load %arg13[%11, %c0_5, %c0_6] : memref<18x32x32xf32, #tpu.memory_space<vmem>>, vector<8x32x32xf32>
    %13 = tpu.concatenate %6, %9, %12 in 2 : vector<8x32x32xf32>, vector<8x32x32xf32>, vector<8x32x32xf32> -> vector<8x32x96xf32>
    %cst = arith.constant 0.000000e+00 : f32
    %14 = vector.broadcast %cst : f32 to vector<128x32xf32>
    %15 = vector.extract_strided_slice %13 {offsets = [0, 7, 0], sizes = [8, 16, 96], strides = [1, 1, 1]} : vector<8x32x96xf32> to vector<8x16x96xf32>
    %16 = vector.shape_cast %15 : vector<8x16x96xf32> to vector<128x96xf32>
    %c0_7 = arith.constant 0 : index
    %c0_8 = arith.constant 0 : index
    %c0_9 = arith.constant 0 : index
    %17 = vector.load %arg6[%c0_7, %c0_8, %c0_9] : memref<3x96x32xf32, #tpu.memory_space<vmem>>, vector<1x96x32xf32>
    %18 = vector.shape_cast %17 : vector<1x96x32xf32> to vector<96x32xf32>
    %cst_10 = arith.constant dense<0.000000e+00> : vector<128x32xf32>
    %19 = tpu.matmul %16, %18, %cst_10 {dimension_numbers = #tpu.dot_dimension_numbers<[1], [0], [0], [1], [0, 0, 1, 1], [], []>} : vector<128x96xf32>, vector<96x32xf32>, vector<128x32xf32> -> vector<128x32xf32>
    %20 = arith.addf %14, %19 : vector<128x32xf32>
    %21 = vector.extract_strided_slice %13 {offsets = [0, 8, 0], sizes = [8, 16, 96], strides = [1, 1, 1]} : vector<8x32x96xf32> to vector<8x16x96xf32>
    %22 = vector.shape_cast %21 : vector<8x16x96xf32> to vector<128x96xf32>
    %c1 = arith.constant 1 : index
    %c0_11 = arith.constant 0 : index
    %c0_12 = arith.constant 0 : index
    %23 = vector.load %arg6[%c1, %c0_11, %c0_12] : memref<3x96x32xf32, #tpu.memory_space<vmem>>, vector<1x96x32xf32>
    %24 = vector.shape_cast %23 : vector<1x96x32xf32> to vector<96x32xf32>
    %cst_13 = arith.constant dense<0.000000e+00> : vector<128x32xf32>
    %25 = tpu.matmul %22, %24, %cst_13 {dimension_numbers = #tpu.dot_dimension_numbers<[1], [0], [0], [1], [0, 0, 1, 1], [], []>} : vector<128x96xf32>, vector<96x32xf32>, vector<128x32xf32> -> vector<128x32xf32>
    %26 = arith.addf %20, %25 : vector<128x32xf32>
    %27 = vector.extract_strided_slice %13 {offsets = [0, 9, 0], sizes = [8, 16, 96], strides = [1, 1, 1]} : vector<8x32x96xf32> to vector<8x16x96xf32>
    %28 = vector.shape_cast %27 : vector<8x16x96xf32> to vector<128x96xf32>
    %c2 = arith.constant 2 : index
    %c0_14 = arith.constant 0 : index
    %c0_15 = arith.constant 0 : index
    %29 = vector.load %arg6[%c2, %c0_14, %c0_15] : memref<3x96x32xf32, #tpu.memory_space<vmem>>, vector<1x96x32xf32>
    %30 = vector.shape_cast %29 : vector<1x96x32xf32> to vector<96x32xf32>
    %cst_16 = arith.constant dense<0.000000e+00> : vector<128x32xf32>
    %31 = tpu.matmul %28, %30, %cst_16 {dimension_numbers = #tpu.dot_dimension_numbers<[1], [0], [0], [1], [0, 0, 1, 1], [], []>} : vector<128x96xf32>, vector<96x32xf32>, vector<128x32xf32> -> vector<128x32xf32>
    %32 = arith.addf %26, %31 : vector<128x32xf32>
    %c0_17 = arith.constant 0 : index
    %c0_18 = arith.constant 0 : index
    %33 = vector.load %arg7[%c0_17, %c0_18] : memref<1x32xf32, #tpu.memory_space<vmem>>, vector<1x32xf32>
    %34 = vector.broadcast %33 : vector<1x32xf32> to vector<128x32xf32>
    %35 = arith.mulf %32, %34 : vector<128x32xf32>
    %c0_19 = arith.constant 0 : index
    %c0_20 = arith.constant 0 : index
    %36 = vector.load %arg8[%c0_19, %c0_20] : memref<1x32xf32, #tpu.memory_space<vmem>>, vector<1x32xf32>
    %37 = vector.broadcast %36 : vector<1x32xf32> to vector<128x32xf32>
    %38 = arith.addf %35, %37 : vector<128x32xf32>
    %cst_21 = arith.constant 0.000000e+00 : f32
    %39 = vector.broadcast %cst_21 : f32 to vector<128x32xf32>
    %40 = arith.maximumf %38, %39 : vector<128x32xf32>
    %c0_22 = arith.constant 0 : index
    %c0_23 = arith.constant 0 : index
    %41 = vector.load %arg9[%c0_22, %c0_23] : memref<32x128xf32, #tpu.memory_space<vmem>>, vector<32x128xf32>
    %cst_24 = arith.constant dense<0.000000e+00> : vector<128x128xf32>
    %42 = tpu.matmul %40, %41, %cst_24 {dimension_numbers = #tpu.dot_dimension_numbers<[1], [0], [0], [1], [0, 0, 1, 1], [], []>} : vector<128x32xf32>, vector<32x128xf32>, vector<128x128xf32> -> vector<128x128xf32>
    %c16_i32 = arith.constant 16 : i32
    %43 = arith.muli %3, %c16_i32 : i32
    %44 = tpu.assume_multiple %43, 128 : i32
    %c0_25 = arith.constant 0 : index
    %45 = arith.index_cast %44 : i32 to index
    %c0_26 = arith.constant 0 : index
    %46 = vector.load %arg2[%c0_25, %45, %c0_26] : memref<1x256x128xf32, #tpu.memory_space<vmem>>, vector<1x128x128xf32>
    %47 = vector.shape_cast %46 : vector<1x128x128xf32> to vector<128x128xf32>
    %c0_27 = arith.constant 0 : index
    %c0_28 = arith.constant 0 : index
    %48 = vector.load %arg10[%c0_27, %c0_28] : memref<1x128xf32, #tpu.memory_space<vmem>>, vector<1x128xf32>
    %49 = vector.broadcast %48 : vector<1x128xf32> to vector<128x128xf32>
    %50 = arith.mulf %42, %49 : vector<128x128xf32>
    %c0_29 = arith.constant 0 : index
    %c0_30 = arith.constant 0 : index
    %51 = vector.load %arg11[%c0_29, %c0_30] : memref<1x128xf32, #tpu.memory_space<vmem>>, vector<1x128xf32>
    %52 = vector.broadcast %51 : vector<1x128xf32> to vector<128x128xf32>
    %53 = arith.addf %50, %52 : vector<128x128xf32>
    %54 = arith.addf %53, %47 : vector<128x128xf32>
    %cst_31 = arith.constant 0.000000e+00 : f32
    %55 = vector.broadcast %cst_31 : f32 to vector<128x128xf32>
    %56 = arith.maximumf %54, %55 : vector<128x128xf32>
    %c0_32 = arith.constant 0 : index
    %c0_33 = arith.constant 0 : index
    %c0_34 = arith.constant 0 : index
    %57 = vector.load %arg12[%c0_32, %c0_33, %c0_34] : memref<1x128x128xf32, #tpu.memory_space<vmem>>, vector<1x128x128xf32>
    %58 = vector.shape_cast %57 : vector<1x128x128xf32> to vector<128x128xf32>
    %59 = vector.shape_cast %56 : vector<128x128xf32> to vector<1x128x128xf32>
    tpu.vector_store %arg12[%c0_32, %c0_33, %c0_34], %59 {strides = array<i32>} : memref<1x128x128xf32, #tpu.memory_space<vmem>>, vector<1x128x128xf32>,
    return
  }
  func.func @transform_0(%arg0: i32, %arg1: i32) -> (i32, i32, i32) {
    %c0_i32 = arith.constant 0 : i32
    %c0_i32_0 = arith.constant 0 : i32
    %c0_i32_1 = arith.constant 0 : i32
    return %arg0, %c0_i32, %c0_i32_0 : i32, i32, i32
  }
  func.func @transform_1(%arg0: i32, %arg1: i32) -> (i32, i32) {
    %c0_i32 = arith.constant 0 : i32
    %c0_i32_0 = arith.constant 0 : i32
    %c0_i32_1 = arith.constant 0 : i32
    return %c0_i32, %c0_i32_0 : i32, i32
  }
  func.func @transform_2(%arg0: i32, %arg1: i32) -> (i32, i32) {
    %c0_i32 = arith.constant 0 : i32
    %c0_i32_0 = arith.constant 0 : i32
    %c0_i32_1 = arith.constant 0 : i32
    return %c0_i32, %c0_i32_0 : i32, i32
  }
  func.func @transform_3(%arg0: i32, %arg1: i32) -> (i32, i32) {
    %c0_i32 = arith.constant 0 : i32
    %c0_i32_0 = arith.constant 0 : i32
    %c0_i32_1 = arith.constant 0 : i32
    return %c0_i32, %c0_i32_0 : i32, i32
  }
  func.func @transform_4(%arg0: i32, %arg1: i32) -> (i32, i32, i32) {
    %c0_i32 = arith.constant 0 : i32
    %c0_i32_0 = arith.constant 0 : i32
    %c0_i32_1 = arith.constant 0 : i32
    %c0_i32_2 = arith.constant 0 : i32
    return %c0_i32, %c0_i32_0, %c0_i32_1 : i32, i32, i32
  }
  func.func @transform_5(%arg0: i32, %arg1: i32) -> (i32, i32) {
    %c0_i32 = arith.constant 0 : i32
    %c0_i32_0 = arith.constant 0 : i32
    %c0_i32_1 = arith.constant 0 : i32
    return %c0_i32, %c0_i32_0 : i32, i32
  }
  func.func @transform_6(%arg0: i32, %arg1: i32) -> (i32, i32) {
    %c0_i32 = arith.constant 0 : i32
    %c0_i32_0 = arith.constant 0 : i32
    %c0_i32_1 = arith.constant 0 : i32
    return %c0_i32, %c0_i32_0 : i32, i32
  }
  func.func @transform_7(%arg0: i32, %arg1: i32) -> (i32, i32) {
    %c0_i32 = arith.constant 0 : i32
    %c0_i32_0 = arith.constant 0 : i32
    %c0_i32_1 = arith.constant 0 : i32
    return %c0_i32, %c0_i32_0 : i32, i32
  }
  func.func @transform_8(%arg0: i32, %arg1: i32) -> (i32, i32) {
    %c0_i32 = arith.constant 0 : i32
    %c0_i32_0 = arith.constant 0 : i32
    %c0_i32_1 = arith.constant 0 : i32
    return %c0_i32, %c0_i32_0 : i32, i32
  }
  func.func @transform_9(%arg0: i32, %arg1: i32) -> (i32, i32) {
    %c0_i32 = arith.constant 0 : i32
    %c0_i32_0 = arith.constant 0 : i32
    %c0_i32_1 = arith.constant 0 : i32
    return %c0_i32, %c0_i32_0 : i32, i32
  }
  func.func @transform_10(%arg0: i32, %arg1: i32) -> (i32, i32, i32) {
    %c0_i32 = arith.constant 0 : i32
    %c0_i32_0 = arith.constant 0 : i32
    return %arg0, %arg1, %c0_i32 : i32, i32, i32
  }
}

module attributes {stable_mosaic.version = 11 : i64} {
  func.func @bottleneck_kernel(%arg0: i32, %arg1: i32, %arg2: memref<1x256x128xf32, #tpu.memory_space<vmem>>, %arg3: memref<128x32xf32, #tpu.memory_space<vmem>>, %arg4: memref<1x32xf32, #tpu.memory_space<vmem>>, %arg5: memref<1x32xf32, #tpu.memory_space<vmem>>, %arg6: memref<3x96x32xf32, #tpu.memory_space<vmem>>, %arg7: memref<1x32xf32, #tpu.memory_space<vmem>>, %arg8: memref<1x32xf32, #tpu.memory_space<vmem>>, %arg9: memref<32x128xf32, #tpu.memory_space<vmem>>, %arg10: memref<1x128xf32, #tpu.memory_space<vmem>>, %arg11: memref<1x128xf32, #tpu.memory_space<vmem>>, %arg12: memref<1x128x128xf32, #tpu.memory_space<vmem>>, %arg13: memref<18x32x32xf32, #tpu.memory_space<vmem>>) attributes {dimension_semantics = [#tpu.dimension_semantics<parallel>, #tpu.dimension_semantics<arbitrary>], iteration_bounds = array<i64: 2, 2>, scalar_prefetch = 0 : i64, scratch_operands = 1 : i64, tpu.core_type = #tpu.core_type<tc>, window_params = [{transform_indices = @transform_0, window_bounds = array<i64: 1, 256, 128>}, {pipeline_mode = #tpu.pipeline_mode<synchronous>, transform_indices = @transform_1, window_bounds = array<i64: 128, 32>}, {pipeline_mode = #tpu.pipeline_mode<synchronous>, transform_indices = @transform_2, window_bounds = array<i64: 1, 32>}, {pipeline_mode = #tpu.pipeline_mode<synchronous>, transform_indices = @transform_3, window_bounds = array<i64: 1, 32>}, {pipeline_mode = #tpu.pipeline_mode<synchronous>, transform_indices = @transform_4, window_bounds = array<i64: 3, 96, 32>}, {pipeline_mode = #tpu.pipeline_mode<synchronous>, transform_indices = @transform_5, window_bounds = array<i64: 1, 32>}, {pipeline_mode = #tpu.pipeline_mode<synchronous>, transform_indices = @transform_6, window_bounds = array<i64: 1, 32>}, {pipeline_mode = #tpu.pipeline_mode<synchronous>, transform_indices = @transform_7, window_bounds = array<i64: 32, 128>}, {pipeline_mode = #tpu.pipeline_mode<synchronous>, transform_indices = @transform_8, window_bounds = array<i64: 1, 128>}, {pipeline_mode = #tpu.pipeline_mode<synchronous>, transform_indices = @transform_9, window_bounds = array<i64: 1, 128>}, {transform_indices = @transform_10, window_bounds = array<i64: 1, 128, 128>}]} {
    %c0_i32 = arith.constant 0 : i32
    %0 = arith.cmpi eq, %arg1, %c0_i32 : i32
    %1 = arith.extui %0 : i1 to i32
    %c0_i32_0 = arith.constant 0 : i32
    %2 = arith.cmpi ne, %1, %c0_i32_0 : i32
    scf.if %2 {
      %c0_35 = arith.constant 0 : index
      %c0_36 = arith.constant 0 : index
      %c0_37 = arith.constant 0 : index
      %60 = vector.load %arg2[%c0_35, %c0_36, %c0_37] : memref<1x256x128xf32, #tpu.memory_space<vmem>>, vector<1x256x128xf32>
      %61 = vector.shape_cast %60 : vector<1x256x128xf32> to vector<256x128xf32>
      %c0_38 = arith.constant 0 : index
      %c0_39 = arith.constant 0 : index
      %62 = vector.load %arg3[%c0_38, %c0_39] : memref<128x32xf32, #tpu.memory_space<vmem>>, vector<128x32xf32>
      %cst_40 = arith.constant dense<0.000000e+00> : vector<256x32xf32>
      %63 = tpu.matmul %61, %62, %cst_40 {dimension_numbers = #tpu.dot_dimension_numbers<[1], [0], [0], [1], [0, 0, 1, 1], [], []>} : vector<256x128xf32>, vector<128x32xf32>, vector<256x32xf32> -> vector<256x32xf32>
      %c0_41 = arith.constant 0 : index
      %c0_42 = arith.constant 0 : index
      %64 = vector.load %arg4[%c0_41, %c0_42] : memref<1x32xf32, #tpu.memory_space<vmem>>, vector<1x32xf32>
      %65 = vector.broadcast %64 : vector<1x32xf32> to vector<256x32xf32>
      %66 = arith.mulf %63, %65 : vector<256x32xf32>
      %c0_43 = arith.constant 0 : index
      %c0_44 = arith.constant 0 : index
      %67 = vector.load %arg5[%c0_43, %c0_44] : memref<1x32xf32, #tpu.memory_space<vmem>>, vector<1x32xf32>
      %68 = vector.broadcast %67 : vector<1x32xf32> to vector<256x32xf32>
      %69 = arith.addf %66, %68 : vector<256x32xf32>
      %cst_45 = arith.constant 0.000000e+00 : f32
      %70 = vector.broadcast %cst_45 : f32 to vector<256x32xf32>
      %71 = arith.maximumf %69, %70 : vector<256x32xf32>
      %72 = vector.shape_cast %71 : vector<256x32xf32> to vector<16x16x32xf32>
      %c1_46 = arith.constant 1 : index
      %c8 = arith.constant 8 : index
      %c0_47 = arith.constant 0 : index
      %73 = vector.load %arg13[%c1_46, %c8, %c0_47] : memref<18x32x32xf32, #tpu.memory_space<vmem>>, vector<16x16x32xf32>
      tpu.vector_store %arg13[%c1_46, %c8, %c0_47], %72 {strides = array<i32>} : memref<18x32x32xf32, #tpu.memory_space<vmem>>, vector<16x16x32xf32>,
      %cst_48 = arith.constant 0.000000e+00 : f32
      %74 = vector.broadcast %cst_48 : f32 to vector<32x32xf32>
      %c0_49 = arith.constant 0 : index
      %c0_50 = arith.constant 0 : index
      %c0_51 = arith.constant 0 : index
      %75 = vector.load %arg13[%c0_49, %c0_50, %c0_51] : memref<18x32x32xf32, #tpu.memory_space<vmem>>, vector<1x32x32xf32>
      %76 = vector.shape_cast %75 : vector<1x32x32xf32> to vector<32x32xf32>
      %77 = vector.shape_cast %74 : vector<32x32xf32> to vector<1x32x32xf32>
      tpu.vector_store %arg13[%c0_49, %c0_50, %c0_51], %77 {strides = array<i32>} : memref<18x32x32xf32, #tpu.memory_space<vmem>>, vector<1x32x32xf32>,
      %c17 = arith.constant 17 : index
      %c0_52 = arith.constant 0 : index
      %c0_53 = arith.constant 0 : index
      %78 = vector.load %arg13[%c17, %c0_52, %c0_53] : memref<18x32x32xf32, #tpu.memory_space<vmem>>, vector<1x32x32xf32>
      %79 = vector.shape_cast %78 : vector<1x32x32xf32> to vector<32x32xf32>
      %80 = vector.shape_cast %74 : vector<32x32xf32> to vector<1x32x32xf32>
      tpu.vector_store %arg13[%c17, %c0_52, %c0_53], %80 {strides = array<i32>} : memref<18x32x32xf32, #tpu.memory_space<vmem>>, vector<1x32x32xf32>,
      %cst_54 = arith.constant 0.000000e+00 : f32
      %81 = vector.broadcast %cst_54 : f32 to vector<16x8x32xf32>
      %c1_55 = arith.constant 1 : index
      %c0_56 = arith.constant 0 : index
      %c0_57 = arith.constant 0 : index
      %82 = vector.load %arg13[%c1_55, %c0_56, %c0_57] : memref<18x32x32xf32, #tpu.memory_space<vmem>>, vector<16x8x32xf32>
      tpu.vector_store %arg13[%c1_55, %c0_56, %c0_57], %81 {strides = array<i32>} : memref<18x32x32xf32, #tpu.memory_space<vmem>>, vector<16x8x32xf32>,
      %c1_58 = arith.constant 1 : index
      %c24 = arith.constant 24 : index
      %c0_59 = arith.constant 0 : index
      %83 = vector.load %arg13[%c1_58, %c24, %c0_59] : memref<18x32x32xf32, #tpu.memory_space<vmem>>, vector<16x8x32xf32>
      tpu.vector_store %arg13[%c1_58, %c24, %c0_59], %81 {strides = array<i32>} : memref<18x32x32xf32, #tpu.memory_space<vmem>>, vector<16x8x32xf32>,
    } else {
    }
    %c8_i32 = arith.constant 8 : i32
    %3 = arith.muli %arg1, %c8_i32 : i32
    %c0_i32_1 = arith.constant 0 : i32
    %4 = arith.addi %3, %c0_i32_1 : i32
    %5 = arith.index_cast %4 : i32 to index
    %c0 = arith.constant 0 : index
    %c0_2 = arith.constant 0 : index
    %6 = vector.load %arg13[%5, %c0, %c0_2] : memref<18x32x32xf32, #tpu.memory_space<vmem>>, vector<8x32x32xf32>
    %c1_i32 = arith.constant 1 : i32
    %7 = arith.addi %3, %c1_i32 : i32
    %8 = arith.index_cast %7 : i32 to index
    %c0_3 = arith.constant 0 : index
    %c0_4 = arith.constant 0 : index
    %9 = vector.load %arg13[%8, %c0_3, %c0_4] : memref<18x32x32xf32, #tpu.memory_space<vmem>>, vector<8x32x32xf32>
    %c2_i32 = arith.constant 2 : i32
    %10 = arith.addi %3, %c2_i32 : i32
    %11 = arith.index_cast %10 : i32 to index
    %c0_5 = arith.constant 0 : index
    %c0_6 = arith.constant 0 : index
    %12 = vector.load %arg13[%11, %c0_5, %c0_6] : memref<18x32x32xf32, #tpu.memory_space<vmem>>, vector<8x32x32xf32>
    %13 = tpu.concatenate %6, %9, %12 in 2 : vector<8x32x32xf32>, vector<8x32x32xf32>, vector<8x32x32xf32> -> vector<8x32x96xf32>
    %cst = arith.constant 0.000000e+00 : f32
    %14 = vector.broadcast %cst : f32 to vector<128x32xf32>
    %15 = vector.extract_strided_slice %13 {offsets = [0, 7, 0], sizes = [8, 16, 96], strides = [1, 1, 1]} : vector<8x32x96xf32> to vector<8x16x96xf32>
    %16 = vector.shape_cast %15 : vector<8x16x96xf32> to vector<128x96xf32>
    %c0_7 = arith.constant 0 : index
    %c0_8 = arith.constant 0 : index
    %c0_9 = arith.constant 0 : index
    %17 = vector.load %arg6[%c0_7, %c0_8, %c0_9] : memref<3x96x32xf32, #tpu.memory_space<vmem>>, vector<1x96x32xf32>
    %18 = vector.shape_cast %17 : vector<1x96x32xf32> to vector<96x32xf32>
    %cst_10 = arith.constant dense<0.000000e+00> : vector<128x32xf32>
    %19 = tpu.matmul %16, %18, %cst_10 {dimension_numbers = #tpu.dot_dimension_numbers<[1], [0], [0], [1], [0, 0, 1, 1], [], []>} : vector<128x96xf32>, vector<96x32xf32>, vector<128x32xf32> -> vector<128x32xf32>
    %20 = arith.addf %14, %19 : vector<128x32xf32>
    %21 = vector.extract_strided_slice %13 {offsets = [0, 8, 0], sizes = [8, 16, 96], strides = [1, 1, 1]} : vector<8x32x96xf32> to vector<8x16x96xf32>
    %22 = vector.shape_cast %21 : vector<8x16x96xf32> to vector<128x96xf32>
    %c1 = arith.constant 1 : index
    %c0_11 = arith.constant 0 : index
    %c0_12 = arith.constant 0 : index
    %23 = vector.load %arg6[%c1, %c0_11, %c0_12] : memref<3x96x32xf32, #tpu.memory_space<vmem>>, vector<1x96x32xf32>
    %24 = vector.shape_cast %23 : vector<1x96x32xf32> to vector<96x32xf32>
    %cst_13 = arith.constant dense<0.000000e+00> : vector<128x32xf32>
    %25 = tpu.matmul %22, %24, %cst_13 {dimension_numbers = #tpu.dot_dimension_numbers<[1], [0], [0], [1], [0, 0, 1, 1], [], []>} : vector<128x96xf32>, vector<96x32xf32>, vector<128x32xf32> -> vector<128x32xf32>
    %26 = arith.addf %20, %25 : vector<128x32xf32>
    %27 = vector.extract_strided_slice %13 {offsets = [0, 9, 0], sizes = [8, 16, 96], strides = [1, 1, 1]} : vector<8x32x96xf32> to vector<8x16x96xf32>
    %28 = vector.shape_cast %27 : vector<8x16x96xf32> to vector<128x96xf32>
    %c2 = arith.constant 2 : index
    %c0_14 = arith.constant 0 : index
    %c0_15 = arith.constant 0 : index
    %29 = vector.load %arg6[%c2, %c0_14, %c0_15] : memref<3x96x32xf32, #tpu.memory_space<vmem>>, vector<1x96x32xf32>
    %30 = vector.shape_cast %29 : vector<1x96x32xf32> to vector<96x32xf32>
    %cst_16 = arith.constant dense<0.000000e+00> : vector<128x32xf32>
    %31 = tpu.matmul %28, %30, %cst_16 {dimension_numbers = #tpu.dot_dimension_numbers<[1], [0], [0], [1], [0, 0, 1, 1], [], []>} : vector<128x96xf32>, vector<96x32xf32>, vector<128x32xf32> -> vector<128x32xf32>
    %32 = arith.addf %26, %31 : vector<128x32xf32>
    %c0_17 = arith.constant 0 : index
    %c0_18 = arith.constant 0 : index
    %33 = vector.load %arg7[%c0_17, %c0_18] : memref<1x32xf32, #tpu.memory_space<vmem>>, vector<1x32xf32>
    %34 = vector.broadcast %33 : vector<1x32xf32> to vector<128x32xf32>
    %35 = arith.mulf %32, %34 : vector<128x32xf32>
    %c0_19 = arith.constant 0 : index
    %c0_20 = arith.constant 0 : index
    %36 = vector.load %arg8[%c0_19, %c0_20] : memref<1x32xf32, #tpu.memory_space<vmem>>, vector<1x32xf32>
    %37 = vector.broadcast %36 : vector<1x32xf32> to vector<128x32xf32>
    %38 = arith.addf %35, %37 : vector<128x32xf32>
    %cst_21 = arith.constant 0.000000e+00 : f32
    %39 = vector.broadcast %cst_21 : f32 to vector<128x32xf32>
    %40 = arith.maximumf %38, %39 : vector<128x32xf32>
    %c0_22 = arith.constant 0 : index
    %c0_23 = arith.constant 0 : index
    %41 = vector.load %arg9[%c0_22, %c0_23] : memref<32x128xf32, #tpu.memory_space<vmem>>, vector<32x128xf32>
    %cst_24 = arith.constant dense<0.000000e+00> : vector<128x128xf32>
    %42 = tpu.matmul %40, %41, %cst_24 {dimension_numbers = #tpu.dot_dimension_numbers<[1], [0], [0], [1], [0, 0, 1, 1], [], []>} : vector<128x32xf32>, vector<32x128xf32>, vector<128x128xf32> -> vector<128x128xf32>
    %c16_i32 = arith.constant 16 : i32
    %43 = arith.muli %3, %c16_i32 : i32
    %44 = tpu.assume_multiple %43, 128 : i32
    %c0_25 = arith.constant 0 : index
    %45 = arith.index_cast %44 : i32 to index
    %c0_26 = arith.constant 0 : index
    %46 = vector.load %arg2[%c0_25, %45, %c0_26] : memref<1x256x128xf32, #tpu.memory_space<vmem>>, vector<1x128x128xf32>
    %47 = vector.shape_cast %46 : vector<1x128x128xf32> to vector<128x128xf32>
    %c0_27 = arith.constant 0 : index
    %c0_28 = arith.constant 0 : index
    %48 = vector.load %arg10[%c0_27, %c0_28] : memref<1x128xf32, #tpu.memory_space<vmem>>, vector<1x128xf32>
    %49 = vector.broadcast %48 : vector<1x128xf32> to vector<128x128xf32>
    %50 = arith.mulf %42, %49 : vector<128x128xf32>
    %c0_29 = arith.constant 0 : index
    %c0_30 = arith.constant 0 : index
    %51 = vector.load %arg11[%c0_29, %c0_30] : memref<1x128xf32, #tpu.memory_space<vmem>>, vector<1x128xf32>
    %52 = vector.broadcast %51 : vector<1x128xf32> to vector<128x128xf32>
    %53 = arith.addf %50, %52 : vector<128x128xf32>
    %54 = arith.addf %53, %47 : vector<128x128xf32>
    %cst_31 = arith.constant 0.000000e+00 : f32
    %55 = vector.broadcast %cst_31 : f32 to vector<128x128xf32>
    %56 = arith.maximumf %54, %55 : vector<128x128xf32>
    %c0_32 = arith.constant 0 : index
    %c0_33 = arith.constant 0 : index
    %c0_34 = arith.constant 0 : index
    %57 = vector.load %arg12[%c0_32, %c0_33, %c0_34] : memref<1x128x128xf32, #tpu.memory_space<vmem>>, vector<1x128x128xf32>
    %58 = vector.shape_cast %57 : vector<1x128x128xf32> to vector<128x128xf32>
    %59 = vector.shape_cast %56 : vector<128x128xf32> to vector<1x128x128xf32>
    tpu.vector_store %arg12[%c0_32, %c0_33, %c0_34], %59 {strides = array<i32>} : memref<1x128x128xf32, #tpu.memory_space<vmem>>, vector<1x128x128xf32>,
    return
  }
  func.func @transform_0(%arg0: i32, %arg1: i32) -> (i32, i32, i32) {
    %c0_i32 = arith.constant 0 : i32
    %c0_i32_0 = arith.constant 0 : i32
    %c0_i32_1 = arith.constant 0 : i32
    return %arg0, %c0_i32, %c0_i32_0 : i32, i32, i32
  }
  func.func @transform_1(%arg0: i32, %arg1: i32) -> (i32, i32) {
    %c0_i32 = arith.constant 0 : i32
    %c0_i32_0 = arith.constant 0 : i32
    %c0_i32_1 = arith.constant 0 : i32
    return %c0_i32, %c0_i32_0 : i32, i32
  }
  func.func @transform_2(%arg0: i32, %arg1: i32) -> (i32, i32) {
    %c0_i32 = arith.constant 0 : i32
    %c0_i32_0 = arith.constant 0 : i32
    %c0_i32_1 = arith.constant 0 : i32
    return %c0_i32, %c0_i32_0 : i32, i32
  }
  func.func @transform_3(%arg0: i32, %arg1: i32) -> (i32, i32) {
    %c0_i32 = arith.constant 0 : i32
    %c0_i32_0 = arith.constant 0 : i32
    %c0_i32_1 = arith.constant 0 : i32
    return %c0_i32, %c0_i32_0 : i32, i32
  }
  func.func @transform_4(%arg0: i32, %arg1: i32) -> (i32, i32, i32) {
    %c0_i32 = arith.constant 0 : i32
    %c0_i32_0 = arith.constant 0 : i32
    %c0_i32_1 = arith.constant 0 : i32
    %c0_i32_2 = arith.constant 0 : i32
    return %c0_i32, %c0_i32_0, %c0_i32_1 : i32, i32, i32
  }
  func.func @transform_5(%arg0: i32, %arg1: i32) -> (i32, i32) {
    %c0_i32 = arith.constant 0 : i32
    %c0_i32_0 = arith.constant 0 : i32
    %c0_i32_1 = arith.constant 0 : i32
    return %c0_i32, %c0_i32_0 : i32, i32
  }
  func.func @transform_6(%arg0: i32, %arg1: i32) -> (i32, i32) {
    %c0_i32 = arith.constant 0 : i32
    %c0_i32_0 = arith.constant 0 : i32
    %c0_i32_1 = arith.constant 0 : i32
    return %c0_i32, %c0_i32_0 : i32, i32
  }
  func.func @transform_7(%arg0: i32, %arg1: i32) -> (i32, i32) {
    %c0_i32 = arith.constant 0 : i32
    %c0_i32_0 = arith.constant 0 : i32
    %c0_i32_1 = arith.constant 0 : i32
    return %c0_i32, %c0_i32_0 : i32, i32
  }
  func.func @transform_8(%arg0: i32, %arg1: i32) -> (i32, i32) {
    %c0_i32 = arith.constant 0 : i32
    %c0_i32_0 = arith.constant 0 : i32
    %c0_i32_1 = arith.constant 0 : i32
    return %c0_i32, %c0_i32_0 : i32, i32
  }
  func.func @transform_9(%arg0: i32, %arg1: i32) -> (i32, i32) {
    %c0_i32 = arith.constant 0 : i32
    %c0_i32_0 = arith.constant 0 : i32
    %c0_i32_1 = arith.constant 0 : i32
    return %c0_i32, %c0_i32_0 : i32, i32
  }
  func.func @transform_10(%arg0: i32, %arg1: i32) -> (i32, i32, i32) {
    %c0_i32 = arith.constant 0 : i32
    %c0_i32_0 = arith.constant 0 : i32
    return %arg0, %arg1, %c0_i32 : i32, i32, i32
  }
}

</mosaic_0001>

<llo_original>
// kernel: tpu_custom_call.1
$region0: #{tpu_custom_call.1}
  #allocation0 [shape = 'u32[]', space=smem, size = 0x4, offset = 0x4, fixed_abs, tag = 'smem constant byte address 0x4 - core index']
  #allocation1 [shape = 'u32[144,128]{1,0:T(1,128)}', space=vmem, size = 0x12000, scoped, tag = 'internal scratch']
  #allocation2 [shape = 'f32[18,32,32]{2,1,0:T(8,128)}', space=vmem, size = 0x48000, scoped, tag = 'scratch operand']
  %s0 = inlined_call_operand.vmem [shape: f32[2,256,128], index: 0, kind: input, shape index: {}]
  %s1 = inlined_call_operand.vmem [shape: f32[128,32], index: 1, kind: input, shape index: {}]
  %s2 = inlined_call_operand.vmem [shape: f32[1,32], index: 2, kind: input, shape index: {}]
  %s3 = inlined_call_operand.vmem [shape: f32[1,32], index: 3, kind: input, shape index: {}]
  %s4 = inlined_call_operand.vmem [shape: f32[3,96,32], index: 4, kind: input, shape index: {}]
  %s5 = inlined_call_operand.vmem [shape: f32[1,32], index: 5, kind: input, shape index: {}]
  %s6 = inlined_call_operand.vmem [shape: f32[1,32], index: 6, kind: input, shape index: {}]
  %s7 = inlined_call_operand.vmem [shape: f32[32,128], index: 7, kind: input, shape index: {}]
  %s8 = inlined_call_operand.vmem [shape: f32[1,128], index: 8, kind: input, shape index: {}]
  %s9 = inlined_call_operand.vmem [shape: f32[1,128], index: 9, kind: input, shape index: {}]
  %s10 = inlined_call_operand.hbm [shape: f32[2,256,128], index: 10, kind: output, shape index: {}]
  %s11 = sld [smem:[#allocation0]]
  $region77: #{tpu_custom_call.1} parent=0
    _
  %s13 = ssub.s32 1, %s11
  %s14 = scalar_select 0, %s13, %s11
  $region1: #{tpu_custom_call.1} parent=0
    #allocation3 [shape = 'u8[131072]{0}', space=vmem, size = 0x20000, scoped, tag = 'output window, operand 0']
    #allocation4 [shape = 's32[2]{0}', space=sflag, size = 0x8, scoped, tag = 'scoped memory for tpu_custom_call.1']
    %15 = vsyncpa [#allocation4], 0
    %s16 = scalar_lea.sflag [#allocation4], 1
    %17 = vsyncpa %s16, 0
    loop: start=0, step=1, limit=6
    $region2: #{tpu_custom_call.1} parent=1 // loop_pre_header
      _
    $region3: #{tpu_custom_call.1} parent=1 // loop_header
      %s19 = sphi 0, %s23
      %p20 = scmp.ge.s32.totalorder %s19, 6
      %s26 = sphi 0, %s38
      %s27 = sphi 0, %s34
      %s28 = sphi 0, %s26
      %s29 = sphi 0, %s27
      %s30 = sphi 0, %s28
      %s31 = sphi 0, %s29
      %s41 = sphi 0, %s43
      %s44 = sphi 0, %s41
      %s45 = sphi 0, %s44
      %s61 = sphi 0, %s45
      %s65 = sphi 0, %s65
      %s67 = sphi 0, %s65
      %s68 = sphi 0, %s67
      %s82 = sphi 0, %s68
      %s86 = sphi 0, %s86
      %s88 = sphi 0, %s86
      %s89 = sphi 0, %s88
      %s103 = sphi 0, %s89
      %s107 = sphi 0, %s107
      %s109 = sphi 0, %s107
      %s110 = sphi 0, %s109
      %s124 = sphi 0, %s110
      %s128 = sphi 0, %s128
      %s130 = sphi 0, %s128
      %s131 = sphi 0, %s130
      %s145 = sphi 0, %s131
      %s149 = sphi 0, %s149
      %s151 = sphi 0, %s149
      %s152 = sphi 0, %s151
      %s166 = sphi 0, %s152
      %s170 = sphi 0, %s170
      %s172 = sphi 0, %s170
      %s173 = sphi 0, %s172
      %s187 = sphi 0, %s173
      %s191 = sphi 0, %s191
      %s193 = sphi 0, %s191
      %s194 = sphi 0, %s193
      %s208 = sphi 0, %s194
      %s212 = sphi 0, %s212
      %s214 = sphi 0, %s212
      %s215 = sphi 0, %s214
      %s229 = sphi 0, %s215
      %s233 = sphi 0, %s233
      %s235 = sphi 0, %s233
      %s236 = sphi 0, %s235
      %s250 = sphi 0, %s236
      %s258 = sphi 0, %s260
      %s261 = sphi 0, %s258
      %s262 = sphi 0, %s261
      %s278 = sphi 0, %s262
    $region4: #{tpu_custom_call.1} parent=1 // loop_header_branch
      %22 = sbr.rel (%p20) target = $region8
    $region5: #{tpu_custom_call.1} parent=1 // loop_body
      %s24 = ssub.s32 %s19, 1
      %s25 = ssub.s32 %s19, 2
      %s32 = sadd.s32 1, %s27
      %p33 = scmp.ge.s32.totalorder %s32, 2
      %s34 = scalar_select %p33, 0, %s32
      %s35 = sadd.s32 1, %s26
      %s36 = scalar_select %p33, %s35, %s26
      %p37 = scmp.ge.s32.totalorder %s36, 2
      %s38 = scalar_select %p37, 0, %s36
      %s39 = ssub.s32 %s26, %s38
      %p40 = scmp.eq.s32.totalorder %s39, 0
      %s42 = sadd.s32 %s41, 1
      %s43 = scalar_select %p40, %s41, %s42
      %p46 = pneg %p40
      %p47 = scmp.eq.s32.totalorder %s19, 3
      %p48 = por %p46, %p47
      %p49 = scmp.ne.s32.totalorder %s41, %s44
      %p50 = scmp.eq.s32.totalorder %s19, 0
      %p51 = por %p49, %p50
      %p52 = scmp.ne.s32.totalorder %s41, %s44
      %p53 = scmp.eq.s32.totalorder %s24, 3
      %p54 = por %p52, %p53
      %p55 = scmp.ne.s32.totalorder %s44, %s45
      %p56 = scmp.eq.s32.totalorder %s24, 0
      %p57 = por %p55, %p56
      %p58 = scmp.ne.s32.totalorder %s44, %s45
      %p59 = scmp.eq.s32.totalorder %s25, 3
      %p60 = por %p58, %p59
      %p62 = scmp.ne.s32.totalorder %s45, %s61
      %p63 = scmp.eq.s32.totalorder %s25, 0
      %p64 = por %p62, %p63
      %s66 = sadd.s32 %s65, 1
      %p69 = scmp.eq.s32.totalorder %s19, 3
      %p70 = scmp.ne.s32.totalorder %s65, %s67
      %p71 = scmp.eq.s32.totalorder %s19, 0
      %p72 = por %p70, %p71
      %p73 = scmp.ne.s32.totalorder %s65, %s67
      %p74 = scmp.eq.s32.totalorder %s24, 3
      %p75 = por %p73, %p74
      %p76 = scmp.ne.s32.totalorder %s67, %s68
      %p77 = scmp.eq.s32.totalorder %s24, 0
      %p78 = por %p76, %p77
      %p79 = scmp.ne.s32.totalorder %s67, %s68
      %p80 = scmp.eq.s32.totalorder %s25, 3
      %p81 = por %p79, %p80
      %p83 = scmp.ne.s32.totalorder %s68, %s82
      %p84 = scmp.eq.s32.totalorder %s25, 0
      %p85 = por %p83, %p84
      %s87 = sadd.s32 %s86, 1
      %p90 = scmp.eq.s32.totalorder %s19, 3
      %p91 = scmp.ne.s32.totalorder %s86, %s88
      %p92 = scmp.eq.s32.totalorder %s19, 0
      %p93 = por %p91, %p92
      %p94 = scmp.ne.s32.totalorder %s86, %s88
      %p95 = scmp.eq.s32.totalorder %s24, 3
      %p96 = por %p94, %p95
      %p97 = scmp.ne.s32.totalorder %s88, %s89
      %p98 = scmp.eq.s32.totalorder %s24, 0
      %p99 = por %p97, %p98
      %p100 = scmp.ne.s32.totalorder %s88, %s89
      %p101 = scmp.eq.s32.totalorder %s25, 3
      %p102 = por %p100, %p101
      %p104 = scmp.ne.s32.totalorder %s89, %s103
      %p105 = scmp.eq.s32.totalorder %s25, 0
      %p106 = por %p104, %p105
      %s108 = sadd.s32 %s107, 1
      %p111 = scmp.eq.s32.totalorder %s19, 3
      %p112 = scmp.ne.s32.totalorder %s107, %s109
      %p113 = scmp.eq.s32.totalorder %s19, 0
      %p114 = por %p112, %p113
      %p115 = scmp.ne.s32.totalorder %s107, %s109
      %p116 = scmp.eq.s32.totalorder %s24, 3
      %p117 = por %p115, %p116
      %p118 = scmp.ne.s32.totalorder %s109, %s110
      %p119 = scmp.eq.s32.totalorder %s24, 0
      %p120 = por %p118, %p119
      %p121 = scmp.ne.s32.totalorder %s109, %s110
      %p122 = scmp.eq.s32.totalorder %s25, 3
      %p123 = por %p121, %p122
      %p125 = scmp.ne.s32.totalorder %s110, %s124
      %p126 = scmp.eq.s32.totalorder %s25, 0
      %p127 = por %p125, %p126
      %s129 = sadd.s32 %s128, 1
      %p132 = scmp.eq.s32.totalorder %s19, 3
      %p133 = scmp.ne.s32.totalorder %s128, %s130
      %p134 = scmp.eq.s32.totalorder %s19, 0
      %p135 = por %p133, %p134
      %p136 = scmp.ne.s32.totalorder %s128, %s130
      %p137 = scmp.eq.s32.totalorder %s24, 3
      %p138 = por %p136, %p137
      %p139 = scmp.ne.s32.totalorder %s130, %s131
      %p140 = scmp.eq.s32.totalorder %s24, 0
      %p141 = por %p139, %p140
      %p142 = scmp.ne.s32.totalorder %s130, %s131
      %p143 = scmp.eq.s32.totalorder %s25, 3
      %p144 = por %p142, %p143
      %p146 = scmp.ne.s32.totalorder %s131, %s145
      %p147 = scmp.eq.s32.totalorder %s25, 0
      %p148 = por %p146, %p147
      %s150 = sadd.s32 %s149, 1
      %p153 = scmp.eq.s32.totalorder %s19, 3
      %p154 = scmp.ne.s32.totalorder %s149, %s151
      %p155 = scmp.eq.s32.totalorder %s19, 0
      %p156 = por %p154, %p155
      %p157 = scmp.ne.s32.totalorder %s149, %s151
      %p158 = scmp.eq.s32.totalorder %s24, 3
      %p159 = por %p157, %p158
      %p160 = scmp.ne.s32.totalorder %s151, %s152
      %p161 = scmp.eq.s32.totalorder %s24, 0
      %p162 = por %p160, %p161
      %p163 = scmp.ne.s32.totalorder %s151, %s152
      %p164 = scmp.eq.s32.totalorder %s25, 3
      %p165 = por %p163, %p164
      %p167 = scmp.ne.s32.totalorder %s152, %s166
      %p168 = scmp.eq.s32.totalorder %s25, 0
      %p169 = por %p167, %p168
      %s171 = sadd.s32 %s170, 1
      %p174 = scmp.eq.s32.totalorder %s19, 3
      %p175 = scmp.ne.s32.totalorder %s170, %s172
      %p176 = scmp.eq.s32.totalorder %s19, 0
      %p177 = por %p175, %p176
      %p178 = scmp.ne.s32.totalorder %s170, %s172
      %p179 = scmp.eq.s32.totalorder %s24, 3
      %p180 = por %p178, %p179
      %p181 = scmp.ne.s32.totalorder %s172, %s173
      %p182 = scmp.eq.s32.totalorder %s24, 0
      %p183 = por %p181, %p182
      %p184 = scmp.ne.s32.totalorder %s172, %s173
      %p185 = scmp.eq.s32.totalorder %s25, 3
      %p186 = por %p184, %p185
      %p188 = scmp.ne.s32.totalorder %s173, %s187
      %p189 = scmp.eq.s32.totalorder %s25, 0
      %p190 = por %p188, %p189
      %s192 = sadd.s32 %s191, 1
      %p195 = scmp.eq.s32.totalorder %s19, 3
      %p196 = scmp.ne.s32.totalorder %s191, %s193
      %p197 = scmp.eq.s32.totalorder %s19, 0
      %p198 = por %p196, %p197
      %p199 = scmp.ne.s32.totalorder %s191, %s193
      %p200 = scmp.eq.s32.totalorder %s24, 3
      %p201 = por %p199, %p200
      %p202 = scmp.ne.s32.totalorder %s193, %s194
      %p203 = scmp.eq.s32.totalorder %s24, 0
      %p204 = por %p202, %p203
      %p205 = scmp.ne.s32.totalorder %s193, %s194
      %p206 = scmp.eq.s32.totalorder %s25, 3
      %p207 = por %p205, %p206
      %p209 = scmp.ne.s32.totalorder %s194, %s208
      %p210 = scmp.eq.s32.totalorder %s25, 0
      %p211 = por %p209, %p210
      %s213 = sadd.s32 %s212, 1
      %p216 = scmp.eq.s32.totalorder %s19, 3
      %p217 = scmp.ne.s32.totalorder %s212, %s214
      %p218 = scmp.eq.s32.totalorder %s19, 0
      %p219 = por %p217, %p218
      %p220 = scmp.ne.s32.totalorder %s212, %s214
      %p221 = scmp.eq.s32.totalorder %s24, 3
      %p222 = por %p220, %p221
      %p223 = scmp.ne.s32.totalorder %s214, %s215
      %p224 = scmp.eq.s32.totalorder %s24, 0
      %p225 = por %p223, %p224
      %p226 = scmp.ne.s32.totalorder %s214, %s215
      %p227 = scmp.eq.s32.totalorder %s25, 3
      %p228 = por %p226, %p227
      %p230 = scmp.ne.s32.totalorder %s215, %s229
      %p231 = scmp.eq.s32.totalorder %s25, 0
      %p232 = por %p230, %p231
      %s234 = sadd.s32 %s233, 1
      %p237 = scmp.eq.s32.totalorder %s19, 3
      %p238 = scmp.ne.s32.totalorder %s233, %s235
      %p239 = scmp.eq.s32.totalorder %s19, 0
      %p240 = por %p238, %p239
      %p241 = scmp.ne.s32.totalorder %s233, %s235
      %p242 = scmp.eq.s32.totalorder %s24, 3
      %p243 = por %p241, %p242
      %p244 = scmp.ne.s32.totalorder %s235, %s236
      %p245 = scmp.eq.s32.totalorder %s24, 0
      %p246 = por %p244, %p245
      %p247 = scmp.ne.s32.totalorder %s235, %s236
      %p248 = scmp.eq.s32.totalorder %s25, 3
      %p249 = por %p247, %p248
      %p251 = scmp.ne.s32.totalorder %s236, %s250
      %p252 = scmp.eq.s32.totalorder %s25, 0
      %p253 = por %p251, %p252
      %s254 = ssub.s32 %s26, %s38
      %s255 = ssub.s32 %s27, %s34
      %s256 = sor.u32 %s254, %s255
      %p257 = scmp.eq.s32.totalorder %s256, 0
      %s259 = sadd.s32 %s258, 1
      %s260 = scalar_select %p257, %s258, %s259
      %p263 = pneg %p257
      %p264 = scmp.eq.s32.totalorder %s19, 3
      %p265 = por %p263, %p264
      %p266 = scmp.ne.s32.totalorder %s258, %s261
      %p267 = scmp.eq.s32.totalorder %s19, 0
      %p268 = por %p266, %p267
      %p269 = scmp.ne.s32.totalorder %s258, %s261
      %p270 = scmp.eq.s32.totalorder %s24, 3
      %p271 = por %p269, %p270
      %p272 = scmp.ne.s32.totalorder %s261, %s262
      %p273 = scmp.eq.s32.totalorder %s24, 0
      %p274 = por %p272, %p273
      %p275 = scmp.ne.s32.totalorder %s261, %s262
      %p276 = scmp.eq.s32.totalorder %s25, 3
      %p277 = por %p275, %p276
      %p279 = scmp.ne.s32.totalorder %s262, %s278
      %p280 = scmp.eq.s32.totalorder %s25, 0
      %p281 = por %p279, %p280
      %p282 = scmp.le.s32.totalorder 1, %s19
      %p283 = scmp.lt.s32.totalorder %s19, 5
      %p284 = pnand %p282, %p283
      %p285 = pneg %p284
      // Predicated region
      $region9: #{tpu_custom_call.1} parent=5 // pred_check
        _
      $region10: #{tpu_custom_call.1} parent=5 // pred_check_branch
        %287 = sbr.rel (%p284) target = $region12
      $region11: #{tpu_custom_call.1} parent=5 // pred_region
        %s288 = ssub.s32 %s19, 1
        // Predicated region
        $region13: #{tpu_custom_call.1} parent=11 // pred_check
          %p289 = pneg %p78
        $region14: #{tpu_custom_call.1} parent=11 // pred_check_branch
          %291 = sbr.rel (%p289) target = $region16
        $region15: #{tpu_custom_call.1} parent=11 // pred_region
          _
        $region16: #{tpu_custom_call.1} parent=11 // pred_fallthru
          _
        // Predicated region
        $region17: #{tpu_custom_call.1} parent=11 // pred_check
          %p292 = pneg %p99
        $region18: #{tpu_custom_call.1} parent=11 // pred_check_branch
          %294 = sbr.rel (%p292) target = $region20
        $region19: #{tpu_custom_call.1} parent=11 // pred_region
          _
        $region20: #{tpu_custom_call.1} parent=11 // pred_fallthru
          _
        // Predicated region
        $region21: #{tpu_custom_call.1} parent=11 // pred_check
          %p295 = pneg %p120
        $region22: #{tpu_custom_call.1} parent=11 // pred_check_branch
          %297 = sbr.rel (%p295) target = $region24
        $region23: #{tpu_custom_call.1} parent=11 // pred_region
          _
        $region24: #{tpu_custom_call.1} parent=11 // pred_fallthru
          _
        // Predicated region
        $region25: #{tpu_custom_call.1} parent=11 // pred_check
          %p298 = pneg %p141
        $region26: #{tpu_custom_call.1} parent=11 // pred_check_branch
          %300 = sbr.rel (%p298) target = $region28
        $region27: #{tpu_custom_call.1} parent=11 // pred_region
          _
        $region28: #{tpu_custom_call.1} parent=11 // pred_fallthru
          _
        // Predicated region
        $region29: #{tpu_custom_call.1} parent=11 // pred_check
          %p301 = pneg %p162
        $region30: #{tpu_custom_call.1} parent=11 // pred_check_branch
          %303 = sbr.rel (%p301) target = $region32
        $region31: #{tpu_custom_call.1} parent=11 // pred_region
          _
        $region32: #{tpu_custom_call.1} parent=11 // pred_fallthru
          _
        // Predicated region
        $region33: #{tpu_custom_call.1} parent=11 // pred_check
          %p304 = pneg %p183
        $region34: #{tpu_custom_call.1} parent=11 // pred_check_branch
          %306 = sbr.rel (%p304) target = $region36
        $region35: #{tpu_custom_call.1} parent=11 // pred_region
          _
        $region36: #{tpu_custom_call.1} parent=11 // pred_fallthru
          _
        // Predicated region
        $region37: #{tpu_custom_call.1} parent=11 // pred_check
          %p307 = pneg %p204
        $region38: #{tpu_custom_call.1} parent=11 // pred_check_branch
          %309 = sbr.rel (%p307) target = $region40
        $region39: #{tpu_custom_call.1} parent=11 // pred_region
          _
        $region40: #{tpu_custom_call.1} parent=11 // pred_fallthru
          _
        // Predicated region
        $region41: #{tpu_custom_call.1} parent=11 // pred_check
          %p310 = pneg %p225
        $region42: #{tpu_custom_call.1} parent=11 // pred_check_branch
          %312 = sbr.rel (%p310) target = $region44
        $region43: #{tpu_custom_call.1} parent=11 // pred_region
          _
        $region44: #{tpu_custom_call.1} parent=11 // pred_fallthru
          _
        // Predicated region
        $region45: #{tpu_custom_call.1} parent=11 // pred_check
          %p313 = pneg %p246
        $region46: #{tpu_custom_call.1} parent=11 // pred_check_branch
          %315 = sbr.rel (%p313) target = $region48
        $region47: #{tpu_custom_call.1} parent=11 // pred_region
          _
        $region48: #{tpu_custom_call.1} parent=11 // pred_fallthru
          _
      $region12: #{tpu_custom_call.1} parent=5 // pred_fallthru
        _
      %p316 = scmp.lt.s32.totalorder %s19, 4
      // Predicated region
      $region49: #{tpu_custom_call.1} parent=5 // pred_check
        %p317 = pneg %p316
      $region50: #{tpu_custom_call.1} parent=5 // pred_check_branch
        %319 = sbr.rel (%p317) target = $region52
      $region51: #{tpu_custom_call.1} parent=5 // pred_region
        // Predicated region
        $region53: #{tpu_custom_call.1} parent=51 // pred_check
          %p320 = pneg %p51
        $region54: #{tpu_custom_call.1} parent=51 // pred_check_branch
          %322 = sbr.rel (%p320) target = $region56
        $region55: #{tpu_custom_call.1} parent=51 // pred_region
          %p323 = scmp.lt.s32.totalorder %s26, 1
          %s324 = scalar_select %p323, %s26, 1
          %s325 = smul.addr %s324, 32
          %s326 = smul.addr %s325, 8
          %s327 = scalar_lea.vmem %s0, %s326
        $region56: #{tpu_custom_call.1} parent=51 // pred_fallthru
          _
      $region52: #{tpu_custom_call.1} parent=5 // pred_fallthru
        _
      %p328 = scmp.le.s32.totalorder 1, %s19
      %p329 = scmp.lt.s32.totalorder %s19, 5
      %p330 = pnand %p328, %p329
      %p331 = pneg %p330
      // Predicated region
      $region57: #{tpu_custom_call.1} parent=5 // pred_check
        _
      $region58: #{tpu_custom_call.1} parent=5 // pred_check_branch
        %333 = sbr.rel (%p330) target = $region60
      $region59: #{tpu_custom_call.1} parent=5 // pred_region
        %s334 = ssub.s32 %s19, 1
        %p335 = scmp.lt.s32.totalorder %s28, 1
        %s336 = scalar_select %p335, %s28, 1
        %s337 = smul.addr %s336, 32
        %s338 = smul.addr %s337, 8
        %s339 = scalar_lea.vmem %s0, %s338
        %p340 = pneg %p57
        %p341 = pneg %p54
        %p342 = pneg %p78
        %p343 = pneg %p75
        %p344 = pneg %p99
        %p345 = pneg %p96
        %p346 = pneg %p120
        %p347 = pneg %p117
        %p348 = pneg %p141
        %p349 = pneg %p138
        %p350 = pneg %p162
        %p351 = pneg %p159
        %p352 = pneg %p183
        %p353 = pneg %p180
        %p354 = pneg %p204
        %p355 = pneg %p201
        %p356 = pneg %p225
        %p357 = pneg %p222
        %p358 = pneg %p246
        %p359 = pneg %p243
        %p360 = pneg %p274
        %p361 = pneg %p271
        %s362 = sand.u32 %s261, 1
        %s363 = scalar_lea.sflag [#allocation4], %s362
        %s364 = sand.u32 %s261, 1
        %s365 = smul.addr %s364, 128
        %s366 = scalar_lea.vmem [#allocation3], %s365
        %p367 = scmp.lt.s32.totalorder %s28, 1
        %s368 = scalar_select %p367, %s28, 1
        %s369 = smul.addr %s368, 32
        %s370 = smul.addr %s369, 8
        %s371 = scalar_lea.vmem %s0, %s370
        %s372 = smul.u32 16, %s29
        %p373 = scmp.eq.s32.totalorder %s29, 0
        // Predicated region
        $region61: #{tpu_custom_call.1} parent=59 // pred_check
          %p374 = pneg %p373
        $region62: #{tpu_custom_call.1} parent=59 // pred_check_branch
          %376 = sbr.rel (%p374) target = $region64
        $region63: #{tpu_custom_call.1} parent=59 // pred_region
          %v377 = vld [vmem:[%s371] sm:$0xff]
          %v378 = vld [vmem:[%s371 + $0x8] sm:$0xff]
          %v379 = vld [vmem:[%s371 + $0x10] sm:$0xff]
          %v380 = vld [vmem:[%s371 + $0x18] sm:$0xff]
          %v381 = vld [vmem:[%s371 + $0x20] sm:$0xff]
          %v382 = vld [vmem:[%s371 + $0x28] sm:$0xff]
          %v383 = vld [vmem:[%s371 + $0x30] sm:$0xff]
          %v384 = vld [vmem:[%s371 + $0x38] sm:$0xff]
          %v385 = vld [vmem:[%s371 + $0x40] sm:$0xff]
          %v386 = vld [vmem:[%s371 + $0x48] sm:$0xff]
          %v387 = vld [vmem:[%s371 + $0x50] sm:$0xff]
          %v388 = vld [vmem:[%s371 + $0x58] sm:$0xff]
          %v389 = vld [vmem:[%s371 + $0x60] sm:$0xff]
          %v390 = vld [vmem:[%s371 + $0x68] sm:$0xff]
          %v391 = vld [vmem:[%s371 + $0x70] sm:$0xff]
          %v392 = vld [vmem:[%s371 + $0x78] sm:$0xff]
          %v393 = vld [vmem:[%s371 + $0x80] sm:$0xff]
          %v394 = vld [vmem:[%s371 + $0x88] sm:$0xff]
          %v395 = vld [vmem:[%s371 + $0x90] sm:$0xff]
          %v396 = vld [vmem:[%s371 + $0x98] sm:$0xff]
          %v397 = vld [vmem:[%s371 + $0xa0] sm:$0xff]
          %v398 = vld [vmem:[%s371 + $0xa8] sm:$0xff]
          %v399 = vld [vmem:[%s371 + $0xb0] sm:$0xff]
          %v400 = vld [vmem:[%s371 + $0xb8] sm:$0xff]
          %v401 = vld [vmem:[%s371 + $0xc0] sm:$0xff]
          %v402 = vld [vmem:[%s371 + $0xc8] sm:$0xff]
          %v403 = vld [vmem:[%s371 + $0xd0] sm:$0xff]
          %v404 = vld [vmem:[%s371 + $0xd8] sm:$0xff]
          %v405 = vld [vmem:[%s371 + $0xe0] sm:$0xff]
          %v406 = vld [vmem:[%s371 + $0xe8] sm:$0xff]
          %v407 = vld [vmem:[%s371 + $0xf0] sm:$0xff]
          %v408 = vld [vmem:[%s371 + $0xf8] sm:$0xff]
          %v409 = vld [vmem:[%s1] sm:$0xff]
          %v410 = vld [vmem:[%s1 + $0x8] sm:$0xff]
          %v411 = vld [vmem:[%s1 + $0x10] sm:$0xff]
          %v412 = vld [vmem:[%s1 + $0x18] sm:$0xff]
          %v413 = vld [vmem:[%s1 + $0x20] sm:$0xff]
          %v414 = vld [vmem:[%s1 + $0x28] sm:$0xff]
          %v415 = vld [vmem:[%s1 + $0x30] sm:$0xff]
          %v416 = vld [vmem:[%s1 + $0x38] sm:$0xff]
          %v417 = vld [vmem:[%s1 + $0x40] sm:$0xff]
          %v418 = vld [vmem:[%s1 + $0x48] sm:$0xff]
          %v419 = vld [vmem:[%s1 + $0x50] sm:$0xff]
          %v420 = vld [vmem:[%s1 + $0x58] sm:$0xff]
          %v421 = vld [vmem:[%s1 + $0x60] sm:$0xff]
          %v422 = vld [vmem:[%s1 + $0x68] sm:$0xff]
          %v423 = vld [vmem:[%s1 + $0x70] sm:$0xff]
          %v424 = vld [vmem:[%s1 + $0x78] sm:$0xff]
          %425 = vmatprep.subr.mxu0 0.0
          %426 = vmatpush1.msra.mxu0 %v409
          %427 = vmatprep.subr.mxu0 0.0
          %428 = vmatpush1.msra.mxu0 %v410
          %429 = vmatprep.subr.mxu0 0.0
          %430 = vmatpush1.msra.mxu0 %v411
          %431 = vmatprep.subr.mxu0 0.0
          %432 = vmatpush1.msra.mxu0 %v412
          %433 = vmatprep.subr.mxu0 0.0
          %434 = vmatpush1.msra.mxu0 %v413
          %435 = vmatprep.subr.mxu0 0.0
          %436 = vmatpush1.msra.mxu0 %v414
          %437 = vmatprep.subr.mxu0 0.0
          %438 = vmatpush1.msra.mxu0 %v415
          %439 = vmatprep.subr.mxu0 0.0
          %440 = vmatpush1.msra.mxu0 %v416
          %441 = vmatprep.subr.mxu0 0.0
          %442 = vmatpush1.msra.mxu0 %v417
          %443 = vmatprep.subr.mxu0 0.0
          %444 = vmatpush1.msra.mxu0 %v418
          %445 = vmatprep.subr.mxu0 0.0
          %446 = vmatpush1.msra.mxu0 %v419
          %447 = vmatprep.subr.mxu0 0.0
          %448 = vmatpush1.msra.mxu0 %v420
          %449 = vmatprep.subr.mxu0 0.0
          %450 = vmatpush1.msra.mxu0 %v421
          %451 = vmatprep.subr.mxu0 0.0
          %452 = vmatpush1.msra.mxu0 %v422
          %453 = vmatprep.subr.mxu0 0.0
          %454 = vmatpush1.msra.mxu0 %v423
          %455 = vmatprep.subr.mxu0 0.0
          %456 = vmatpush1.msra.mxu0 %v424
          %457 = vmatprep.subr.mxu0 0.0
          %458 = vmatpush1.msra.mxu0 0.0
          %459 = vmatprep.subr.mxu0 0.0
          %460 = vmatpush1.msra.mxu0 0.0
          %461 = vmatprep.subr.mxu0 0.0
          %462 = vmatpush1.msra.mxu0 0.0
          %463 = vmatprep.subr.mxu0 0.0
          %464 = vmatpush1.msra.mxu0 0.0
          %465 = vmatprep.subr.mxu0 0.0
          %466 = vmatpush1.msra.mxu0 0.0
          %467 = vmatprep.subr.mxu0 0.0
          %468 = vmatpush1.msra.mxu0 0.0
          %469 = vmatprep.subr.mxu0 0.0
          %470 = vmatpush1.msra.mxu0 0.0
          %471 = vmatprep.subr.mxu0 0.0
          %472 = vmatpush1.msra.mxu0 0.0
          %473 = vmatprep.subr.mxu0 0.0
          %474 = vmatpush1.msra.mxu0 0.0
          %475 = vmatprep.subr.mxu0 0.0
          %476 = vmatpush1.msra.mxu0 0.0
          %477 = vmatprep.subr.mxu0 0.0
          %478 = vmatpush1.msra.mxu0 0.0
          %479 = vmatprep.subr.mxu0 0.0
          %480 = vmatpush1.msra.mxu0 0.0
          %481 = vmatprep.subr.mxu0 0.0
          %482 = vmatpush1.msra.mxu0 0.0
          %483 = vmatprep.subr.mxu0 0.0
          %484 = vmatpush1.msra.mxu0 0.0
          %485 = vmatprep.subr.mxu0 0.0
          %486 = vmatpush1.msra.mxu0 0.0
          %487 = vmatprep.subr.mxu0 0.0
          %488 = vmatpush1.msra.mxu0 0.0
          %489 = vmatprep.mubr.f32.mxu0 0.0
          %490 = vmatmul.mubr.f32.gmra.mrb[0].mxu0 %v377
          %v491 = vpop.f32.mrb[0].mxu0
          %v492 = vadd.f32 0.0, %v491
          %v493 = vpop.f32.mrb[0].mxu0
          %494 = vmatprep.mubr.f32.mxu0 0.0
          %495 = vmatmul.mubr.f32.gmra.mrb[0].mxu0 %v378
          %v496 = vpop.f32.mrb[0].mxu0
          %v497 = vadd.f32 0.0, %v496
          %v498 = vpop.f32.mrb[0].mxu0
          %499 = vmatprep.mubr.f32.mxu0 0.0
          %500 = vmatmul.mubr.f32.gmra.mrb[0].mxu0 %v379
          %v501 = vpop.f32.mrb[0].mxu0
          %v502 = vadd.f32 0.0, %v501
          %v503 = vpop.f32.mrb[0].mxu0
          %504 = vmatprep.mubr.f32.mxu0 0.0
          %505 = vmatmul.mubr.f32.gmra.mrb[0].mxu0 %v380
          %v506 = vpop.f32.mrb[0].mxu0
          %v507 = vadd.f32 0.0, %v506
          %v508 = vpop.f32.mrb[0].mxu0
          %509 = vmatprep.mubr.f32.mxu0 0.0
          %510 = vmatmul.mubr.f32.gmra.mrb[0].mxu0 %v381
          %v511 = vpop.f32.mrb[0].mxu0
          %v512 = vadd.f32 0.0, %v511
          %v513 = vpop.f32.mrb[0].mxu0
          %514 = vmatprep.mubr.f32.mxu0 0.0
          %515 = vmatmul.mubr.f32.gmra.mrb[0].mxu0 %v382
          %v516 = vpop.f32.mrb[0].mxu0
          %v517 = vadd.f32 0.0, %v516
          %v518 = vpop.f32.mrb[0].mxu0
          %519 = vmatprep.mubr.f32.mxu0 0.0
          %520 = vmatmul.mubr.f32.gmra.mrb[0].mxu0 %v383
          %v521 = vpop.f32.mrb[0].mxu0
          %v522 = vadd.f32 0.0, %v521
          %v523 = vpop.f32.mrb[0].mxu0
          %524 = vmatprep.mubr.f32.mxu0 0.0
          %525 = vmatmul.mubr.f32.gmra.mrb[0].mxu0 %v384
          %v526 = vpop.f32.mrb[0].mxu0
          %v527 = vadd.f32 0.0, %v526
          %v528 = vpop.f32.mrb[0].mxu0
          %529 = vmatprep.mubr.f32.mxu0 0.0
          %530 = vmatmul.mubr.f32.gmra.mrb[0].mxu0 %v385
          %v531 = vpop.f32.mrb[0].mxu0
          %v532 = vadd.f32 0.0, %v531
          %v533 = vpop.f32.mrb[0].mxu0
          %534 = vmatprep.mubr.f32.mxu0 0.0
          %535 = vmatmul.mubr.f32.gmra.mrb[0].mxu0 %v386
          %v536 = vpop.f32.mrb[0].mxu0
          %v537 = vadd.f32 0.0, %v536
          %v538 = vpop.f32.mrb[0].mxu0
          %539 = vmatprep.mubr.f32.mxu0 0.0
          %540 = vmatmul.mubr.f32.gmra.mrb[0].mxu0 %v387
          %v541 = vpop.f32.mrb[0].mxu0
          %v542 = vadd.f32 0.0, %v541
          %v543 = vpop.f32.mrb[0].mxu0
          %544 = vmatprep.mubr.f32.mxu0 0.0
          %545 = vmatmul.mubr.f32.gmra.mrb[0].mxu0 %v388
          %v546 = vpop.f32.mrb[0].mxu0
          %v547 = vadd.f32 0.0, %v546
          %v548 = vpop.f32.mrb[0].mxu0
          %549 = vmatprep.mubr.f32.mxu0 0.0
          %550 = vmatmul.mubr.f32.gmra.mrb[0].mxu0 %v389
          %v551 = vpop.f32.mrb[0].mxu0
          %v552 = vadd.f32 0.0, %v551
          %v553 = vpop.f32.mrb[0].mxu0
          %554 = vmatprep.mubr.f32.mxu0 0.0
          %555 = vmatmul.mubr.f32.gmra.mrb[0].mxu0 %v390
          %v556 = vpop.f32.mrb[0].mxu0
          %v557 = vadd.f32 0.0, %v556
          %v558 = vpop.f32.mrb[0].mxu0
          %559 = vmatprep.mubr.f32.mxu0 0.0
          %560 = vmatmul.mubr.f32.gmra.mrb[0].mxu0 %v391
          %v561 = vpop.f32.mrb[0].mxu0
          %v562 = vadd.f32 0.0, %v561
          %v563 = vpop.f32.mrb[0].mxu0
          %564 = vmatprep.mubr.f32.mxu0 0.0
          %565 = vmatmul.mubr.f32.gmra.mrb[0].mxu0 %v392
          %v566 = vpop.f32.mrb[0].mxu0
          %v567 = vadd.f32 0.0, %v566
          %v568 = vpop.f32.mrb[0].mxu0
          %569 = vmatprep.mubr.f32.mxu0 0.0
          %570 = vmatmul.mubr.f32.gmra.mrb[0].mxu0 %v393
          %v571 = vpop.f32.mrb[0].mxu0
          %v572 = vadd.f32 0.0, %v571
          %v573 = vpop.f32.mrb[0].mxu0
          %574 = vmatprep.mubr.f32.mxu0 0.0
          %575 = vmatmul.mubr.f32.gmra.mrb[0].mxu0 %v394
          %v576 = vpop.f32.mrb[0].mxu0
          %v577 = vadd.f32 0.0, %v576
          %v578 = vpop.f32.mrb[0].mxu0
          %579 = vmatprep.mubr.f32.mxu0 0.0
          %580 = vmatmul.mubr.f32.gmra.mrb[0].mxu0 %v395
          %v581 = vpop.f32.mrb[0].mxu0
          %v582 = vadd.f32 0.0, %v581
          %v583 = vpop.f32.mrb[0].mxu0
          %584 = vmatprep.mubr.f32.mxu0 0.0
          %585 = vmatmul.mubr.f32.gmra.mrb[0].mxu0 %v396
          %v586 = vpop.f32.mrb[0].mxu0
          %v587 = vadd.f32 0.0, %v586
          %v588 = vpop.f32.mrb[0].mxu0
          %589 = vmatprep.mubr.f32.mxu0 0.0
          %590 = vmatmul.mubr.f32.gmra.mrb[0].mxu0 %v397
          %v591 = vpop.f32.mrb[0].mxu0
          %v592 = vadd.f32 0.0, %v591
          %v593 = vpop.f32.mrb[0].mxu0
          %594 = vmatprep.mubr.f32.mxu0 0.0
          %595 = vmatmul.mubr.f32.gmra.mrb[0].mxu0 %v398
          %v596 = vpop.f32.mrb[0].mxu0
          %v597 = vadd.f32 0.0, %v596
          %v598 = vpop.f32.mrb[0].mxu0
          %599 = vmatprep.mubr.f32.mxu0 0.0
          %600 = vmatmul.mubr.f32.gmra.mrb[0].mxu0 %v399
          %v601 = vpop.f32.mrb[0].mxu0
          %v602 = vadd.f32 0.0, %v601
          %v603 = vpop.f32.mrb[0].mxu0
          %604 = vmatprep.mubr.f32.mxu0 0.0
          %605 = vmatmul.mubr.f32.gmra.mrb[0].mxu0 %v400
          %v606 = vpop.f32.mrb[0].mxu0
          %v607 = vadd.f32 0.0, %v606
          %v608 = vpop.f32.mrb[0].mxu0
          %609 = vmatprep.mubr.f32.mxu0 0.0
          %610 = vmatmul.mubr.f32.gmra.mrb[0].mxu0 %v401
          %v611 = vpop.f32.mrb[0].mxu0
          %v612 = vadd.f32 0.0, %v611
          %v613 = vpop.f32.mrb[0].mxu0
          %614 = vmatprep.mubr.f32.mxu0 0.0
          %615 = vmatmul.mubr.f32.gmra.mrb[0].mxu0 %v402
          %v616 = vpop.f32.mrb[0].mxu0
          %v617 = vadd.f32 0.0, %v616
          %v618 = vpop.f32.mrb[0].mxu0
          %619 = vmatprep.mubr.f32.mxu0 0.0
          %620 = vmatmul.mubr.f32.gmra.mrb[0].mxu0 %v403
          %v621 = vpop.f32.mrb[0].mxu0
          %v622 = vadd.f32 0.0, %v621
          %v623 = vpop.f32.mrb[0].mxu0
          %624 = vmatprep.mubr.f32.mxu0 0.0
          %625 = vmatmul.mubr.f32.gmra.mrb[0].mxu0 %v404
          %v626 = vpop.f32.mrb[0].mxu0
          %v627 = vadd.f32 0.0, %v626
          %v628 = vpop.f32.mrb[0].mxu0
          %629 = vmatprep.mubr.f32.mxu0 0.0
          %630 = vmatmul.mubr.f32.gmra.mrb[0].mxu0 %v405
          %v631 = vpop.f32.mrb[0].mxu0
          %v632 = vadd.f32 0.0, %v631
          %v633 = vpop.f32.mrb[0].mxu0
          %634 = vmatprep.mubr.f32.mxu0 0.0
          %635 = vmatmul.mubr.f32.gmra.mrb[0].mxu0 %v406
          %v636 = vpop.f32.mrb[0].mxu0
          %v637 = vadd.f32 0.0, %v636
          %v638 = vpop.f32.mrb[0].mxu0
          %639 = vmatprep.mubr.f32.mxu0 0.0
          %640 = vmatmul.mubr.f32.gmra.mrb[0].mxu0 %v407
          %v641 = vpop.f32.mrb[0].mxu0
          %v642 = vadd.f32 0.0, %v641
          %v643 = vpop.f32.mrb[0].mxu0
          %644 = vmatprep.mubr.f32.mxu0 0.0
          %645 = vmatmul.mubr.f32.gmra.mrb[0].mxu0 %v408
          %v646 = vpop.f32.mrb[0].mxu0
          %v647 = vadd.f32 0.0, %v646
          %v648 = vpop.f32.mrb[0].mxu0
          %649 = vdwg.mxu0
          %v650 = vld [vmem:[%s2] sm:$0x1]
          %v652 = vlaneseq
          %v653 = vshrl.u32 %v652, 7
          %v654 = vsub.s32 0, %v653
          %v655 = vrot.slane %v650, %v654
          %v657 = vmul.f32 %v492, %v655
          %v658 = vmul.f32 %v497, %v655
          %v659 = vmul.f32 %v502, %v655
          %v660 = vmul.f32 %v507, %v655
          %v661 = vmul.f32 %v512, %v655
          %v662 = vmul.f32 %v517, %v655
          %v663 = vmul.f32 %v522, %v655
          %v664 = vmul.f32 %v527, %v655
          %v665 = vmul.f32 %v532, %v655
          %v666 = vmul.f32 %v537, %v655
          %v667 = vmul.f32 %v542, %v655
          %v668 = vmul.f32 %v547, %v655
          %v669 = vmul.f32 %v552, %v655
          %v670 = vmul.f32 %v557, %v655
          %v671 = vmul.f32 %v562, %v655
          %v672 = vmul.f32 %v567, %v655
          %v673 = vmul.f32 %v572, %v655
          %v674 = vmul.f32 %v577, %v655
          %v675 = vmul.f32 %v582, %v655
          %v676 = vmul.f32 %v587, %v655
          %v677 = vmul.f32 %v592, %v655
          %v678 = vmul.f32 %v597, %v655
          %v679 = vmul.f32 %v602, %v655
          %v680 = vmul.f32 %v607, %v655
          %v681 = vmul.f32 %v612, %v655
          %v682 = vmul.f32 %v617, %v655
          %v683 = vmul.f32 %v622, %v655
          %v684 = vmul.f32 %v627, %v655
          %v685 = vmul.f32 %v632, %v655
          %v686 = vmul.f32 %v637, %v655
          %v687 = vmul.f32 %v642, %v655
          %v688 = vmul.f32 %v647, %v655
          %v689 = vld [vmem:[%s3] sm:$0x1]
          %v691 = vlaneseq
          %v692 = vshrl.u32 %v691, 7
          %v693 = vsub.s32 0, %v692
          %v694 = vrot.slane %v689, %v693
          %v696 = vadd.f32 %v657, %v694
          %v697 = vadd.f32 %v658, %v694
          %v698 = vadd.f32 %v659, %v694
          %v699 = vadd.f32 %v660, %v694
          %v700 = vadd.f32 %v661, %v694
          %v701 = vadd.f32 %v662, %v694
          %v702 = vadd.f32 %v663, %v694
          %v703 = vadd.f32 %v664, %v694
          %v704 = vadd.f32 %v665, %v694
          %v705 = vadd.f32 %v666, %v694
          %v706 = vadd.f32 %v667, %v694
          %v707 = vadd.f32 %v668, %v694
          %v708 = vadd.f32 %v669, %v694
          %v709 = vadd.f32 %v670, %v694
          %v710 = vadd.f32 %v671, %v694
          %v711 = vadd.f32 %v672, %v694
          %v712 = vadd.f32 %v673, %v694
          %v713 = vadd.f32 %v674, %v694
          %v714 = vadd.f32 %v675, %v694
          %v715 = vadd.f32 %v676, %v694
          %v716 = vadd.f32 %v677, %v694
          %v717 = vadd.f32 %v678, %v694
          %v718 = vadd.f32 %v679, %v694
          %v719 = vadd.f32 %v680, %v694
          %v720 = vadd.f32 %v681, %v694
          %v721 = vadd.f32 %v682, %v694
          %v722 = vadd.f32 %v683, %v694
          %v723 = vadd.f32 %v684, %v694
          %v724 = vadd.f32 %v685, %v694
          %v725 = vadd.f32 %v686, %v694
          %v726 = vadd.f32 %v687, %v694
          %v727 = vadd.f32 %v688, %v694
          %v728 = vmax.f32 %v696, 0.0
          %v729 = vmax.f32 %v697, 0.0
          %v730 = vmax.f32 %v698, 0.0
          %v731 = vmax.f32 %v699, 0.0
          %v732 = vmax.f32 %v700, 0.0
          %v733 = vmax.f32 %v701, 0.0
          %v734 = vmax.f32 %v702, 0.0
          %v735 = vmax.f32 %v703, 0.0
          %v736 = vmax.f32 %v704, 0.0
          %v737 = vmax.f32 %v705, 0.0
          %v738 = vmax.f32 %v706, 0.0
          %v739 = vmax.f32 %v707, 0.0
          %v740 = vmax.f32 %v708, 0.0
          %v741 = vmax.f32 %v709, 0.0
          %v742 = vmax.f32 %v710, 0.0
          %v743 = vmax.f32 %v711, 0.0
          %v744 = vmax.f32 %v712, 0.0
          %v745 = vmax.f32 %v713, 0.0
          %v746 = vmax.f32 %v714, 0.0
          %v747 = vmax.f32 %v715, 0.0
          %v748 = vmax.f32 %v716, 0.0
          %v749 = vmax.f32 %v717, 0.0
          %v750 = vmax.f32 %v718, 0.0
          %v751 = vmax.f32 %v719, 0.0
          %v752 = vmax.f32 %v720, 0.0
          %v753 = vmax.f32 %v721, 0.0
          %v754 = vmax.f32 %v722, 0.0
          %v755 = vmax.f32 %v723, 0.0
          %v756 = vmax.f32 %v724, 0.0
          %v757 = vmax.f32 %v725, 0.0
          %v758 = vmax.f32 %v726, 0.0
          %v759 = vmax.f32 %v727, 0.0
          %s760 = scalar_lea.vmem [#allocation2], 32
          %vm761 = vcmask 261120
          %762 = vst.msk [vmem:[%s760 + $0x8] sm:$0xff] %vm761, %v728
          %763 = vst.msk [vmem:[%s760 + $0x10] sm:$0xff] %vm761, %v729
          %764 = vst.msk [vmem:[%s760 + $0x28] sm:$0xff] %vm761, %v730
          %765 = vst.msk [vmem:[%s760 + $0x30] sm:$0xff] %vm761, %v731
          %766 = vst.msk [vmem:[%s760 + $0x48] sm:$0xff] %vm761, %v732
          %767 = vst.msk [vmem:[%s760 + $0x50] sm:$0xff] %vm761, %v733
          %768 = vst.msk [vmem:[%s760 + $0x68] sm:$0xff] %vm761, %v734
          %769 = vst.msk [vmem:[%s760 + $0x70] sm:$0xff] %vm761, %v735
          %770 = vst.msk [vmem:[%s760 + $0x88] sm:$0xff] %vm761, %v736
          %771 = vst.msk [vmem:[%s760 + $0x90] sm:$0xff] %vm761, %v737
          %772 = vst.msk [vmem:[%s760 + $0xa8] sm:$0xff] %vm761, %v738
          %773 = vst.msk [vmem:[%s760 + $0xb0] sm:$0xff] %vm761, %v739
          %774 = vst.msk [vmem:[%s760 + $0xc8] sm:$0xff] %vm761, %v740
          %775 = vst.msk [vmem:[%s760 + $0xd0] sm:$0xff] %vm761, %v741
          %776 = vst.msk [vmem:[%s760 + $0xe8] sm:$0xff] %vm761, %v742
          %777 = vst.msk [vmem:[%s760 + $0xf0] sm:$0xff] %vm761, %v743
          %778 = vst.msk [vmem:[%s760 + $0x108] sm:$0xff] %vm761, %v744
          %779 = vst.msk [vmem:[%s760 + $0x110] sm:$0xff] %vm761, %v745
          %780 = vst.msk [vmem:[%s760 + $0x128] sm:$0xff] %vm761, %v746
          %781 = vst.msk [vmem:[%s760 + $0x130] sm:$0xff] %vm761, %v747
          %782 = vst.msk [vmem:[%s760 + $0x148] sm:$0xff] %vm761, %v748
          %783 = vst.msk [vmem:[%s760 + $0x150] sm:$0xff] %vm761, %v749
          %784 = vst.msk [vmem:[%s760 + $0x168] sm:$0xff] %vm761, %v750
          %785 = vst.msk [vmem:[%s760 + $0x170] sm:$0xff] %vm761, %v751
          %786 = vst.msk [vmem:[%s760 + $0x188] sm:$0xff] %vm761, %v752
          %787 = vst.msk [vmem:[%s760 + $0x190] sm:$0xff] %vm761, %v753
          %788 = vst.msk [vmem:[%s760 + $0x1a8] sm:$0xff] %vm761, %v754
          %789 = vst.msk [vmem:[%s760 + $0x1b0] sm:$0xff] %vm761, %v755
          %790 = vst.msk [vmem:[%s760 + $0x1c8] sm:$0xff] %vm761, %v756
          %791 = vst.msk [vmem:[%s760 + $0x1d0] sm:$0xff] %vm761, %v757
          %792 = vst.msk [vmem:[%s760 + $0x1e8] sm:$0xff] %vm761, %v758
          %793 = vst.msk [vmem:[%s760 + $0x1f0] sm:$0xff] %vm761, %v759
          %794 = vst.msk [vmem:[#allocation2] sm:$0xff] %vm761, 0.0
          %795 = vst.msk [vmem:[#allocation2 + $0x8] sm:$0xff] %vm761, 0.0
          %796 = vst.msk [vmem:[#allocation2 + $0x10] sm:$0xff] %vm761, 0.0
          %797 = vst.msk [vmem:[#allocation2 + $0x18] sm:$0xff] %vm761, 0.0
          %s798 = scalar_lea.vmem [#allocation2], 544
          %799 = vst.msk [vmem:[%s798] sm:$0xff] %vm761, 0.0
          %800 = vst.msk [vmem:[%s798 + $0x8] sm:$0xff] %vm761, 0.0
          %801 = vst.msk [vmem:[%s798 + $0x10] sm:$0xff] %vm761, 0.0
          %802 = vst.msk [vmem:[%s798 + $0x18] sm:$0xff] %vm761, 0.0
          %803 = vst.msk [vmem:[%s760] sm:$0xff] %vm761, 0.0
          %804 = vst.msk [vmem:[%s760 + $0x20] sm:$0xff] %vm761, 0.0
          %805 = vst.msk [vmem:[%s760 + $0x40] sm:$0xff] %vm761, 0.0
          %806 = vst.msk [vmem:[%s760 + $0x60] sm:$0xff] %vm761, 0.0
          %807 = vst.msk [vmem:[%s760 + $0x80] sm:$0xff] %vm761, 0.0
          %808 = vst.msk [vmem:[%s760 + $0xa0] sm:$0xff] %vm761, 0.0
          %809 = vst.msk [vmem:[%s760 + $0xc0] sm:$0xff] %vm761, 0.0
          %810 = vst.msk [vmem:[%s760 + $0xe0] sm:$0xff] %vm761, 0.0
          %811 = vst.msk [vmem:[%s760 + $0x100] sm:$0xff] %vm761, 0.0
          %812 = vst.msk [vmem:[%s760 + $0x120] sm:$0xff] %vm761, 0.0
          %813 = vst.msk [vmem:[%s760 + $0x140] sm:$0xff] %vm761, 0.0
          %814 = vst.msk [vmem:[%s760 + $0x160] sm:$0xff] %vm761, 0.0
          %815 = vst.msk [vmem:[%s760 + $0x180] sm:$0xff] %vm761, 0.0
          %816 = vst.msk [vmem:[%s760 + $0x1a0] sm:$0xff] %vm761, 0.0
          %817 = vst.msk [vmem:[%s760 + $0x1c0] sm:$0xff] %vm761, 0.0
          %818 = vst.msk [vmem:[%s760 + $0x1e0] sm:$0xff] %vm761, 0.0
          %819 = vst.msk [vmem:[%s760 + $0x18] sm:$0xff] %vm761, 0.0
          %820 = vst.msk [vmem:[%s760 + $0x38] sm:$0xff] %vm761, 0.0
          %821 = vst.msk [vmem:[%s760 + $0x58] sm:$0xff] %vm761, 0.0
          %822 = vst.msk [vmem:[%s760 + $0x78] sm:$0xff] %vm761, 0.0
          %823 = vst.msk [vmem:[%s760 + $0x98] sm:$0xff] %vm761, 0.0
          %824 = vst.msk [vmem:[%s760 + $0xb8] sm:$0xff] %vm761, 0.0
          %825 = vst.msk [vmem:[%s760 + $0xd8] sm:$0xff] %vm761, 0.0
          %826 = vst.msk [vmem:[%s760 + $0xf8] sm:$0xff] %vm761, 0.0
          %827 = vst.msk [vmem:[%s760 + $0x118] sm:$0xff] %vm761, 0.0
          %828 = vst.msk [vmem:[%s760 + $0x138] sm:$0xff] %vm761, 0.0
          %829 = vst.msk [vmem:[%s760 + $0x158] sm:$0xff] %vm761, 0.0
          %830 = vst.msk [vmem:[%s760 + $0x178] sm:$0xff] %vm761, 0.0
          %831 = vst.msk [vmem:[%s760 + $0x198] sm:$0xff] %vm761, 0.0
          %832 = vst.msk [vmem:[%s760 + $0x1b8] sm:$0xff] %vm761, 0.0
          %833 = vst.msk [vmem:[%s760 + $0x1d8] sm:$0xff] %vm761, 0.0
          %834 = vst.msk [vmem:[%s760 + $0x1f8] sm:$0xff] %vm761, 0.0
        $region64: #{tpu_custom_call.1} parent=59 // pred_fallthru
          _
        %s835 = smul.u32 %s29, 8
        %s836 = smul.u32 %s835, 32
        %s837 = scalar_lea.vmem [#allocation2], %s836
        %v838 = vld [vmem:[%s837] sm:$0xff]
        %v839 = vld [vmem:[%s837 + $0x8] sm:$0xff]
        %v840 = vld [vmem:[%s837 + $0x10] sm:$0xff]
        %v841 = vld [vmem:[%s837 + $0x18] sm:$0xff]
        %v842 = vld [vmem:[%s837 + $0x20] sm:$0xff]
        %v843 = vld [vmem:[%s837 + $0x28] sm:$0xff]
        %v844 = vld [vmem:[%s837 + $0x30] sm:$0xff]
        %v845 = vld [vmem:[%s837 + $0x38] sm:$0xff]
        %v846 = vld [vmem:[%s837 + $0x40] sm:$0xff]
        %v847 = vld [vmem:[%s837 + $0x48] sm:$0xff]
        %v848 = vld [vmem:[%s837 + $0x50] sm:$0xff]
        %v849 = vld [vmem:[%s837 + $0x58] sm:$0xff]
        %v850 = vld [vmem:[%s837 + $0x60] sm:$0xff]
        %v851 = vld [vmem:[%s837 + $0x68] sm:$0xff]
        %v852 = vld [vmem:[%s837 + $0x70] sm:$0xff]
        %v853 = vld [vmem:[%s837 + $0x78] sm:$0xff]
        %v854 = vld [vmem:[%s837 + $0x80] sm:$0xff]
        %v855 = vld [vmem:[%s837 + $0x88] sm:$0xff]
        %v856 = vld [vmem:[%s837 + $0x90] sm:$0xff]
        %v857 = vld [vmem:[%s837 + $0x98] sm:$0xff]
        %v858 = vld [vmem:[%s837 + $0xa0] sm:$0xff]
        %v859 = vld [vmem:[%s837 + $0xa8] sm:$0xff]
        %v860 = vld [vmem:[%s837 + $0xb0] sm:$0xff]
        %v861 = vld [vmem:[%s837 + $0xb8] sm:$0xff]
        %v862 = vld [vmem:[%s837 + $0xc0] sm:$0xff]
        %v863 = vld [vmem:[%s837 + $0xc8] sm:$0xff]
        %v864 = vld [vmem:[%s837 + $0xd0] sm:$0xff]
        %v865 = vld [vmem:[%s837 + $0xd8] sm:$0xff]
        %v866 = vld [vmem:[%s837 + $0xe0] sm:$0xff]
        %v867 = vld [vmem:[%s837 + $0xe8] sm:$0xff]
        %v868 = vld [vmem:[%s837 + $0xf0] sm:$0xff]
        %v869 = vld [vmem:[%s837 + $0xf8] sm:$0xff]
        %s870 = sadd.s32 %s835, 1
        %s871 = smul.u32 %s870, 32
        %s872 = scalar_lea.vmem [#allocation2], %s871
        %v873 = vld [vmem:[%s872] sm:$0xff]
        %v874 = vld [vmem:[%s872 + $0x8] sm:$0xff]
        %v875 = vld [vmem:[%s872 + $0x10] sm:$0xff]
        %v876 = vld [vmem:[%s872 + $0x18] sm:$0xff]
        %v877 = vld [vmem:[%s872 + $0x20] sm:$0xff]
        %v878 = vld [vmem:[%s872 + $0x28] sm:$0xff]
        %v879 = vld [vmem:[%s872 + $0x30] sm:$0xff]
        %v880 = vld [vmem:[%s872 + $0x38] sm:$0xff]
        %v881 = vld [vmem:[%s872 + $0x40] sm:$0xff]
        %v882 = vld [vmem:[%s872 + $0x48] sm:$0xff]
        %v883 = vld [vmem:[%s872 + $0x50] sm:$0xff]
        %v884 = vld [vmem:[%s872 + $0x58] sm:$0xff]
        %v885 = vld [vmem:[%s872 + $0x60] sm:$0xff]
        %v886 = vld [vmem:[%s872 + $0x68] sm:$0xff]
        %v887 = vld [vmem:[%s872 + $0x70] sm:$0xff]
        %v888 = vld [vmem:[%s872 + $0x78] sm:$0xff]
        %v889 = vld [vmem:[%s872 + $0x80] sm:$0xff]
        %v890 = vld [vmem:[%s872 + $0x88] sm:$0xff]
        %v891 = vld [vmem:[%s872 + $0x90] sm:$0xff]
        %v892 = vld [vmem:[%s872 + $0x98] sm:$0xff]
        %v893 = vld [vmem:[%s872 + $0xa0] sm:$0xff]
        %v894 = vld [vmem:[%s872 + $0xa8] sm:$0xff]
        %v895 = vld [vmem:[%s872 + $0xb0] sm:$0xff]
        %v896 = vld [vmem:[%s872 + $0xb8] sm:$0xff]
        %v897 = vld [vmem:[%s872 + $0xc0] sm:$0xff]
        %v898 = vld [vmem:[%s872 + $0xc8] sm:$0xff]
        %v899 = vld [vmem:[%s872 + $0xd0] sm:$0xff]
        %v900 = vld [vmem:[%s872 + $0xd8] sm:$0xff]
        %v901 = vld [vmem:[%s872 + $0xe0] sm:$0xff]
        %v902 = vld [vmem:[%s872 + $0xe8] sm:$0xff]
        %v903 = vld [vmem:[%s872 + $0xf0] sm:$0xff]
        %v904 = vld [vmem:[%s872 + $0xf8] sm:$0xff]
        %s905 = sadd.s32 %s835, 2
        %s906 = smul.u32 %s905, 32
        %s907 = scalar_lea.vmem [#allocation2], %s906
        %v908 = vld [vmem:[%s907] sm:$0xff]
        %v909 = vld [vmem:[%s907 + $0x8] sm:$0xff]
        %v910 = vld [vmem:[%s907 + $0x10] sm:$0xff]
        %v911 = vld [vmem:[%s907 + $0x18] sm:$0xff]
        %v912 = vld [vmem:[%s907 + $0x20] sm:$0xff]
        %v913 = vld [vmem:[%s907 + $0x28] sm:$0xff]
        %v914 = vld [vmem:[%s907 + $0x30] sm:$0xff]
        %v915 = vld [vmem:[%s907 + $0x38] sm:$0xff]
        %v916 = vld [vmem:[%s907 + $0x40] sm:$0xff]
        %v917 = vld [vmem:[%s907 + $0x48] sm:$0xff]
        %v918 = vld [vmem:[%s907 + $0x50] sm:$0xff]
        %v919 = vld [vmem:[%s907 + $0x58] sm:$0xff]
        %v920 = vld [vmem:[%s907 + $0x60] sm:$0xff]
        %v921 = vld [vmem:[%s907 + $0x68] sm:$0xff]
        %v922 = vld [vmem:[%s907 + $0x70] sm:$0xff]
        %v923 = vld [vmem:[%s907 + $0x78] sm:$0xff]
        %v924 = vld [vmem:[%s907 + $0x80] sm:$0xff]
        %v925 = vld [vmem:[%s907 + $0x88] sm:$0xff]
        %v926 = vld [vmem:[%s907 + $0x90] sm:$0xff]
        %v927 = vld [vmem:[%s907 + $0x98] sm:$0xff]
        %v928 = vld [vmem:[%s907 + $0xa0] sm:$0xff]
        %v929 = vld [vmem:[%s907 + $0xa8] sm:$0xff]
        %v930 = vld [vmem:[%s907 + $0xb0] sm:$0xff]
        %v931 = vld [vmem:[%s907 + $0xb8] sm:$0xff]
        %v932 = vld [vmem:[%s907 + $0xc0] sm:$0xff]
        %v933 = vld [vmem:[%s907 + $0xc8] sm:$0xff]
        %v934 = vld [vmem:[%s907 + $0xd0] sm:$0xff]
        %v935 = vld [vmem:[%s907 + $0xd8] sm:$0xff]
        %v936 = vld [vmem:[%s907 + $0xe0] sm:$0xff]
        %v937 = vld [vmem:[%s907 + $0xe8] sm:$0xff]
        %v938 = vld [vmem:[%s907 + $0xf0] sm:$0xff]
        %v939 = vld [vmem:[%s907 + $0xf8] sm:$0xff]
        %972 = vrot.lane.b32.xlu0 %v873, 32
        %v973 = vpop.permute.xlu0 %972
        %974 = vrot.lane.b32.xlu0 %v874, 32
        %v975 = vpop.permute.xlu0 %974
        %976 = vrot.lane.b32.xlu0 %v875, 32
        %v977 = vpop.permute.xlu0 %976
        %978 = vrot.lane.b32.xlu0 %v876, 32
        %v979 = vpop.permute.xlu0 %978
        %980 = vrot.lane.b32.xlu0 %v877, 32
        %v981 = vpop.permute.xlu0 %980
        %982 = vrot.lane.b32.xlu0 %v878, 32
        %v983 = vpop.permute.xlu0 %982
        %984 = vrot.lane.b32.xlu0 %v879, 32
        %v985 = vpop.permute.xlu0 %984
        %986 = vrot.lane.b32.xlu0 %v880, 32
        %v987 = vpop.permute.xlu0 %986
        %988 = vrot.lane.b32.xlu0 %v881, 32
        %v989 = vpop.permute.xlu0 %988
        %990 = vrot.lane.b32.xlu0 %v882, 32
        %v991 = vpop.permute.xlu0 %990
        %992 = vrot.lane.b32.xlu0 %v883, 32
        %v993 = vpop.permute.xlu0 %992
        %994 = vrot.lane.b32.xlu0 %v884, 32
        %v995 = vpop.permute.xlu0 %994
        %996 = vrot.lane.b32.xlu0 %v885, 32
        %v997 = vpop.permute.xlu0 %996
        %998 = vrot.lane.b32.xlu0 %v886, 32
        %v999 = vpop.permute.xlu0 %998
        %1000 = vrot.lane.b32.xlu0 %v887, 32
        %v1001 = vpop.permute.xlu0 %1000
        %1002 = vrot.lane.b32.xlu0 %v888, 32
        %v1003 = vpop.permute.xlu0 %1002
        %1004 = vrot.lane.b32.xlu0 %v889, 32
        %v1005 = vpop.permute.xlu0 %1004
        %1006 = vrot.lane.b32.xlu0 %v890, 32
        %v1007 = vpop.permute.xlu0 %1006
        %1008 = vrot.lane.b32.xlu0 %v891, 32
        %v1009 = vpop.permute.xlu0 %1008
        %1010 = vrot.lane.b32.xlu0 %v892, 32
        %v1011 = vpop.permute.xlu0 %1010
        %1012 = vrot.lane.b32.xlu0 %v893, 32
        %v1013 = vpop.permute.xlu0 %1012
        %1014 = vrot.lane.b32.xlu0 %v894, 32
        %v1015 = vpop.permute.xlu0 %1014
        %1016 = vrot.lane.b32.xlu0 %v895, 32
        %v1017 = vpop.permute.xlu0 %1016
        %1018 = vrot.lane.b32.xlu0 %v896, 32
        %v1019 = vpop.permute.xlu0 %1018
        %1020 = vrot.lane.b32.xlu0 %v897, 32
        %v1021 = vpop.permute.xlu0 %1020
        %1022 = vrot.lane.b32.xlu0 %v898, 32
        %v1023 = vpop.permute.xlu0 %1022
        %1024 = vrot.lane.b32.xlu0 %v899, 32
        %v1025 = vpop.permute.xlu0 %1024
        %1026 = vrot.lane.b32.xlu0 %v900, 32
        %v1027 = vpop.permute.xlu0 %1026
        %1028 = vrot.lane.b32.xlu0 %v901, 32
        %v1029 = vpop.permute.xlu0 %1028
        %1030 = vrot.lane.b32.xlu0 %v902, 32
        %v1031 = vpop.permute.xlu0 %1030
        %1032 = vrot.lane.b32.xlu0 %v903, 32
        %v1033 = vpop.permute.xlu0 %1032
        %1034 = vrot.lane.b32.xlu0 %v904, 32
        %v1035 = vpop.permute.xlu0 %1034
        %1100 = vrot.lane.b32.xlu0 %v908, 64
        %v1101 = vpop.permute.xlu0 %1100
        %1102 = vrot.lane.b32.xlu0 %v909, 64
        %v1103 = vpop.permute.xlu0 %1102
        %1104 = vrot.lane.b32.xlu0 %v910, 64
        %v1105 = vpop.permute.xlu0 %1104
        %1106 = vrot.lane.b32.xlu0 %v911, 64
        %v1107 = vpop.permute.xlu0 %1106
        %1108 = vrot.lane.b32.xlu0 %v912, 64
        %v1109 = vpop.permute.xlu0 %1108
        %1110 = vrot.lane.b32.xlu0 %v913, 64
        %v1111 = vpop.permute.xlu0 %1110
        %1112 = vrot.lane.b32.xlu0 %v914, 64
        %v1113 = vpop.permute.xlu0 %1112
        %1114 = vrot.lane.b32.xlu0 %v915, 64
        %v1115 = vpop.permute.xlu0 %1114
        %1116 = vrot.lane.b32.xlu0 %v916, 64
        %v1117 = vpop.permute.xlu0 %1116
        %1118 = vrot.lane.b32.xlu0 %v917, 64
        %v1119 = vpop.permute.xlu0 %1118
        %1120 = vrot.lane.b32.xlu0 %v918, 64
        %v1121 = vpop.permute.xlu0 %1120
        %1122 = vrot.lane.b32.xlu0 %v919, 64
        %v1123 = vpop.permute.xlu0 %1122
        %1124 = vrot.lane.b32.xlu0 %v920, 64
        %v1125 = vpop.permute.xlu0 %1124
        %1126 = vrot.lane.b32.xlu0 %v921, 64
        %v1127 = vpop.permute.xlu0 %1126
        %1128 = vrot.lane.b32.xlu0 %v922, 64
        %v1129 = vpop.permute.xlu0 %1128
        %1130 = vrot.lane.b32.xlu0 %v923, 64
        %v1131 = vpop.permute.xlu0 %1130
        %1132 = vrot.lane.b32.xlu0 %v924, 64
        %v1133 = vpop.permute.xlu0 %1132
        %1134 = vrot.lane.b32.xlu0 %v925, 64
        %v1135 = vpop.permute.xlu0 %1134
        %1136 = vrot.lane.b32.xlu0 %v926, 64
        %v1137 = vpop.permute.xlu0 %1136
        %1138 = vrot.lane.b32.xlu0 %v927, 64
        %v1139 = vpop.permute.xlu0 %1138
        %1140 = vrot.lane.b32.xlu0 %v928, 64
        %v1141 = vpop.permute.xlu0 %1140
        %1142 = vrot.lane.b32.xlu0 %v929, 64
        %v1143 = vpop.permute.xlu0 %1142
        %1144 = vrot.lane.b32.xlu0 %v930, 64
        %v1145 = vpop.permute.xlu0 %1144
        %1146 = vrot.lane.b32.xlu0 %v931, 64
        %v1147 = vpop.permute.xlu0 %1146
        %1148 = vrot.lane.b32.xlu0 %v932, 64
        %v1149 = vpop.permute.xlu0 %1148
        %1150 = vrot.lane.b32.xlu0 %v933, 64
        %v1151 = vpop.permute.xlu0 %1150
        %1152 = vrot.lane.b32.xlu0 %v934, 64
        %v1153 = vpop.permute.xlu0 %1152
        %1154 = vrot.lane.b32.xlu0 %v935, 64
        %v1155 = vpop.permute.xlu0 %1154
        %1156 = vrot.lane.b32.xlu0 %v936, 64
        %v1157 = vpop.permute.xlu0 %1156
        %1158 = vrot.lane.b32.xlu0 %v937, 64
        %v1159 = vpop.permute.xlu0 %1158
        %1160 = vrot.lane.b32.xlu0 %v938, 64
        %v1161 = vpop.permute.xlu0 %1160
        %1162 = vrot.lane.b32.xlu0 %v939, 64
        %v1163 = vpop.permute.xlu0 %1162
        %vm1196 = vcmask 261120
        %v1197 = vsel %vm1196, %v838, %v973
        %v1198 = vsel %vm1196, %v839, %v975
        %v1199 = vsel %vm1196, %v840, %v977
        %v1200 = vsel %vm1196, %v841, %v979
        %v1201 = vsel %vm1196, %v842, %v981
        %v1202 = vsel %vm1196, %v843, %v983
        %v1203 = vsel %vm1196, %v844, %v985
        %v1204 = vsel %vm1196, %v845, %v987
        %v1205 = vsel %vm1196, %v846, %v989
        %v1206 = vsel %vm1196, %v847, %v991
        %v1207 = vsel %vm1196, %v848, %v993
        %v1208 = vsel %vm1196, %v849, %v995
        %v1209 = vsel %vm1196, %v850, %v997
        %v1210 = vsel %vm1196, %v851, %v999
        %v1211 = vsel %vm1196, %v852, %v1001
        %v1212 = vsel %vm1196, %v853, %v1003
        %v1213 = vsel %vm1196, %v854, %v1005
        %v1214 = vsel %vm1196, %v855, %v1007
        %v1215 = vsel %vm1196, %v856, %v1009
        %v1216 = vsel %vm1196, %v857, %v1011
        %v1217 = vsel %vm1196, %v858, %v1013
        %v1218 = vsel %vm1196, %v859, %v1015
        %v1219 = vsel %vm1196, %v860, %v1017
        %v1220 = vsel %vm1196, %v861, %v1019
        %v1221 = vsel %vm1196, %v862, %v1021
        %v1222 = vsel %vm1196, %v863, %v1023
        %v1223 = vsel %vm1196, %v864, %v1025
        %v1224 = vsel %vm1196, %v865, %v1027
        %v1225 = vsel %vm1196, %v866, %v1029
        %v1226 = vsel %vm1196, %v867, %v1031
        %v1227 = vsel %vm1196, %v868, %v1033
        %v1228 = vsel %vm1196, %v869, %v1035
        %vm1229 = vcmask 523264
        %v1230 = vsel %vm1229, %v1197, %v1101
        %v1231 = vsel %vm1229, %v1198, %v1103
        %v1232 = vsel %vm1229, %v1199, %v1105
        %v1233 = vsel %vm1229, %v1200, %v1107
        %v1234 = vsel %vm1229, %v1201, %v1109
        %v1235 = vsel %vm1229, %v1202, %v1111
        %v1236 = vsel %vm1229, %v1203, %v1113
        %v1237 = vsel %vm1229, %v1204, %v1115
        %v1238 = vsel %vm1229, %v1205, %v1117
        %v1239 = vsel %vm1229, %v1206, %v1119
        %v1240 = vsel %vm1229, %v1207, %v1121
        %v1241 = vsel %vm1229, %v1208, %v1123
        %v1242 = vsel %vm1229, %v1209, %v1125
        %v1243 = vsel %vm1229, %v1210, %v1127
        %v1244 = vsel %vm1229, %v1211, %v1129
        %v1245 = vsel %vm1229, %v1212, %v1131
        %v1246 = vsel %vm1229, %v1213, %v1133
        %v1247 = vsel %vm1229, %v1214, %v1135
        %v1248 = vsel %vm1229, %v1215, %v1137
        %v1249 = vsel %vm1229, %v1216, %v1139
        %v1250 = vsel %vm1229, %v1217, %v1141
        %v1251 = vsel %vm1229, %v1218, %v1143
        %v1252 = vsel %vm1229, %v1219, %v1145
        %v1253 = vsel %vm1229, %v1220, %v1147
        %v1254 = vsel %vm1229, %v1221, %v1149
        %v1255 = vsel %vm1229, %v1222, %v1151
        %v1256 = vsel %vm1229, %v1223, %v1153
        %v1257 = vsel %vm1229, %v1224, %v1155
        %v1258 = vsel %vm1229, %v1225, %v1157
        %v1259 = vsel %vm1229, %v1226, %v1159
        %v1260 = vsel %vm1229, %v1227, %v1161
        %v1261 = vsel %vm1229, %v1228, %v1163
        %vm1286 = vcmask 1040384
        %v1287 = vrot.slane %v1230, 7
        %v1288 = vrot.slane %v1231, 7
        %v1289 = vsel %vm1286, %v1287, %v1288
        %v1290 = vrot.slane %v1232, 7
        %v1291 = vsel %vm1286, %v1288, %v1290
        %v1292 = vrot.slane %v1234, 7
        %v1293 = vrot.slane %v1235, 7
        %v1294 = vsel %vm1286, %v1292, %v1293
        %v1295 = vrot.slane %v1236, 7
        %v1296 = vsel %vm1286, %v1293, %v1295
        %v1297 = vrot.slane %v1238, 7
        %v1298 = vrot.slane %v1239, 7
        %v1299 = vsel %vm1286, %v1297, %v1298
        %v1300 = vrot.slane %v1240, 7
        %v1301 = vsel %vm1286, %v1298, %v1300
        %v1302 = vrot.slane %v1242, 7
        %v1303 = vrot.slane %v1243, 7
        %v1304 = vsel %vm1286, %v1302, %v1303
        %v1305 = vrot.slane %v1244, 7
        %v1306 = vsel %vm1286, %v1303, %v1305
        %v1307 = vrot.slane %v1246, 7
        %v1308 = vrot.slane %v1247, 7
        %v1309 = vsel %vm1286, %v1307, %v1308
        %v1310 = vrot.slane %v1248, 7
        %v1311 = vsel %vm1286, %v1308, %v1310
        %v1312 = vrot.slane %v1250, 7
        %v1313 = vrot.slane %v1251, 7
        %v1314 = vsel %vm1286, %v1312, %v1313
        %v1315 = vrot.slane %v1252, 7
        %v1316 = vsel %vm1286, %v1313, %v1315
        %v1317 = vrot.slane %v1254, 7
        %v1318 = vrot.slane %v1255, 7
        %v1319 = vsel %vm1286, %v1317, %v1318
        %v1320 = vrot.slane %v1256, 7
        %v1321 = vsel %vm1286, %v1318, %v1320
        %v1322 = vrot.slane %v1258, 7
        %v1323 = vrot.slane %v1259, 7
        %v1324 = vsel %vm1286, %v1322, %v1323
        %v1325 = vrot.slane %v1260, 7
        %v1326 = vsel %vm1286, %v1323, %v1325
        %v1327 = vld [vmem:[%s4] sm:$0xff]
        %v1328 = vld [vmem:[%s4 + $0x8] sm:$0xff]
        %v1329 = vld [vmem:[%s4 + $0x10] sm:$0xff]
        %v1330 = vld [vmem:[%s4 + $0x18] sm:$0xff]
        %v1331 = vld [vmem:[%s4 + $0x20] sm:$0xff]
        %v1332 = vld [vmem:[%s4 + $0x28] sm:$0xff]
        %v1333 = vld [vmem:[%s4 + $0x30] sm:$0xff]
        %v1334 = vld [vmem:[%s4 + $0x38] sm:$0xff]
        %v1335 = vld [vmem:[%s4 + $0x40] sm:$0xff]
        %v1336 = vld [vmem:[%s4 + $0x48] sm:$0xff]
        %v1337 = vld [vmem:[%s4 + $0x50] sm:$0xff]
        %v1338 = vld [vmem:[%s4 + $0x58] sm:$0xff]
        %s1339 = scalar_lea.vmem %s4, 96
        %v1340 = vld [vmem:[%s1339] sm:$0xff]
        %v1341 = vld [vmem:[%s1339 + $0x8] sm:$0xff]
        %v1342 = vld [vmem:[%s1339 + $0x10] sm:$0xff]
        %v1343 = vld [vmem:[%s1339 + $0x18] sm:$0xff]
        %v1344 = vld [vmem:[%s1339 + $0x20] sm:$0xff]
        %v1345 = vld [vmem:[%s1339 + $0x28] sm:$0xff]
        %v1346 = vld [vmem:[%s1339 + $0x30] sm:$0xff]
        %v1347 = vld [vmem:[%s1339 + $0x38] sm:$0xff]
        %v1348 = vld [vmem:[%s1339 + $0x40] sm:$0xff]
        %v1349 = vld [vmem:[%s1339 + $0x48] sm:$0xff]
        %v1350 = vld [vmem:[%s1339 + $0x50] sm:$0xff]
        %v1351 = vld [vmem:[%s1339 + $0x58] sm:$0xff]
        %vm1352 = vcmask 785408
        %v1353 = vsel %vm1352, %v1231, 0
        %v1355 = vsel %vm1352, %v1232, 0
        %v1357 = vsel %vm1352, %v1235, 0
        %v1359 = vsel %vm1352, %v1236, 0
        %v1361 = vsel %vm1352, %v1239, 0
        %v1363 = vsel %vm1352, %v1240, 0
        %v1365 = vsel %vm1352, %v1243, 0
        %v1367 = vsel %vm1352, %v1244, 0
        %v1369 = vsel %vm1352, %v1247, 0
        %v1371 = vsel %vm1352, %v1248, 0
        %v1373 = vsel %vm1352, %v1251, 0
        %v1375 = vsel %vm1352, %v1252, 0
        %v1377 = vsel %vm1352, %v1255, 0
        %v1379 = vsel %vm1352, %v1256, 0
        %v1381 = vsel %vm1352, %v1259, 0
        %v1383 = vsel %vm1352, %v1260, 0
        %1385 = vmatprep.subr.mxu0 0.0
        %1386 = vmatpush1.msra.mxu0 %v1340
        %1387 = vmatprep.subr.mxu0 0.0
        %1388 = vmatpush1.msra.mxu0 %v1341
        %1389 = vmatprep.subr.mxu0 0.0
        %1390 = vmatpush1.msra.mxu0 %v1342
        %1391 = vmatprep.subr.mxu0 0.0
        %1392 = vmatpush1.msra.mxu0 %v1343
        %1393 = vmatprep.subr.mxu0 0.0
        %1394 = vmatpush1.msra.mxu0 %v1344
        %1395 = vmatprep.subr.mxu0 0.0
        %1396 = vmatpush1.msra.mxu0 %v1345
        %1397 = vmatprep.subr.mxu0 0.0
        %1398 = vmatpush1.msra.mxu0 %v1346
        %1399 = vmatprep.subr.mxu0 0.0
        %1400 = vmatpush1.msra.mxu0 %v1347
        %1401 = vmatprep.subr.mxu0 0.0
        %1402 = vmatpush1.msra.mxu0 %v1348
        %1403 = vmatprep.subr.mxu0 0.0
        %1404 = vmatpush1.msra.mxu0 %v1349
        %1405 = vmatprep.subr.mxu0 0.0
        %1406 = vmatpush1.msra.mxu0 %v1350
        %1407 = vmatprep.subr.mxu0 0.0
        %1408 = vmatpush1.msra.mxu0 %v1351
        %1409 = vmatprep.subr.mxu0 0.0
        %1410 = vmatpush1.msra.mxu0 0.0
        %1411 = vmatprep.subr.mxu0 0.0
        %1412 = vmatpush1.msra.mxu0 0.0
        %1413 = vmatprep.subr.mxu0 0.0
        %1414 = vmatpush1.msra.mxu0 0.0
        %1415 = vmatprep.subr.mxu0 0.0
        %1416 = vmatpush1.msra.mxu0 0.0
        %1417 = vmatprep.subr.mxu0 0.0
        %1418 = vmatpush1.msra.mxu0 0.0
        %1419 = vmatprep.subr.mxu0 0.0
        %1420 = vmatpush1.msra.mxu0 0.0
        %1421 = vmatprep.subr.mxu0 0.0
        %1422 = vmatpush1.msra.mxu0 0.0
        %1423 = vmatprep.subr.mxu0 0.0
        %1424 = vmatpush1.msra.mxu0 0.0
        %1425 = vmatprep.subr.mxu0 0.0
        %1426 = vmatpush1.msra.mxu0 0.0
        %1427 = vmatprep.subr.mxu0 0.0
        %1428 = vmatpush1.msra.mxu0 0.0
        %1429 = vmatprep.subr.mxu0 0.0
        %1430 = vmatpush1.msra.mxu0 0.0
        %1431 = vmatprep.subr.mxu0 0.0
        %1432 = vmatpush1.msra.mxu0 0.0
        %1433 = vmatprep.subr.mxu0 0.0
        %1434 = vmatpush1.msra.mxu0 0.0
        %1435 = vmatprep.subr.mxu0 0.0
        %1436 = vmatpush1.msra.mxu0 0.0
        %1437 = vmatprep.subr.mxu0 0.0
        %1438 = vmatpush1.msra.mxu0 0.0
        %1439 = vmatprep.subr.mxu0 0.0
        %1440 = vmatpush1.msra.mxu0 0.0
        %1441 = vmatprep.subr.mxu0 0.0
        %1442 = vmatpush1.msra.mxu0 0.0
        %1443 = vmatprep.subr.mxu0 0.0
        %1444 = vmatpush1.msra.mxu0 0.0
        %1445 = vmatprep.subr.mxu0 0.0
        %1446 = vmatpush1.msra.mxu0 0.0
        %1447 = vmatprep.subr.mxu0 0.0
        %1448 = vmatpush1.msra.mxu0 0.0
        %1449 = vmatprep.mubr.f32.mxu0 0.0
        %1450 = vmatmul.mubr.f32.gmra.mrb[0].mxu0 %v1353
        %v1451 = vpop.f32.mrb[0].mxu0
        %v1452 = vadd.f32 0.0, %v1451
        %v1453 = vpop.f32.mrb[0].mxu0
        %1454 = vmatprep.mubr.f32.mxu0 0.0
        %1455 = vmatmul.mubr.f32.gmra.mrb[0].mxu0 %v1355
        %v1456 = vpop.f32.mrb[0].mxu0
        %v1457 = vadd.f32 0.0, %v1456
        %v1458 = vpop.f32.mrb[0].mxu0
        %1459 = vmatprep.mubr.f32.mxu0 0.0
        %1460 = vmatmul.mubr.f32.gmra.mrb[0].mxu0 %v1357
        %v1461 = vpop.f32.mrb[0].mxu0
        %v1462 = vadd.f32 0.0, %v1461
        %v1463 = vpop.f32.mrb[0].mxu0
        %1464 = vmatprep.mubr.f32.mxu0 0.0
        %1465 = vmatmul.mubr.f32.gmra.mrb[0].mxu0 %v1359
        %v1466 = vpop.f32.mrb[0].mxu0
        %v1467 = vadd.f32 0.0, %v1466
        %v1468 = vpop.f32.mrb[0].mxu0
        %1469 = vmatprep.mubr.f32.mxu0 0.0
        %1470 = vmatmul.mubr.f32.gmra.mrb[0].mxu0 %v1361
        %v1471 = vpop.f32.mrb[0].mxu0
        %v1472 = vadd.f32 0.0, %v1471
        %v1473 = vpop.f32.mrb[0].mxu0
        %1474 = vmatprep.mubr.f32.mxu0 0.0
        %1475 = vmatmul.mubr.f32.gmra.mrb[0].mxu0 %v1363
        %v1476 = vpop.f32.mrb[0].mxu0
        %v1477 = vadd.f32 0.0, %v1476
        %v1478 = vpop.f32.mrb[0].mxu0
        %1479 = vmatprep.mubr.f32.mxu0 0.0
        %1480 = vmatmul.mubr.f32.gmra.mrb[0].mxu0 %v1365
        %v1481 = vpop.f32.mrb[0].mxu0
        %v1482 = vadd.f32 0.0, %v1481
        %v1483 = vpop.f32.mrb[0].mxu0
        %1484 = vmatprep.mubr.f32.mxu0 0.0
        %1485 = vmatmul.mubr.f32.gmra.mrb[0].mxu0 %v1367
        %v1486 = vpop.f32.mrb[0].mxu0
        %v1487 = vadd.f32 0.0, %v1486
        %v1488 = vpop.f32.mrb[0].mxu0
        %1489 = vmatprep.mubr.f32.mxu0 0.0
        %1490 = vmatmul.mubr.f32.gmra.mrb[0].mxu0 %v1369
        %v1491 = vpop.f32.mrb[0].mxu0
        %v1492 = vadd.f32 0.0, %v1491
        %v1493 = vpop.f32.mrb[0].mxu0
        %1494 = vmatprep.mubr.f32.mxu0 0.0
        %1495 = vmatmul.mubr.f32.gmra.mrb[0].mxu0 %v1371
        %v1496 = vpop.f32.mrb[0].mxu0
        %v1497 = vadd.f32 0.0, %v1496
        %v1498 = vpop.f32.mrb[0].mxu0
        %1499 = vmatprep.mubr.f32.mxu0 0.0
        %1500 = vmatmul.mubr.f32.gmra.mrb[0].mxu0 %v1373
        %v1501 = vpop.f32.mrb[0].mxu0
        %v1502 = vadd.f32 0.0, %v1501
        %v1503 = vpop.f32.mrb[0].mxu0
        %1504 = vmatprep.mubr.f32.mxu0 0.0
        %1505 = vmatmul.mubr.f32.gmra.mrb[0].mxu0 %v1375
        %v1506 = vpop.f32.mrb[0].mxu0
        %v1507 = vadd.f32 0.0, %v1506
        %v1508 = vpop.f32.mrb[0].mxu0
        %1509 = vmatprep.mubr.f32.mxu0 0.0
        %1510 = vmatmul.mubr.f32.gmra.mrb[0].mxu0 %v1377
        %v1511 = vpop.f32.mrb[0].mxu0
        %v1512 = vadd.f32 0.0, %v1511
        %v1513 = vpop.f32.mrb[0].mxu0
        %1514 = vmatprep.mubr.f32.mxu0 0.0
        %1515 = vmatmul.mubr.f32.gmra.mrb[0].mxu0 %v1379
        %v1516 = vpop.f32.mrb[0].mxu0
        %v1517 = vadd.f32 0.0, %v1516
        %v1518 = vpop.f32.mrb[0].mxu0
        %1519 = vmatprep.mubr.f32.mxu0 0.0
        %1520 = vmatmul.mubr.f32.gmra.mrb[0].mxu0 %v1381
        %v1521 = vpop.f32.mrb[0].mxu0
        %v1522 = vadd.f32 0.0, %v1521
        %v1523 = vpop.f32.mrb[0].mxu0
        %1524 = vmatprep.mubr.f32.mxu0 0.0
        %1525 = vmatmul.mubr.f32.gmra.mrb[0].mxu0 %v1383
        %v1526 = vpop.f32.mrb[0].mxu0
        %v1527 = vadd.f32 0.0, %v1526
        %v1528 = vpop.f32.mrb[0].mxu0
        %1529 = vdwg.mxu0
        %v1530 = vsel %vm1352, %v1289, 0
        %v1532 = vsel %vm1352, %v1291, 0
        %v1534 = vsel %vm1352, %v1294, 0
        %v1536 = vsel %vm1352, %v1296, 0
        %v1538 = vsel %vm1352, %v1299, 0
        %v1540 = vsel %vm1352, %v1301, 0
        %v1542 = vsel %vm1352, %v1304, 0
        %v1544 = vsel %vm1352, %v1306, 0
        %v1546 = vsel %vm1352, %v1309, 0
        %v1548 = vsel %vm1352, %v1311, 0
        %v1550 = vsel %vm1352, %v1314, 0
        %v1552 = vsel %vm1352, %v1316, 0
        %v1554 = vsel %vm1352, %v1319, 0
        %v1556 = vsel %vm1352, %v1321, 0
        %v1558 = vsel %vm1352, %v1324, 0
        %v1560 = vsel %vm1352, %v1326, 0
        %1562 = vmatprep.subr.mxu0 0.0
        %1563 = vmatpush1.msra.mxu0 %v1327
        %1564 = vmatprep.subr.mxu0 0.0
        %1565 = vmatpush1.msra.mxu0 %v1328
        %1566 = vmatprep.subr.mxu0 0.0
        %1567 = vmatpush1.msra.mxu0 %v1329
        %1568 = vmatprep.subr.mxu0 0.0
        %1569 = vmatpush1.msra.mxu0 %v1330
        %1570 = vmatprep.subr.mxu0 0.0
        %1571 = vmatpush1.msra.mxu0 %v1331
        %1572 = vmatprep.subr.mxu0 0.0
        %1573 = vmatpush1.msra.mxu0 %v1332
        %1574 = vmatprep.subr.mxu0 0.0
        %1575 = vmatpush1.msra.mxu0 %v1333
        %1576 = vmatprep.subr.mxu0 0.0
        %1577 = vmatpush1.msra.mxu0 %v1334
        %1578 = vmatprep.subr.mxu0 0.0
        %1579 = vmatpush1.msra.mxu0 %v1335
        %1580 = vmatprep.subr.mxu0 0.0
        %1581 = vmatpush1.msra.mxu0 %v1336
        %1582 = vmatprep.subr.mxu0 0.0
        %1583 = vmatpush1.msra.mxu0 %v1337
        %1584 = vmatprep.subr.mxu0 0.0
        %1585 = vmatpush1.msra.mxu0 %v1338
        %1586 = vmatprep.subr.mxu0 0.0
        %1587 = vmatpush1.msra.mxu0 0.0
        %1588 = vmatprep.subr.mxu0 0.0
        %1589 = vmatpush1.msra.mxu0 0.0
        %1590 = vmatprep.subr.mxu0 0.0
        %1591 = vmatpush1.msra.mxu0 0.0
        %1592 = vmatprep.subr.mxu0 0.0
        %1593 = vmatpush1.msra.mxu0 0.0
        %1594 = vmatprep.subr.mxu0 0.0
        %1595 = vmatpush1.msra.mxu0 0.0
        %1596 = vmatprep.subr.mxu0 0.0
        %1597 = vmatpush1.msra.mxu0 0.0
        %1598 = vmatprep.subr.mxu0 0.0
        %1599 = vmatpush1.msra.mxu0 0.0
        %1600 = vmatprep.subr.mxu0 0.0
        %1601 = vmatpush1.msra.mxu0 0.0
        %1602 = vmatprep.subr.mxu0 0.0
        %1603 = vmatpush1.msra.mxu0 0.0
        %1604 = vmatprep.subr.mxu0 0.0
        %1605 = vmatpush1.msra.mxu0 0.0
        %1606 = vmatprep.subr.mxu0 0.0
        %1607 = vmatpush1.msra.mxu0 0.0
        %1608 = vmatprep.subr.mxu0 0.0
        %1609 = vmatpush1.msra.mxu0 0.0
        %1610 = vmatprep.subr.mxu0 0.0
        %1611 = vmatpush1.msra.mxu0 0.0
        %1612 = vmatprep.subr.mxu0 0.0
        %1613 = vmatpush1.msra.mxu0 0.0
        %1614 = vmatprep.subr.mxu0 0.0
        %1615 = vmatpush1.msra.mxu0 0.0
        %1616 = vmatprep.subr.mxu0 0.0
        %1617 = vmatpush1.msra.mxu0 0.0
        %1618 = vmatprep.subr.mxu0 0.0
        %1619 = vmatpush1.msra.mxu0 0.0
        %1620 = vmatprep.subr.mxu0 0.0
        %1621 = vmatpush1.msra.mxu0 0.0
        %1622 = vmatprep.subr.mxu0 0.0
        %1623 = vmatpush1.msra.mxu0 0.0
        %1624 = vmatprep.subr.mxu0 0.0
        %1625 = vmatpush1.msra.mxu0 0.0
        %1626 = vmatprep.mubr.f32.mxu0 0.0
        %1627 = vmatmul.mubr.f32.gmra.mrb[0].mxu0 %v1530
        %v1628 = vpop.f32.mrb[0].mxu0
        %v1629 = vadd.f32 %v1452, %v1628
        %v1630 = vpop.f32.mrb[0].mxu0
        %1631 = vmatprep.mubr.f32.mxu0 0.0
        %1632 = vmatmul.mubr.f32.gmra.mrb[0].mxu0 %v1532
        %v1633 = vpop.f32.mrb[0].mxu0
        %v1634 = vadd.f32 %v1457, %v1633
        %v1635 = vpop.f32.mrb[0].mxu0
        %1636 = vmatprep.mubr.f32.mxu0 0.0
        %1637 = vmatmul.mubr.f32.gmra.mrb[0].mxu0 %v1534
        %v1638 = vpop.f32.mrb[0].mxu0
        %v1639 = vadd.f32 %v1462, %v1638
        %v1640 = vpop.f32.mrb[0].mxu0
        %1641 = vmatprep.mubr.f32.mxu0 0.0
        %1642 = vmatmul.mubr.f32.gmra.mrb[0].mxu0 %v1536
        %v1643 = vpop.f32.mrb[0].mxu0
        %v1644 = vadd.f32 %v1467, %v1643
        %v1645 = vpop.f32.mrb[0].mxu0
        %1646 = vmatprep.mubr.f32.mxu0 0.0
        %1647 = vmatmul.mubr.f32.gmra.mrb[0].mxu0 %v1538
        %v1648 = vpop.f32.mrb[0].mxu0
        %v1649 = vadd.f32 %v1472, %v1648
        %v1650 = vpop.f32.mrb[0].mxu0
        %1651 = vmatprep.mubr.f32.mxu0 0.0
        %1652 = vmatmul.mubr.f32.gmra.mrb[0].mxu0 %v1540
        %v1653 = vpop.f32.mrb[0].mxu0
        %v1654 = vadd.f32 %v1477, %v1653
        %v1655 = vpop.f32.mrb[0].mxu0
        %1656 = vmatprep.mubr.f32.mxu0 0.0
        %1657 = vmatmul.mubr.f32.gmra.mrb[0].mxu0 %v1542
        %v1658 = vpop.f32.mrb[0].mxu0
        %v1659 = vadd.f32 %v1482, %v1658
        %v1660 = vpop.f32.mrb[0].mxu0
        %1661 = vmatprep.mubr.f32.mxu0 0.0
        %1662 = vmatmul.mubr.f32.gmra.mrb[0].mxu0 %v1544
        %v1663 = vpop.f32.mrb[0].mxu0
        %v1664 = vadd.f32 %v1487, %v1663
        %v1665 = vpop.f32.mrb[0].mxu0
        %1666 = vmatprep.mubr.f32.mxu0 0.0
        %1667 = vmatmul.mubr.f32.gmra.mrb[0].mxu0 %v1546
        %v1668 = vpop.f32.mrb[0].mxu0
        %v1669 = vadd.f32 %v1492, %v1668
        %v1670 = vpop.f32.mrb[0].mxu0
        %1671 = vmatprep.mubr.f32.mxu0 0.0
        %1672 = vmatmul.mubr.f32.gmra.mrb[0].mxu0 %v1548
        %v1673 = vpop.f32.mrb[0].mxu0
        %v1674 = vadd.f32 %v1497, %v1673
        %v1675 = vpop.f32.mrb[0].mxu0
        %1676 = vmatprep.mubr.f32.mxu0 0.0
        %1677 = vmatmul.mubr.f32.gmra.mrb[0].mxu0 %v1550
        %v1678 = vpop.f32.mrb[0].mxu0
        %v1679 = vadd.f32 %v1502, %v1678
        %v1680 = vpop.f32.mrb[0].mxu0
        %1681 = vmatprep.mubr.f32.mxu0 0.0
        %1682 = vmatmul.mubr.f32.gmra.mrb[0].mxu0 %v1552
        %v1683 = vpop.f32.mrb[0].mxu0
        %v1684 = vadd.f32 %v1507, %v1683
        %v1685 = vpop.f32.mrb[0].mxu0
        %1686 = vmatprep.mubr.f32.mxu0 0.0
        %1687 = vmatmul.mubr.f32.gmra.mrb[0].mxu0 %v1554
        %v1688 = vpop.f32.mrb[0].mxu0
        %v1689 = vadd.f32 %v1512, %v1688
        %v1690 = vpop.f32.mrb[0].mxu0
        %1691 = vmatprep.mubr.f32.mxu0 0.0
        %1692 = vmatmul.mubr.f32.gmra.mrb[0].mxu0 %v1556
        %v1693 = vpop.f32.mrb[0].mxu0
        %v1694 = vadd.f32 %v1517, %v1693
        %v1695 = vpop.f32.mrb[0].mxu0
        %1696 = vmatprep.mubr.f32.mxu0 0.0
        %1697 = vmatmul.mubr.f32.gmra.mrb[0].mxu0 %v1558
        %v1698 = vpop.f32.mrb[0].mxu0
        %v1699 = vadd.f32 %v1522, %v1698
        %v1700 = vpop.f32.mrb[0].mxu0
        %1701 = vmatprep.mubr.f32.mxu0 0.0
        %1702 = vmatmul.mubr.f32.gmra.mrb[0].mxu0 %v1560
        %v1703 = vpop.f32.mrb[0].mxu0
        %v1704 = vadd.f32 %v1527, %v1703
        %v1705 = vpop.f32.mrb[0].mxu0
        %1706 = vdwg.mxu0
        %vm1715 = vcmask 1046528
        %v1716 = vrot.slane %v1231, 1
        %v1717 = vrot.slane %v1232, 1
        %v1718 = vsel %vm1715, %v1716, %v1717
        %v1719 = vrot.slane %v1233, 1
        %v1720 = vsel %vm1715, %v1717, %v1719
        %v1721 = vrot.slane %v1235, 1
        %v1722 = vrot.slane %v1236, 1
        %v1723 = vsel %vm1715, %v1721, %v1722
        %v1724 = vrot.slane %v1237, 1
        %v1725 = vsel %vm1715, %v1722, %v1724
        %v1726 = vrot.slane %v1239, 1
        %v1727 = vrot.slane %v1240, 1
        %v1728 = vsel %vm1715, %v1726, %v1727
        %v1729 = vrot.slane %v1241, 1
        %v1730 = vsel %vm1715, %v1727, %v1729
        %v1731 = vrot.slane %v1243, 1
        %v1732 = vrot.slane %v1244, 1
        %v1733 = vsel %vm1715, %v1731, %v1732
        %v1734 = vrot.slane %v1245, 1
        %v1735 = vsel %vm1715, %v1732, %v1734
        %v1736 = vrot.slane %v1247, 1
        %v1737 = vrot.slane %v1248, 1
        %v1738 = vsel %vm1715, %v1736, %v1737
        %v1739 = vrot.slane %v1249, 1
        %v1740 = vsel %vm1715, %v1737, %v1739
        %v1741 = vrot.slane %v1251, 1
        %v1742 = vrot.slane %v1252, 1
        %v1743 = vsel %vm1715, %v1741, %v1742
        %v1744 = vrot.slane %v1253, 1
        %v1745 = vsel %vm1715, %v1742, %v1744
        %v1746 = vrot.slane %v1255, 1
        %v1747 = vrot.slane %v1256, 1
        %v1748 = vsel %vm1715, %v1746, %v1747
        %v1749 = vrot.slane %v1257, 1
        %v1750 = vsel %vm1715, %v1747, %v1749
        %v1751 = vrot.slane %v1259, 1
        %v1752 = vrot.slane %v1260, 1
        %v1753 = vsel %vm1715, %v1751, %v1752
        %v1754 = vrot.slane %v1261, 1
        %v1755 = vsel %vm1715, %v1752, %v1754
        %s1756 = scalar_lea.vmem %s4, 192
        %v1757 = vld [vmem:[%s1756] sm:$0xff]
        %v1758 = vld [vmem:[%s1756 + $0x8] sm:$0xff]
        %v1759 = vld [vmem:[%s1756 + $0x10] sm:$0xff]
        %v1760 = vld [vmem:[%s1756 + $0x18] sm:$0xff]
        %v1761 = vld [vmem:[%s1756 + $0x20] sm:$0xff]
        %v1762 = vld [vmem:[%s1756 + $0x28] sm:$0xff]
        %v1763 = vld [vmem:[%s1756 + $0x30] sm:$0xff]
        %v1764 = vld [vmem:[%s1756 + $0x38] sm:$0xff]
        %v1765 = vld [vmem:[%s1756 + $0x40] sm:$0xff]
        %v1766 = vld [vmem:[%s1756 + $0x48] sm:$0xff]
        %v1767 = vld [vmem:[%s1756 + $0x50] sm:$0xff]
        %v1768 = vld [vmem:[%s1756 + $0x58] sm:$0xff]
        %v1769 = vsel %vm1352, %v1718, 0
        %v1771 = vsel %vm1352, %v1720, 0
        %v1773 = vsel %vm1352, %v1723, 0
        %v1775 = vsel %vm1352, %v1725, 0
        %v1777 = vsel %vm1352, %v1728, 0
        %v1779 = vsel %vm1352, %v1730, 0
        %v1781 = vsel %vm1352, %v1733, 0
        %v1783 = vsel %vm1352, %v1735, 0
        %v1785 = vsel %vm1352, %v1738, 0
        %v1787 = vsel %vm1352, %v1740, 0
        %v1789 = vsel %vm1352, %v1743, 0
        %v1791 = vsel %vm1352, %v1745, 0
        %v1793 = vsel %vm1352, %v1748, 0
        %v1795 = vsel %vm1352, %v1750, 0
        %v1797 = vsel %vm1352, %v1753, 0
        %v1799 = vsel %vm1352, %v1755, 0
        %1801 = vmatprep.subr.mxu0 0.0
        %1802 = vmatpush1.msra.mxu0 %v1757
        %1803 = vmatprep.subr.mxu0 0.0
        %1804 = vmatpush1.msra.mxu0 %v1758
        %1805 = vmatprep.subr.mxu0 0.0
        %1806 = vmatpush1.msra.mxu0 %v1759
        %1807 = vmatprep.subr.mxu0 0.0
        %1808 = vmatpush1.msra.mxu0 %v1760
        %1809 = vmatprep.subr.mxu0 0.0
        %1810 = vmatpush1.msra.mxu0 %v1761
        %1811 = vmatprep.subr.mxu0 0.0
        %1812 = vmatpush1.msra.mxu0 %v1762
        %1813 = vmatprep.subr.mxu0 0.0
        %1814 = vmatpush1.msra.mxu0 %v1763
        %1815 = vmatprep.subr.mxu0 0.0
        %1816 = vmatpush1.msra.mxu0 %v1764
        %1817 = vmatprep.subr.mxu0 0.0
        %1818 = vmatpush1.msra.mxu0 %v1765
        %1819 = vmatprep.subr.mxu0 0.0
        %1820 = vmatpush1.msra.mxu0 %v1766
        %1821 = vmatprep.subr.mxu0 0.0
        %1822 = vmatpush1.msra.mxu0 %v1767
        %1823 = vmatprep.subr.mxu0 0.0
        %1824 = vmatpush1.msra.mxu0 %v1768
        %1825 = vmatprep.subr.mxu0 0.0
        %1826 = vmatpush1.msra.mxu0 0.0
        %1827 = vmatprep.subr.mxu0 0.0
        %1828 = vmatpush1.msra.mxu0 0.0
        %1829 = vmatprep.subr.mxu0 0.0
        %1830 = vmatpush1.msra.mxu0 0.0
        %1831 = vmatprep.subr.mxu0 0.0
        %1832 = vmatpush1.msra.mxu0 0.0
        %1833 = vmatprep.subr.mxu0 0.0
        %1834 = vmatpush1.msra.mxu0 0.0
        %1835 = vmatprep.subr.mxu0 0.0
        %1836 = vmatpush1.msra.mxu0 0.0
        %1837 = vmatprep.subr.mxu0 0.0
        %1838 = vmatpush1.msra.mxu0 0.0
        %1839 = vmatprep.subr.mxu0 0.0
        %1840 = vmatpush1.msra.mxu0 0.0
        %1841 = vmatprep.subr.mxu0 0.0
        %1842 = vmatpush1.msra.mxu0 0.0
        %1843 = vmatprep.subr.mxu0 0.0
        %1844 = vmatpush1.msra.mxu0 0.0
        %1845 = vmatprep.subr.mxu0 0.0
        %1846 = vmatpush1.msra.mxu0 0.0
        %1847 = vmatprep.subr.mxu0 0.0
        %1848 = vmatpush1.msra.mxu0 0.0
        %1849 = vmatprep.subr.mxu0 0.0
        %1850 = vmatpush1.msra.mxu0 0.0
        %1851 = vmatprep.subr.mxu0 0.0
        %1852 = vmatpush1.msra.mxu0 0.0
        %1853 = vmatprep.subr.mxu0 0.0
        %1854 = vmatpush1.msra.mxu0 0.0
        %1855 = vmatprep.subr.mxu0 0.0
        %1856 = vmatpush1.msra.mxu0 0.0
        %1857 = vmatprep.subr.mxu0 0.0
        %1858 = vmatpush1.msra.mxu0 0.0
        %1859 = vmatprep.subr.mxu0 0.0
        %1860 = vmatpush1.msra.mxu0 0.0
        %1861 = vmatprep.subr.mxu0 0.0
        %1862 = vmatpush1.msra.mxu0 0.0
        %1863 = vmatprep.subr.mxu0 0.0
        %1864 = vmatpush1.msra.mxu0 0.0
        %1865 = vmatprep.mubr.f32.mxu0 0.0
        %1866 = vmatmul.mubr.f32.gmra.mrb[0].mxu0 %v1769
        %v1867 = vpop.f32.mrb[0].mxu0
        %v1868 = vadd.f32 0.0, %v1867
        %v1869 = vpop.f32.mrb[0].mxu0
        %1870 = vmatprep.mubr.f32.mxu0 0.0
        %1871 = vmatmul.mubr.f32.gmra.mrb[0].mxu0 %v1771
        %v1872 = vpop.f32.mrb[0].mxu0
        %v1873 = vadd.f32 0.0, %v1872
        %v1874 = vpop.f32.mrb[0].mxu0
        %1875 = vmatprep.mubr.f32.mxu0 0.0
        %1876 = vmatmul.mubr.f32.gmra.mrb[0].mxu0 %v1773
        %v1877 = vpop.f32.mrb[0].mxu0
        %v1878 = vadd.f32 0.0, %v1877
        %v1879 = vpop.f32.mrb[0].mxu0
        %1880 = vmatprep.mubr.f32.mxu0 0.0
        %1881 = vmatmul.mubr.f32.gmra.mrb[0].mxu0 %v1775
        %v1882 = vpop.f32.mrb[0].mxu0
        %v1883 = vadd.f32 0.0, %v1882
        %v1884 = vpop.f32.mrb[0].mxu0
        %1885 = vmatprep.mubr.f32.mxu0 0.0
        %1886 = vmatmul.mubr.f32.gmra.mrb[0].mxu0 %v1777
        %v1887 = vpop.f32.mrb[0].mxu0
        %v1888 = vadd.f32 0.0, %v1887
        %v1889 = vpop.f32.mrb[0].mxu0
        %1890 = vmatprep.mubr.f32.mxu0 0.0
        %1891 = vmatmul.mubr.f32.gmra.mrb[0].mxu0 %v1779
        %v1892 = vpop.f32.mrb[0].mxu0
        %v1893 = vadd.f32 0.0, %v1892
        %v1894 = vpop.f32.mrb[0].mxu0
        %1895 = vmatprep.mubr.f32.mxu0 0.0
        %1896 = vmatmul.mubr.f32.gmra.mrb[0].mxu0 %v1781
        %v1897 = vpop.f32.mrb[0].mxu0
        %v1898 = vadd.f32 0.0, %v1897
        %v1899 = vpop.f32.mrb[0].mxu0
        %1900 = vmatprep.mubr.f32.mxu0 0.0
        %1901 = vmatmul.mubr.f32.gmra.mrb[0].mxu0 %v1783
        %v1902 = vpop.f32.mrb[0].mxu0
        %v1903 = vadd.f32 0.0, %v1902
        %v1904 = vpop.f32.mrb[0].mxu0
        %1905 = vmatprep.mubr.f32.mxu0 0.0
        %1906 = vmatmul.mubr.f32.gmra.mrb[0].mxu0 %v1785
        %v1907 = vpop.f32.mrb[0].mxu0
        %v1908 = vadd.f32 0.0, %v1907
        %v1909 = vpop.f32.mrb[0].mxu0
        %1910 = vmatprep.mubr.f32.mxu0 0.0
        %1911 = vmatmul.mubr.f32.gmra.mrb[0].mxu0 %v1787
        %v1912 = vpop.f32.mrb[0].mxu0
        %v1913 = vadd.f32 0.0, %v1912
        %v1914 = vpop.f32.mrb[0].mxu0
        %1915 = vmatprep.mubr.f32.mxu0 0.0
        %1916 = vmatmul.mubr.f32.gmra.mrb[0].mxu0 %v1789
        %v1917 = vpop.f32.mrb[0].mxu0
        %v1918 = vadd.f32 0.0, %v1917
        %v1919 = vpop.f32.mrb[0].mxu0
        %1920 = vmatprep.mubr.f32.mxu0 0.0
        %1921 = vmatmul.mubr.f32.gmra.mrb[0].mxu0 %v1791
        %v1922 = vpop.f32.mrb[0].mxu0
        %v1923 = vadd.f32 0.0, %v1922
        %v1924 = vpop.f32.mrb[0].mxu0
        %1925 = vmatprep.mubr.f32.mxu0 0.0
        %1926 = vmatmul.mubr.f32.gmra.mrb[0].mxu0 %v1793
        %v1927 = vpop.f32.mrb[0].mxu0
        %v1928 = vadd.f32 0.0, %v1927
        %v1929 = vpop.f32.mrb[0].mxu0
        %1930 = vmatprep.mubr.f32.mxu0 0.0
        %1931 = vmatmul.mubr.f32.gmra.mrb[0].mxu0 %v1795
        %v1932 = vpop.f32.mrb[0].mxu0
        %v1933 = vadd.f32 0.0, %v1932
        %v1934 = vpop.f32.mrb[0].mxu0
        %1935 = vmatprep.mubr.f32.mxu0 0.0
        %1936 = vmatmul.mubr.f32.gmra.mrb[0].mxu0 %v1797
        %v1937 = vpop.f32.mrb[0].mxu0
        %v1938 = vadd.f32 0.0, %v1937
        %v1939 = vpop.f32.mrb[0].mxu0
        %1940 = vmatprep.mubr.f32.mxu0 0.0
        %1941 = vmatmul.mubr.f32.gmra.mrb[0].mxu0 %v1799
        %v1942 = vpop.f32.mrb[0].mxu0
        %v1943 = vadd.f32 0.0, %v1942
        %v1944 = vpop.f32.mrb[0].mxu0
        %1945 = vdwg.mxu0
        %v1946 = vadd.f32 %v1629, %v1868
        %v1947 = vadd.f32 %v1634, %v1873
        %v1948 = vadd.f32 %v1639, %v1878
        %v1949 = vadd.f32 %v1644, %v1883
        %v1950 = vadd.f32 %v1649, %v1888
        %v1951 = vadd.f32 %v1654, %v1893
        %v1952 = vadd.f32 %v1659, %v1898
        %v1953 = vadd.f32 %v1664, %v1903
        %v1954 = vadd.f32 %v1669, %v1908
        %v1955 = vadd.f32 %v1674, %v1913
        %v1956 = vadd.f32 %v1679, %v1918
        %v1957 = vadd.f32 %v1684, %v1923
        %v1958 = vadd.f32 %v1689, %v1928
        %v1959 = vadd.f32 %v1694, %v1933
        %v1960 = vadd.f32 %v1699, %v1938
        %v1961 = vadd.f32 %v1704, %v1943
        %v1962 = vld [vmem:[%s5] sm:$0x1]
        %v1964 = vlaneseq
        %v1965 = vshrl.u32 %v1964, 7
        %v1966 = vsub.s32 0, %v1965
        %v1967 = vrot.slane %v1962, %v1966
        %v1969 = vmul.f32 %v1946, %v1967
        %v1970 = vmul.f32 %v1947, %v1967
        %v1971 = vmul.f32 %v1948, %v1967
        %v1972 = vmul.f32 %v1949, %v1967
        %v1973 = vmul.f32 %v1950, %v1967
        %v1974 = vmul.f32 %v1951, %v1967
        %v1975 = vmul.f32 %v1952, %v1967
        %v1976 = vmul.f32 %v1953, %v1967
        %v1977 = vmul.f32 %v1954, %v1967
        %v1978 = vmul.f32 %v1955, %v1967
        %v1979 = vmul.f32 %v1956, %v1967
        %v1980 = vmul.f32 %v1957, %v1967
        %v1981 = vmul.f32 %v1958, %v1967
        %v1982 = vmul.f32 %v1959, %v1967
        %v1983 = vmul.f32 %v1960, %v1967
        %v1984 = vmul.f32 %v1961, %v1967
        %v1985 = vld [vmem:[%s6] sm:$0x1]
        %v1987 = vlaneseq
        %v1988 = vshrl.u32 %v1987, 7
        %v1989 = vsub.s32 0, %v1988
        %v1990 = vrot.slane %v1985, %v1989
        %v1992 = vadd.f32 %v1969, %v1990
        %v1993 = vadd.f32 %v1970, %v1990
        %v1994 = vadd.f32 %v1971, %v1990
        %v1995 = vadd.f32 %v1972, %v1990
        %v1996 = vadd.f32 %v1973, %v1990
        %v1997 = vadd.f32 %v1974, %v1990
        %v1998 = vadd.f32 %v1975, %v1990
        %v1999 = vadd.f32 %v1976, %v1990
        %v2000 = vadd.f32 %v1977, %v1990
        %v2001 = vadd.f32 %v1978, %v1990
        %v2002 = vadd.f32 %v1979, %v1990
        %v2003 = vadd.f32 %v1980, %v1990
        %v2004 = vadd.f32 %v1981, %v1990
        %v2005 = vadd.f32 %v1982, %v1990
        %v2006 = vadd.f32 %v1983, %v1990
        %v2007 = vadd.f32 %v1984, %v1990
        %v2008 = vmax.f32 %v1992, 0.0
        %v2009 = vmax.f32 %v1993, 0.0
        %v2010 = vmax.f32 %v1994, 0.0
        %v2011 = vmax.f32 %v1995, 0.0
        %v2012 = vmax.f32 %v1996, 0.0
        %v2013 = vmax.f32 %v1997, 0.0
        %v2014 = vmax.f32 %v1998, 0.0
        %v2015 = vmax.f32 %v1999, 0.0
        %v2016 = vmax.f32 %v2000, 0.0
        %v2017 = vmax.f32 %v2001, 0.0
        %v2018 = vmax.f32 %v2002, 0.0
        %v2019 = vmax.f32 %v2003, 0.0
        %v2020 = vmax.f32 %v2004, 0.0
        %v2021 = vmax.f32 %v2005, 0.0
        %v2022 = vmax.f32 %v2006, 0.0
        %v2023 = vmax.f32 %v2007, 0.0
        %v2024 = vld [vmem:[%s7] sm:$0xff]
        %v2025 = vld [vmem:[%s7 + $0x8] sm:$0xff]
        %v2026 = vld [vmem:[%s7 + $0x10] sm:$0xff]
        %v2027 = vld [vmem:[%s7 + $0x18] sm:$0xff]
        %v2029 = vsel %vm1196, %v2008, 0
        %v2032 = vsel %vm1196, %v2009, 0
        %v2035 = vsel %vm1196, %v2010, 0
        %v2038 = vsel %vm1196, %v2011, 0
        %v2041 = vsel %vm1196, %v2012, 0
        %v2044 = vsel %vm1196, %v2013, 0
        %v2047 = vsel %vm1196, %v2014, 0
        %v2050 = vsel %vm1196, %v2015, 0
        %v2053 = vsel %vm1196, %v2016, 0
        %v2056 = vsel %vm1196, %v2017, 0
        %v2059 = vsel %vm1196, %v2018, 0
        %v2062 = vsel %vm1196, %v2019, 0
        %v2065 = vsel %vm1196, %v2020, 0
        %v2068 = vsel %vm1196, %v2021, 0
        %v2071 = vsel %vm1196, %v2022, 0
        %v2074 = vsel %vm1196, %v2023, 0
        %2076 = vmatprep.subr.mxu0 0.0
        %2077 = vmatpush1.msra.mxu0 %v2024
        %2078 = vmatprep.subr.mxu0 0.0
        %2079 = vmatpush1.msra.mxu0 %v2025
        %2080 = vmatprep.subr.mxu0 0.0
        %2081 = vmatpush1.msra.mxu0 %v2026
        %2082 = vmatprep.subr.mxu0 0.0
        %2083 = vmatpush1.msra.mxu0 %v2027
        %2084 = vmatprep.subr.mxu0 0.0
        %2085 = vmatpush1.msra.mxu0 0.0
        %2086 = vmatprep.subr.mxu0 0.0
        %2087 = vmatpush1.msra.mxu0 0.0
        %2088 = vmatprep.subr.mxu0 0.0
        %2089 = vmatpush1.msra.mxu0 0.0
        %2090 = vmatprep.subr.mxu0 0.0
        %2091 = vmatpush1.msra.mxu0 0.0
        %2092 = vmatprep.subr.mxu0 0.0
        %2093 = vmatpush1.msra.mxu0 0.0
        %2094 = vmatprep.subr.mxu0 0.0
        %2095 = vmatpush1.msra.mxu0 0.0
        %2096 = vmatprep.subr.mxu0 0.0
        %2097 = vmatpush1.msra.mxu0 0.0
        %2098 = vmatprep.subr.mxu0 0.0
        %2099 = vmatpush1.msra.mxu0 0.0
        %2100 = vmatprep.subr.mxu0 0.0
        %2101 = vmatpush1.msra.mxu0 0.0
        %2102 = vmatprep.subr.mxu0 0.0
        %2103 = vmatpush1.msra.mxu0 0.0
        %2104 = vmatprep.subr.mxu0 0.0
        %2105 = vmatpush1.msra.mxu0 0.0
        %2106 = vmatprep.subr.mxu0 0.0
        %2107 = vmatpush1.msra.mxu0 0.0
        %2108 = vmatprep.subr.mxu0 0.0
        %2109 = vmatpush1.msra.mxu0 0.0
        %2110 = vmatprep.subr.mxu0 0.0
        %2111 = vmatpush1.msra.mxu0 0.0
        %2112 = vmatprep.subr.mxu0 0.0
        %2113 = vmatpush1.msra.mxu0 0.0
        %2114 = vmatprep.subr.mxu0 0.0
        %2115 = vmatpush1.msra.mxu0 0.0
        %2116 = vmatprep.subr.mxu0 0.0
        %2117 = vmatpush1.msra.mxu0 0.0
        %2118 = vmatprep.subr.mxu0 0.0
        %2119 = vmatpush1.msra.mxu0 0.0
        %2120 = vmatprep.subr.mxu0 0.0
        %2121 = vmatpush1.msra.mxu0 0.0
        %2122 = vmatprep.subr.mxu0 0.0
        %2123 = vmatpush1.msra.mxu0 0.0
        %2124 = vmatprep.subr.mxu0 0.0
        %2125 = vmatpush1.msra.mxu0 0.0
        %2126 = vmatprep.subr.mxu0 0.0
        %2127 = vmatpush1.msra.mxu0 0.0
        %2128 = vmatprep.subr.mxu0 0.0
        %2129 = vmatpush1.msra.mxu0 0.0
        %2130 = vmatprep.subr.mxu0 0.0
        %2131 = vmatpush1.msra.mxu0 0.0
        %2132 = vmatprep.subr.mxu0 0.0
        %2133 = vmatpush1.msra.mxu0 0.0
        %2134 = vmatprep.subr.mxu0 0.0
        %2135 = vmatpush1.msra.mxu0 0.0
        %2136 = vmatprep.subr.mxu0 0.0
        %2137 = vmatpush1.msra.mxu0 0.0
        %2138 = vmatprep.subr.mxu0 0.0
        %2139 = vmatpush1.msra.mxu0 0.0
        %2140 = vmatprep.mubr.f32.mxu0 0.0
        %2141 = vmatmul.mubr.f32.gmra.mrb[0].mxu0 %v2029
        %v2142 = vpop.f32.mrb[0].mxu0
        %v2143 = vadd.f32 0.0, %v2142
        %v2144 = vpop.f32.mrb[0].mxu0
        %2145 = vmatprep.mubr.f32.mxu0 0.0
        %2146 = vmatmul.mubr.f32.gmra.mrb[0].mxu0 %v2032
        %v2147 = vpop.f32.mrb[0].mxu0
        %v2148 = vadd.f32 0.0, %v2147
        %v2149 = vpop.f32.mrb[0].mxu0
        %2150 = vmatprep.mubr.f32.mxu0 0.0
        %2151 = vmatmul.mubr.f32.gmra.mrb[0].mxu0 %v2035
        %v2152 = vpop.f32.mrb[0].mxu0
        %v2153 = vadd.f32 0.0, %v2152
        %v2154 = vpop.f32.mrb[0].mxu0
        %2155 = vmatprep.mubr.f32.mxu0 0.0
        %2156 = vmatmul.mubr.f32.gmra.mrb[0].mxu0 %v2038
        %v2157 = vpop.f32.mrb[0].mxu0
        %v2158 = vadd.f32 0.0, %v2157
        %v2159 = vpop.f32.mrb[0].mxu0
        %2160 = vmatprep.mubr.f32.mxu0 0.0
        %2161 = vmatmul.mubr.f32.gmra.mrb[0].mxu0 %v2041
        %v2162 = vpop.f32.mrb[0].mxu0
        %v2163 = vadd.f32 0.0, %v2162
        %v2164 = vpop.f32.mrb[0].mxu0
        %2165 = vmatprep.mubr.f32.mxu0 0.0
        %2166 = vmatmul.mubr.f32.gmra.mrb[0].mxu0 %v2044
        %v2167 = vpop.f32.mrb[0].mxu0
        %v2168 = vadd.f32 0.0, %v2167
        %v2169 = vpop.f32.mrb[0].mxu0
        %2170 = vmatprep.mubr.f32.mxu0 0.0
        %2171 = vmatmul.mubr.f32.gmra.mrb[0].mxu0 %v2047
        %v2172 = vpop.f32.mrb[0].mxu0
        %v2173 = vadd.f32 0.0, %v2172
        %v2174 = vpop.f32.mrb[0].mxu0
        %2175 = vmatprep.mubr.f32.mxu0 0.0
        %2176 = vmatmul.mubr.f32.gmra.mrb[0].mxu0 %v2050
        %v2177 = vpop.f32.mrb[0].mxu0
        %v2178 = vadd.f32 0.0, %v2177
        %v2179 = vpop.f32.mrb[0].mxu0
        %2180 = vmatprep.mubr.f32.mxu0 0.0
        %2181 = vmatmul.mubr.f32.gmra.mrb[0].mxu0 %v2053
        %v2182 = vpop.f32.mrb[0].mxu0
        %v2183 = vadd.f32 0.0, %v2182
        %v2184 = vpop.f32.mrb[0].mxu0
        %2185 = vmatprep.mubr.f32.mxu0 0.0
        %2186 = vmatmul.mubr.f32.gmra.mrb[0].mxu0 %v2056
        %v2187 = vpop.f32.mrb[0].mxu0
        %v2188 = vadd.f32 0.0, %v2187
        %v2189 = vpop.f32.mrb[0].mxu0
        %2190 = vmatprep.mubr.f32.mxu0 0.0
        %2191 = vmatmul.mubr.f32.gmra.mrb[0].mxu0 %v2059
        %v2192 = vpop.f32.mrb[0].mxu0
        %v2193 = vadd.f32 0.0, %v2192
        %v2194 = vpop.f32.mrb[0].mxu0
        %2195 = vmatprep.mubr.f32.mxu0 0.0
        %2196 = vmatmul.mubr.f32.gmra.mrb[0].mxu0 %v2062
        %v2197 = vpop.f32.mrb[0].mxu0
        %v2198 = vadd.f32 0.0, %v2197
        %v2199 = vpop.f32.mrb[0].mxu0
        %2200 = vmatprep.mubr.f32.mxu0 0.0
        %2201 = vmatmul.mubr.f32.gmra.mrb[0].mxu0 %v2065
        %v2202 = vpop.f32.mrb[0].mxu0
        %v2203 = vadd.f32 0.0, %v2202
        %v2204 = vpop.f32.mrb[0].mxu0
        %2205 = vmatprep.mubr.f32.mxu0 0.0
        %2206 = vmatmul.mubr.f32.gmra.mrb[0].mxu0 %v2068
        %v2207 = vpop.f32.mrb[0].mxu0
        %v2208 = vadd.f32 0.0, %v2207
        %v2209 = vpop.f32.mrb[0].mxu0
        %2210 = vmatprep.mubr.f32.mxu0 0.0
        %2211 = vmatmul.mubr.f32.gmra.mrb[0].mxu0 %v2071
        %v2212 = vpop.f32.mrb[0].mxu0
        %v2213 = vadd.f32 0.0, %v2212
        %v2214 = vpop.f32.mrb[0].mxu0
        %2215 = vmatprep.mubr.f32.mxu0 0.0
        %2216 = vmatmul.mubr.f32.gmra.mrb[0].mxu0 %v2074
        %v2217 = vpop.f32.mrb[0].mxu0
        %v2218 = vadd.f32 0.0, %v2217
        %v2219 = vpop.f32.mrb[0].mxu0
        %2220 = vdwg.mxu0
        %s2221 = smul.u32 %s29, 128
        %s2222 = scalar_lea.vmem %s371, %s2221
        %v2223 = vld [vmem:[%s2222] sm:$0xff]
        %v2224 = vld [vmem:[%s2222 + $0x8] sm:$0xff]
        %v2225 = vld [vmem:[%s2222 + $0x10] sm:$0xff]
        %v2226 = vld [vmem:[%s2222 + $0x18] sm:$0xff]
        %v2227 = vld [vmem:[%s2222 + $0x20] sm:$0xff]
        %v2228 = vld [vmem:[%s2222 + $0x28] sm:$0xff]
        %v2229 = vld [vmem:[%s2222 + $0x30] sm:$0xff]
        %v2230 = vld [vmem:[%s2222 + $0x38] sm:$0xff]
        %v2231 = vld [vmem:[%s2222 + $0x40] sm:$0xff]
        %v2232 = vld [vmem:[%s2222 + $0x48] sm:$0xff]
        %v2233 = vld [vmem:[%s2222 + $0x50] sm:$0xff]
        %v2234 = vld [vmem:[%s2222 + $0x58] sm:$0xff]
        %v2235 = vld [vmem:[%s2222 + $0x60] sm:$0xff]
        %v2236 = vld [vmem:[%s2222 + $0x68] sm:$0xff]
        %v2237 = vld [vmem:[%s2222 + $0x70] sm:$0xff]
        %v2238 = vld [vmem:[%s2222 + $0x78] sm:$0xff]
        %v2239 = vld [vmem:[%s8] sm:$0x1]
        %v2241 = vlaneseq
        %v2242 = vshrl.u32 %v2241, 7
        %v2243 = vsub.s32 0, %v2242
        %v2244 = vrot.slane %v2239, %v2243
        %v2246 = vmul.f32 %v2143, %v2244
        %v2247 = vmul.f32 %v2148, %v2244
        %v2248 = vmul.f32 %v2153, %v2244
        %v2249 = vmul.f32 %v2158, %v2244
        %v2250 = vmul.f32 %v2163, %v2244
        %v2251 = vmul.f32 %v2168, %v2244
        %v2252 = vmul.f32 %v2173, %v2244
        %v2253 = vmul.f32 %v2178, %v2244
        %v2254 = vmul.f32 %v2183, %v2244
        %v2255 = vmul.f32 %v2188, %v2244
        %v2256 = vmul.f32 %v2193, %v2244
        %v2257 = vmul.f32 %v2198, %v2244
        %v2258 = vmul.f32 %v2203, %v2244
        %v2259 = vmul.f32 %v2208, %v2244
        %v2260 = vmul.f32 %v2213, %v2244
        %v2261 = vmul.f32 %v2218, %v2244
        %v2262 = vld [vmem:[%s9] sm:$0x1]
        %v2264 = vlaneseq
        %v2265 = vshrl.u32 %v2264, 7
        %v2266 = vsub.s32 0, %v2265
        %v2267 = vrot.slane %v2262, %v2266
        %v2269 = vadd.f32 %v2246, %v2267
        %v2270 = vadd.f32 %v2247, %v2267
        %v2271 = vadd.f32 %v2248, %v2267
        %v2272 = vadd.f32 %v2249, %v2267
        %v2273 = vadd.f32 %v2250, %v2267
        %v2274 = vadd.f32 %v2251, %v2267
        %v2275 = vadd.f32 %v2252, %v2267
        %v2276 = vadd.f32 %v2253, %v2267
        %v2277 = vadd.f32 %v2254, %v2267
        %v2278 = vadd.f32 %v2255, %v2267
        %v2279 = vadd.f32 %v2256, %v2267
        %v2280 = vadd.f32 %v2257, %v2267
        %v2281 = vadd.f32 %v2258, %v2267
        %v2282 = vadd.f32 %v2259, %v2267
        %v2283 = vadd.f32 %v2260, %v2267
        %v2284 = vadd.f32 %v2261, %v2267
        %v2285 = vadd.f32 %v2269, %v2223
        %v2286 = vadd.f32 %v2270, %v2224
        %v2287 = vadd.f32 %v2271, %v2225
        %v2288 = vadd.f32 %v2272, %v2226
        %v2289 = vadd.f32 %v2273, %v2227
        %v2290 = vadd.f32 %v2274, %v2228
        %v2291 = vadd.f32 %v2275, %v2229
        %v2292 = vadd.f32 %v2276, %v2230
        %v2293 = vadd.f32 %v2277, %v2231
        %v2294 = vadd.f32 %v2278, %v2232
        %v2295 = vadd.f32 %v2279, %v2233
        %v2296 = vadd.f32 %v2280, %v2234
        %v2297 = vadd.f32 %v2281, %v2235
        %v2298 = vadd.f32 %v2282, %v2236
        %v2299 = vadd.f32 %v2283, %v2237
        %v2300 = vadd.f32 %v2284, %v2238
        %v2301 = vmax.f32 %v2285, 0.0
        %v2302 = vmax.f32 %v2286, 0.0
        %v2303 = vmax.f32 %v2287, 0.0
        %v2304 = vmax.f32 %v2288, 0.0
        %v2305 = vmax.f32 %v2289, 0.0
        %v2306 = vmax.f32 %v2290, 0.0
        %v2307 = vmax.f32 %v2291, 0.0
        %v2308 = vmax.f32 %v2292, 0.0
        %v2309 = vmax.f32 %v2293, 0.0
        %v2310 = vmax.f32 %v2294, 0.0
        %v2311 = vmax.f32 %v2295, 0.0
        %v2312 = vmax.f32 %v2296, 0.0
        %v2313 = vmax.f32 %v2297, 0.0
        %v2314 = vmax.f32 %v2298, 0.0
        %v2315 = vmax.f32 %v2299, 0.0
        %v2316 = vmax.f32 %v2300, 0.0
        %2317 = vst [vmem:[%s366] sm:$0xff] %v2301
        %2318 = vst [vmem:[%s366 + $0x8] sm:$0xff] %v2302
        %2319 = vst [vmem:[%s366 + $0x10] sm:$0xff] %v2303
        %2320 = vst [vmem:[%s366 + $0x18] sm:$0xff] %v2304
        %2321 = vst [vmem:[%s366 + $0x20] sm:$0xff] %v2305
        %2322 = vst [vmem:[%s366 + $0x28] sm:$0xff] %v2306
        %2323 = vst [vmem:[%s366 + $0x30] sm:$0xff] %v2307
        %2324 = vst [vmem:[%s366 + $0x38] sm:$0xff] %v2308
        %2325 = vst [vmem:[%s366 + $0x40] sm:$0xff] %v2309
        %2326 = vst [vmem:[%s366 + $0x48] sm:$0xff] %v2310
        %2327 = vst [vmem:[%s366 + $0x50] sm:$0xff] %v2311
        %2328 = vst [vmem:[%s366 + $0x58] sm:$0xff] %v2312
        %2329 = vst [vmem:[%s366 + $0x60] sm:$0xff] %v2313
        %2330 = vst [vmem:[%s366 + $0x68] sm:$0xff] %v2314
        %2331 = vst [vmem:[%s366 + $0x70] sm:$0xff] %v2315
        %2332 = vst [vmem:[%s366 + $0x78] sm:$0xff] %v2316
        %s2333 = sand.u32 %s261, 1
        %s2334 = scalar_lea.sflag [#allocation4], %s2333
        %s2335 = sand.u32 %s261, 1
        %s2336 = smul.addr %s2335, 128
        %s2337 = scalar_lea.vmem [#allocation3], %s2336
        // Predicated region
        $region65: #{tpu_custom_call.1} parent=59 // pred_check
          %p2338 = pneg %p271
        $region66: #{tpu_custom_call.1} parent=59 // pred_check_branch
          %2340 = sbr.rel (%p2338) target = $region68
        $region67: #{tpu_custom_call.1} parent=59 // pred_region
          %s2341 = smul.u32 16, %s29
          %s2343 = ssub.s32 2048, 2048
          %2344 = vsyncadd %s2334, %s2343
          %s2345 = smul.addr %s28, 32
          %s2346 = sadd.s32 %s2341, %s2345
          %s2347 = smul.addr %s2346, 128
          %s2348 = scalar_lea.hbm %s10, %s2347
          %s2349 = sshll.u32 %s2337, 4
          %s2350 = int_to_ptr.vmem [resolvable:$true] %s2349
          %2355 = dma.vmem_to_hbm [thread:$0]  %s2350, 2048, %s2348, %s2334, 128, 128, 8
        $region68: #{tpu_custom_call.1} parent=59 // pred_fallthru
          _
      $region60: #{tpu_custom_call.1} parent=5 // pred_fallthru
        _
      %p2356 = scmp.le.s32.totalorder 2, %s19
      // Predicated region
      $region69: #{tpu_custom_call.1} parent=5 // pred_check
        %p2357 = pneg %p2356
      $region70: #{tpu_custom_call.1} parent=5 // pred_check_branch
        %2359 = sbr.rel (%p2357) target = $region72
      $region71: #{tpu_custom_call.1} parent=5 // pred_region
        %s2360 = ssub.s32 %s19, 2
        // Predicated region
        $region73: #{tpu_custom_call.1} parent=71 // pred_check
          %p2361 = pneg %p277
        $region74: #{tpu_custom_call.1} parent=71 // pred_check_branch
          %2363 = sbr.rel (%p2361) target = $region76
        $region75: #{tpu_custom_call.1} parent=71 // pred_region
          %s2364 = sand.u32 %s262, 1
          %s2365 = scalar_lea.sflag [#allocation4], %s2364
          %s2366 = sand.u32 %s262, 1
          %s2367 = smul.addr %s2366, 128
          %s2368 = scalar_lea.vmem [#allocation3], %s2367
          %2369 = dma.done %s2365, 2048
        $region76: #{tpu_custom_call.1} parent=71 // pred_fallthru
          _
      $region72: #{tpu_custom_call.1} parent=5 // pred_fallthru
        _
    $region6: #{tpu_custom_call.1} parent=1 // loop_footer
      %s23 = sadd.s32 1, %s19
    $region7: #{tpu_custom_call.1} parent=1 // loop_footer_branch
      %18 = sbr.rel target = $region3
    $region8: #{tpu_custom_call.1} parent=1 // loop_exit
      _
    %2370 = vsyncpa [#allocation4], 1
    %s2371 = scalar_lea.sflag [#allocation4], 1
    %2372 = vsyncpa %s2371, 1

// kernel: tpu_custom_call.1
$region0: #{tpu_custom_call.1}
  #allocation0 [shape = 'u32[]', space=smem, size = 0x4, offset = 0x4, fixed_abs, tag = 'smem constant byte address 0x4 - core index']
  #allocation1 [shape = 'u32[144,128]{1,0:T(1,128)}', space=vmem, size = 0x12000, scoped, tag = 'internal scratch']
  #allocation2 [shape = 'f32[18,32,32]{2,1,0:T(8,128)}', space=vmem, size = 0x48000, scoped, tag = 'scratch operand']
  %s0 = inlined_call_operand.vmem [shape: f32[2,256,128], index: 0, kind: input, shape index: {}]
  %s1 = inlined_call_operand.vmem [shape: f32[128,32], index: 1, kind: input, shape index: {}]
  %s2 = inlined_call_operand.vmem [shape: f32[1,32], index: 2, kind: input, shape index: {}]
  %s3 = inlined_call_operand.vmem [shape: f32[1,32], index: 3, kind: input, shape index: {}]
  %s4 = inlined_call_operand.vmem [shape: f32[3,96,32], index: 4, kind: input, shape index: {}]
  %s5 = inlined_call_operand.vmem [shape: f32[1,32], index: 5, kind: input, shape index: {}]
  %s6 = inlined_call_operand.vmem [shape: f32[1,32], index: 6, kind: input, shape index: {}]
  %s7 = inlined_call_operand.vmem [shape: f32[32,128], index: 7, kind: input, shape index: {}]
  %s8 = inlined_call_operand.vmem [shape: f32[1,128], index: 8, kind: input, shape index: {}]
  %s9 = inlined_call_operand.vmem [shape: f32[1,128], index: 9, kind: input, shape index: {}]
  %s10 = inlined_call_operand.hbm [shape: f32[2,256,128], index: 10, kind: output, shape index: {}]
  %s11 = sld [smem:[#allocation0]]
  $region77: #{tpu_custom_call.1} parent=0
    _
  %s13 = ssub.s32 1, %s11
  %s14 = scalar_select 0, %s13, %s11
  $region1: #{tpu_custom_call.1} parent=0
    #allocation3 [shape = 'u8[131072]{0}', space=vmem, size = 0x20000, scoped, tag = 'output window, operand 0']
    #allocation4 [shape = 's32[2]{0}', space=sflag, size = 0x8, scoped, tag = 'scoped memory for tpu_custom_call.1']
    %15 = vsyncpa [#allocation4], 0
    %s16 = scalar_lea.sflag [#allocation4], 1
    %17 = vsyncpa %s16, 0
    loop: start=0, step=1, limit=6
    $region2: #{tpu_custom_call.1} parent=1 // loop_pre_header
      _
    $region3: #{tpu_custom_call.1} parent=1 // loop_header
      %s19 = sphi 0, %s23
      %p20 = scmp.ge.s32.totalorder %s19, 6
      %s26 = sphi 0, %s38
      %s27 = sphi 0, %s34
      %s28 = sphi 0, %s26
      %s29 = sphi 0, %s27
      %s30 = sphi 0, %s28
      %s31 = sphi 0, %s29
      %s41 = sphi 0, %s43
      %s44 = sphi 0, %s41
      %s45 = sphi 0, %s44
      %s61 = sphi 0, %s45
      %s65 = sphi 0, %s65
      %s67 = sphi 0, %s65
      %s68 = sphi 0, %s67
      %s82 = sphi 0, %s68
      %s86 = sphi 0, %s86
      %s88 = sphi 0, %s86
      %s89 = sphi 0, %s88
      %s103 = sphi 0, %s89
      %s107 = sphi 0, %s107
      %s109 = sphi 0, %s107
      %s110 = sphi 0, %s109
      %s124 = sphi 0, %s110
      %s128 = sphi 0, %s128
      %s130 = sphi 0, %s128
      %s131 = sphi 0, %s130
      %s145 = sphi 0, %s131
      %s149 = sphi 0, %s149
      %s151 = sphi 0, %s149
      %s152 = sphi 0, %s151
      %s166 = sphi 0, %s152
      %s170 = sphi 0, %s170
      %s172 = sphi 0, %s170
      %s173 = sphi 0, %s172
      %s187 = sphi 0, %s173
      %s191 = sphi 0, %s191
      %s193 = sphi 0, %s191
      %s194 = sphi 0, %s193
      %s208 = sphi 0, %s194
      %s212 = sphi 0, %s212
      %s214 = sphi 0, %s212
      %s215 = sphi 0, %s214
      %s229 = sphi 0, %s215
      %s233 = sphi 0, %s233
      %s235 = sphi 0, %s233
      %s236 = sphi 0, %s235
      %s250 = sphi 0, %s236
      %s258 = sphi 0, %s260
      %s261 = sphi 0, %s258
      %s262 = sphi 0, %s261
      %s278 = sphi 0, %s262
    $region4: #{tpu_custom_call.1} parent=1 // loop_header_branch
      %22 = sbr.rel (%p20) target = $region8
    $region5: #{tpu_custom_call.1} parent=1 // loop_body
      %s24 = ssub.s32 %s19, 1
      %s25 = ssub.s32 %s19, 2
      %s32 = sadd.s32 1, %s27
      %p33 = scmp.ge.s32.totalorder %s32, 2
      %s34 = scalar_select %p33, 0, %s32
      %s35 = sadd.s32 1, %s26
      %s36 = scalar_select %p33, %s35, %s26
      %p37 = scmp.ge.s32.totalorder %s36, 2
      %s38 = scalar_select %p37, 0, %s36
      %s39 = ssub.s32 %s26, %s38
      %p40 = scmp.eq.s32.totalorder %s39, 0
      %s42 = sadd.s32 %s41, 1
      %s43 = scalar_select %p40, %s41, %s42
      %p46 = pneg %p40
      %p47 = scmp.eq.s32.totalorder %s19, 3
      %p48 = por %p46, %p47
      %p49 = scmp.ne.s32.totalorder %s41, %s44
      %p50 = scmp.eq.s32.totalorder %s19, 0
      %p51 = por %p49, %p50
      %p52 = scmp.ne.s32.totalorder %s41, %s44
      %p53 = scmp.eq.s32.totalorder %s24, 3
      %p54 = por %p52, %p53
      %p55 = scmp.ne.s32.totalorder %s44, %s45
      %p56 = scmp.eq.s32.totalorder %s24, 0
      %p57 = por %p55, %p56
      %p58 = scmp.ne.s32.totalorder %s44, %s45
      %p59 = scmp.eq.s32.totalorder %s25, 3
      %p60 = por %p58, %p59
      %p62 = scmp.ne.s32.totalorder %s45, %s61
      %p63 = scmp.eq.s32.totalorder %s25, 0
      %p64 = por %p62, %p63
      %s66 = sadd.s32 %s65, 1
      %p69 = scmp.eq.s32.totalorder %s19, 3
      %p70 = scmp.ne.s32.totalorder %s65, %s67
      %p71 = scmp.eq.s32.totalorder %s19, 0
      %p72 = por %p70, %p71
      %p73 = scmp.ne.s32.totalorder %s65, %s67
      %p74 = scmp.eq.s32.totalorder %s24, 3
      %p75 = por %p73, %p74
      %p76 = scmp.ne.s32.totalorder %s67, %s68
      %p77 = scmp.eq.s32.totalorder %s24, 0
      %p78 = por %p76, %p77
      %p79 = scmp.ne.s32.totalorder %s67, %s68
      %p80 = scmp.eq.s32.totalorder %s25, 3
      %p81 = por %p79, %p80
      %p83 = scmp.ne.s32.totalorder %s68, %s82
      %p84 = scmp.eq.s32.totalorder %s25, 0
      %p85 = por %p83, %p84
      %s87 = sadd.s32 %s86, 1
      %p90 = scmp.eq.s32.totalorder %s19, 3
      %p91 = scmp.ne.s32.totalorder %s86, %s88
      %p92 = scmp.eq.s32.totalorder %s19, 0
      %p93 = por %p91, %p92
      %p94 = scmp.ne.s32.totalorder %s86, %s88
      %p95 = scmp.eq.s32.totalorder %s24, 3
      %p96 = por %p94, %p95
      %p97 = scmp.ne.s32.totalorder %s88, %s89
      %p98 = scmp.eq.s32.totalorder %s24, 0
      %p99 = por %p97, %p98
      %p100 = scmp.ne.s32.totalorder %s88, %s89
      %p101 = scmp.eq.s32.totalorder %s25, 3
      %p102 = por %p100, %p101
      %p104 = scmp.ne.s32.totalorder %s89, %s103
      %p105 = scmp.eq.s32.totalorder %s25, 0
      %p106 = por %p104, %p105
      %s108 = sadd.s32 %s107, 1
      %p111 = scmp.eq.s32.totalorder %s19, 3
      %p112 = scmp.ne.s32.totalorder %s107, %s109
      %p113 = scmp.eq.s32.totalorder %s19, 0
      %p114 = por %p112, %p113
      %p115 = scmp.ne.s32.totalorder %s107, %s109
      %p116 = scmp.eq.s32.totalorder %s24, 3
      %p117 = por %p115, %p116
      %p118 = scmp.ne.s32.totalorder %s109, %s110
      %p119 = scmp.eq.s32.totalorder %s24, 0
      %p120 = por %p118, %p119
      %p121 = scmp.ne.s32.totalorder %s109, %s110
      %p122 = scmp.eq.s32.totalorder %s25, 3
      %p123 = por %p121, %p122
      %p125 = scmp.ne.s32.totalorder %s110, %s124
      %p126 = scmp.eq.s32.totalorder %s25, 0
      %p127 = por %p125, %p126
      %s129 = sadd.s32 %s128, 1
      %p132 = scmp.eq.s32.totalorder %s19, 3
      %p133 = scmp.ne.s32.totalorder %s128, %s130
      %p134 = scmp.eq.s32.totalorder %s19, 0
      %p135 = por %p133, %p134
      %p136 = scmp.ne.s32.totalorder %s128, %s130
      %p137 = scmp.eq.s32.totalorder %s24, 3
      %p138 = por %p136, %p137
      %p139 = scmp.ne.s32.totalorder %s130, %s131
      %p140 = scmp.eq.s32.totalorder %s24, 0
      %p141 = por %p139, %p140
      %p142 = scmp.ne.s32.totalorder %s130, %s131
      %p143 = scmp.eq.s32.totalorder %s25, 3
      %p144 = por %p142, %p143
      %p146 = scmp.ne.s32.totalorder %s131, %s145
      %p147 = scmp.eq.s32.totalorder %s25, 0
      %p148 = por %p146, %p147
      %s150 = sadd.s32 %s149, 1
      %p153 = scmp.eq.s32.totalorder %s19, 3
      %p154 = scmp.ne.s32.totalorder %s149, %s151
      %p155 = scmp.eq.s32.totalorder %s19, 0
      %p156 = por %p154, %p155
      %p157 = scmp.ne.s32.totalorder %s149, %s151
      %p158 = scmp.eq.s32.totalorder %s24, 3
      %p159 = por %p157, %p158
      %p160 = scmp.ne.s32.totalorder %s151, %s152
      %p161 = scmp.eq.s32.totalorder %s24, 0
      %p162 = por %p160, %p161
      %p163 = scmp.ne.s32.totalorder %s151, %s152
      %p164 = scmp.eq.s32.totalorder %s25, 3
      %p165 = por %p163, %p164
      %p167 = scmp.ne.s32.totalorder %s152, %s166
      %p168 = scmp.eq.s32.totalorder %s25, 0
      %p169 = por %p167, %p168
      %s171 = sadd.s32 %s170, 1
      %p174 = scmp.eq.s32.totalorder %s19, 3
      %p175 = scmp.ne.s32.totalorder %s170, %s172
      %p176 = scmp.eq.s32.totalorder %s19, 0
      %p177 = por %p175, %p176
      %p178 = scmp.ne.s32.totalorder %s170, %s172
      %p179 = scmp.eq.s32.totalorder %s24, 3
      %p180 = por %p178, %p179
      %p181 = scmp.ne.s32.totalorder %s172, %s173
      %p182 = scmp.eq.s32.totalorder %s24, 0
      %p183 = por %p181, %p182
      %p184 = scmp.ne.s32.totalorder %s172, %s173
      %p185 = scmp.eq.s32.totalorder %s25, 3
      %p186 = por %p184, %p185
      %p188 = scmp.ne.s32.totalorder %s173, %s187
      %p189 = scmp.eq.s32.totalorder %s25, 0
      %p190 = por %p188, %p189
      %s192 = sadd.s32 %s191, 1
      %p195 = scmp.eq.s32.totalorder %s19, 3
      %p196 = scmp.ne.s32.totalorder %s191, %s193
      %p197 = scmp.eq.s32.totalorder %s19, 0
      %p198 = por %p196, %p197
      %p199 = scmp.ne.s32.totalorder %s191, %s193
      %p200 = scmp.eq.s32.totalorder %s24, 3
      %p201 = por %p199, %p200
      %p202 = scmp.ne.s32.totalorder %s193, %s194
      %p203 = scmp.eq.s32.totalorder %s24, 0
      %p204 = por %p202, %p203
      %p205 = scmp.ne.s32.totalorder %s193, %s194
      %p206 = scmp.eq.s32.totalorder %s25, 3
      %p207 = por %p205, %p206
      %p209 = scmp.ne.s32.totalorder %s194, %s208
      %p210 = scmp.eq.s32.totalorder %s25, 0
      %p211 = por %p209, %p210
      %s213 = sadd.s32 %s212, 1
      %p216 = scmp.eq.s32.totalorder %s19, 3
      %p217 = scmp.ne.s32.totalorder %s212, %s214
      %p218 = scmp.eq.s32.totalorder %s19, 0
      %p219 = por %p217, %p218
      %p220 = scmp.ne.s32.totalorder %s212, %s214
      %p221 = scmp.eq.s32.totalorder %s24, 3
      %p222 = por %p220, %p221
      %p223 = scmp.ne.s32.totalorder %s214, %s215
      %p224 = scmp.eq.s32.totalorder %s24, 0
      %p225 = por %p223, %p224
      %p226 = scmp.ne.s32.totalorder %s214, %s215
      %p227 = scmp.eq.s32.totalorder %s25, 3
      %p228 = por %p226, %p227
      %p230 = scmp.ne.s32.totalorder %s215, %s229
      %p231 = scmp.eq.s32.totalorder %s25, 0
      %p232 = por %p230, %p231
      %s234 = sadd.s32 %s233, 1
      %p237 = scmp.eq.s32.totalorder %s19, 3
      %p238 = scmp.ne.s32.totalorder %s233, %s235
      %p239 = scmp.eq.s32.totalorder %s19, 0
      %p240 = por %p238, %p239
      %p241 = scmp.ne.s32.totalorder %s233, %s235
      %p242 = scmp.eq.s32.totalorder %s24, 3
      %p243 = por %p241, %p242
      %p244 = scmp.ne.s32.totalorder %s235, %s236
      %p245 = scmp.eq.s32.totalorder %s24, 0
      %p246 = por %p244, %p245
      %p247 = scmp.ne.s32.totalorder %s235, %s236
      %p248 = scmp.eq.s32.totalorder %s25, 3
      %p249 = por %p247, %p248
      %p251 = scmp.ne.s32.totalorder %s236, %s250
      %p252 = scmp.eq.s32.totalorder %s25, 0
      %p253 = por %p251, %p252
      %s254 = ssub.s32 %s26, %s38
      %s255 = ssub.s32 %s27, %s34
      %s256 = sor.u32 %s254, %s255
      %p257 = scmp.eq.s32.totalorder %s256, 0
      %s259 = sadd.s32 %s258, 1
      %s260 = scalar_select %p257, %s258, %s259
      %p263 = pneg %p257
      %p264 = scmp.eq.s32.totalorder %s19, 3
      %p265 = por %p263, %p264
      %p266 = scmp.ne.s32.totalorder %s258, %s261
      %p267 = scmp.eq.s32.totalorder %s19, 0
      %p268 = por %p266, %p267
      %p269 = scmp.ne.s32.totalorder %s258, %s261
      %p270 = scmp.eq.s32.totalorder %s24, 3
      %p271 = por %p269, %p270
      %p272 = scmp.ne.s32.totalorder %s261, %s262
      %p273 = scmp.eq.s32.totalorder %s24, 0
      %p274 = por %p272, %p273
      %p275 = scmp.ne.s32.totalorder %s261, %s262
      %p276 = scmp.eq.s32.totalorder %s25, 3
      %p277 = por %p275, %p276
      %p279 = scmp.ne.s32.totalorder %s262, %s278
      %p280 = scmp.eq.s32.totalorder %s25, 0
      %p281 = por %p279, %p280
      %p282 = scmp.le.s32.totalorder 1, %s19
      %p283 = scmp.lt.s32.totalorder %s19, 5
      %p284 = pnand %p282, %p283
      %p285 = pneg %p284
      // Predicated region
      $region9: #{tpu_custom_call.1} parent=5 // pred_check
        _
      $region10: #{tpu_custom_call.1} parent=5 // pred_check_branch
        %287 = sbr.rel (%p284) target = $region12
      $region11: #{tpu_custom_call.1} parent=5 // pred_region
        %s288 = ssub.s32 %s19, 1
        // Predicated region
        $region13: #{tpu_custom_call.1} parent=11 // pred_check
          %p289 = pneg %p78
        $region14: #{tpu_custom_call.1} parent=11 // pred_check_branch
          %291 = sbr.rel (%p289) target = $region16
        $region15: #{tpu_custom_call.1} parent=11 // pred_region
          _
        $region16: #{tpu_custom_call.1} parent=11 // pred_fallthru
          _
        // Predicated region
        $region17: #{tpu_custom_call.1} parent=11 // pred_check
          %p292 = pneg %p99
        $region18: #{tpu_custom_call.1} parent=11 // pred_check_branch
          %294 = sbr.rel (%p292) target = $region20
        $region19: #{tpu_custom_call.1} parent=11 // pred_region
          _
        $region20: #{tpu_custom_call.1} parent=11 // pred_fallthru
          _
        // Predicated region
        $region21: #{tpu_custom_call.1} parent=11 // pred_check
          %p295 = pneg %p120
        $region22: #{tpu_custom_call.1} parent=11 // pred_check_branch
          %297 = sbr.rel (%p295) target = $region24
        $region23: #{tpu_custom_call.1} parent=11 // pred_region
          _
        $region24: #{tpu_custom_call.1} parent=11 // pred_fallthru
          _
        // Predicated region
        $region25: #{tpu_custom_call.1} parent=11 // pred_check
          %p298 = pneg %p141
        $region26: #{tpu_custom_call.1} parent=11 // pred_check_branch
          %300 = sbr.rel (%p298) target = $region28
        $region27: #{tpu_custom_call.1} parent=11 // pred_region
          _
        $region28: #{tpu_custom_call.1} parent=11 // pred_fallthru
          _
        // Predicated region
        $region29: #{tpu_custom_call.1} parent=11 // pred_check
          %p301 = pneg %p162
        $region30: #{tpu_custom_call.1} parent=11 // pred_check_branch
          %303 = sbr.rel (%p301) target = $region32
        $region31: #{tpu_custom_call.1} parent=11 // pred_region
          _
        $region32: #{tpu_custom_call.1} parent=11 // pred_fallthru
          _
        // Predicated region
        $region33: #{tpu_custom_call.1} parent=11 // pred_check
          %p304 = pneg %p183
        $region34: #{tpu_custom_call.1} parent=11 // pred_check_branch
          %306 = sbr.rel (%p304) target = $region36
        $region35: #{tpu_custom_call.1} parent=11 // pred_region
          _
        $region36: #{tpu_custom_call.1} parent=11 // pred_fallthru
          _
        // Predicated region
        $region37: #{tpu_custom_call.1} parent=11 // pred_check
          %p307 = pneg %p204
        $region38: #{tpu_custom_call.1} parent=11 // pred_check_branch
          %309 = sbr.rel (%p307) target = $region40
        $region39: #{tpu_custom_call.1} parent=11 // pred_region
          _
        $region40: #{tpu_custom_call.1} parent=11 // pred_fallthru
          _
        // Predicated region
        $region41: #{tpu_custom_call.1} parent=11 // pred_check
          %p310 = pneg %p225
        $region42: #{tpu_custom_call.1} parent=11 // pred_check_branch
          %312 = sbr.rel (%p310) target = $region44
        $region43: #{tpu_custom_call.1} parent=11 // pred_region
          _
        $region44: #{tpu_custom_call.1} parent=11 // pred_fallthru
          _
        // Predicated region
        $region45: #{tpu_custom_call.1} parent=11 // pred_check
          %p313 = pneg %p246
        $region46: #{tpu_custom_call.1} parent=11 // pred_check_branch
          %315 = sbr.rel (%p313) target = $region48
        $region47: #{tpu_custom_call.1} parent=11 // pred_region
          _
        $region48: #{tpu_custom_call.1} parent=11 // pred_fallthru
          _
      $region12: #{tpu_custom_call.1} parent=5 // pred_fallthru
        _
      %p316 = scmp.lt.s32.totalorder %s19, 4
      // Predicated region
      $region49: #{tpu_custom_call.1} parent=5 // pred_check
        %p317 = pneg %p316
      $region50: #{tpu_custom_call.1} parent=5 // pred_check_branch
        %319 = sbr.rel (%p317) target = $region52
      $region51: #{tpu_custom_call.1} parent=5 // pred_region
        // Predicated region
        $region53: #{tpu_custom_call.1} parent=51 // pred_check
          %p320 = pneg %p51
        $region54: #{tpu_custom_call.1} parent=51 // pred_check_branch
          %322 = sbr.rel (%p320) target = $region56
        $region55: #{tpu_custom_call.1} parent=51 // pred_region
          %p323 = scmp.lt.s32.totalorder %s26, 1
          %s324 = scalar_select %p323, %s26, 1
          %s325 = smul.addr %s324, 32
          %s326 = smul.addr %s325, 8
          %s327 = scalar_lea.vmem %s0, %s326
        $region56: #{tpu_custom_call.1} parent=51 // pred_fallthru
          _
      $region52: #{tpu_custom_call.1} parent=5 // pred_fallthru
        _
      %p328 = scmp.le.s32.totalorder 1, %s19
      %p329 = scmp.lt.s32.totalorder %s19, 5
      %p330 = pnand %p328, %p329
      %p331 = pneg %p330
      // Predicated region
      $region57: #{tpu_custom_call.1} parent=5 // pred_check
        _
      $region58: #{tpu_custom_call.1} parent=5 // pred_check_branch
        %333 = sbr.rel (%p330) target = $region60
      $region59: #{tpu_custom_call.1} parent=5 // pred_region
        %s334 = ssub.s32 %s19, 1
        %p335 = scmp.lt.s32.totalorder %s28, 1
        %s336 = scalar_select %p335, %s28, 1
        %s337 = smul.addr %s336, 32
        %s338 = smul.addr %s337, 8
        %s339 = scalar_lea.vmem %s0, %s338
        %p340 = pneg %p57
        %p341 = pneg %p54
        %p342 = pneg %p78
        %p343 = pneg %p75
        %p344 = pneg %p99
        %p345 = pneg %p96
        %p346 = pneg %p120
        %p347 = pneg %p117
        %p348 = pneg %p141
        %p349 = pneg %p138
        %p350 = pneg %p162
        %p351 = pneg %p159
        %p352 = pneg %p183
        %p353 = pneg %p180
        %p354 = pneg %p204
        %p355 = pneg %p201
        %p356 = pneg %p225
        %p357 = pneg %p222
        %p358 = pneg %p246
        %p359 = pneg %p243
        %p360 = pneg %p274
        %p361 = pneg %p271
        %s362 = sand.u32 %s261, 1
        %s363 = scalar_lea.sflag [#allocation4], %s362
        %s364 = sand.u32 %s261, 1
        %s365 = smul.addr %s364, 128
        %s366 = scalar_lea.vmem [#allocation3], %s365
        %p367 = scmp.lt.s32.totalorder %s28, 1
        %s368 = scalar_select %p367, %s28, 1
        %s369 = smul.addr %s368, 32
        %s370 = smul.addr %s369, 8
        %s371 = scalar_lea.vmem %s0, %s370
        %s372 = smul.u32 16, %s29
        %p373 = scmp.eq.s32.totalorder %s29, 0
        // Predicated region
        $region61: #{tpu_custom_call.1} parent=59 // pred_check
          %p374 = pneg %p373
        $region62: #{tpu_custom_call.1} parent=59 // pred_check_branch
          %376 = sbr.rel (%p374) target = $region64
        $region63: #{tpu_custom_call.1} parent=59 // pred_region
          %v377 = vld [vmem:[%s371] sm:$0xff]
          %v378 = vld [vmem:[%s371 + $0x8] sm:$0xff]
          %v379 = vld [vmem:[%s371 + $0x10] sm:$0xff]
          %v380 = vld [vmem:[%s371 + $0x18] sm:$0xff]
          %v381 = vld [vmem:[%s371 + $0x20] sm:$0xff]
          %v382 = vld [vmem:[%s371 + $0x28] sm:$0xff]
          %v383 = vld [vmem:[%s371 + $0x30] sm:$0xff]
          %v384 = vld [vmem:[%s371 + $0x38] sm:$0xff]
          %v385 = vld [vmem:[%s371 + $0x40] sm:$0xff]
          %v386 = vld [vmem:[%s371 + $0x48] sm:$0xff]
          %v387 = vld [vmem:[%s371 + $0x50] sm:$0xff]
          %v388 = vld [vmem:[%s371 + $0x58] sm:$0xff]
          %v389 = vld [vmem:[%s371 + $0x60] sm:$0xff]
          %v390 = vld [vmem:[%s371 + $0x68] sm:$0xff]
          %v391 = vld [vmem:[%s371 + $0x70] sm:$0xff]
          %v392 = vld [vmem:[%s371 + $0x78] sm:$0xff]
          %v393 = vld [vmem:[%s371 + $0x80] sm:$0xff]
          %v394 = vld [vmem:[%s371 + $0x88] sm:$0xff]
          %v395 = vld [vmem:[%s371 + $0x90] sm:$0xff]
          %v396 = vld [vmem:[%s371 + $0x98] sm:$0xff]
          %v397 = vld [vmem:[%s371 + $0xa0] sm:$0xff]
          %v398 = vld [vmem:[%s371 + $0xa8] sm:$0xff]
          %v399 = vld [vmem:[%s371 + $0xb0] sm:$0xff]
          %v400 = vld [vmem:[%s371 + $0xb8] sm:$0xff]
          %v401 = vld [vmem:[%s371 + $0xc0] sm:$0xff]
          %v402 = vld [vmem:[%s371 + $0xc8] sm:$0xff]
          %v403 = vld [vmem:[%s371 + $0xd0] sm:$0xff]
          %v404 = vld [vmem:[%s371 + $0xd8] sm:$0xff]
          %v405 = vld [vmem:[%s371 + $0xe0] sm:$0xff]
          %v406 = vld [vmem:[%s371 + $0xe8] sm:$0xff]
          %v407 = vld [vmem:[%s371 + $0xf0] sm:$0xff]
          %v408 = vld [vmem:[%s371 + $0xf8] sm:$0xff]
          %v409 = vld [vmem:[%s1] sm:$0xff]
          %v410 = vld [vmem:[%s1 + $0x8] sm:$0xff]
          %v411 = vld [vmem:[%s1 + $0x10] sm:$0xff]
          %v412 = vld [vmem:[%s1 + $0x18] sm:$0xff]
          %v413 = vld [vmem:[%s1 + $0x20] sm:$0xff]
          %v414 = vld [vmem:[%s1 + $0x28] sm:$0xff]
          %v415 = vld [vmem:[%s1 + $0x30] sm:$0xff]
          %v416 = vld [vmem:[%s1 + $0x38] sm:$0xff]
          %v417 = vld [vmem:[%s1 + $0x40] sm:$0xff]
          %v418 = vld [vmem:[%s1 + $0x48] sm:$0xff]
          %v419 = vld [vmem:[%s1 + $0x50] sm:$0xff]
          %v420 = vld [vmem:[%s1 + $0x58] sm:$0xff]
          %v421 = vld [vmem:[%s1 + $0x60] sm:$0xff]
          %v422 = vld [vmem:[%s1 + $0x68] sm:$0xff]
          %v423 = vld [vmem:[%s1 + $0x70] sm:$0xff]
          %v424 = vld [vmem:[%s1 + $0x78] sm:$0xff]
          %425 = vmatprep.subr.mxu0 0.0
          %426 = vmatpush1.msra.mxu0 %v409
          %427 = vmatprep.subr.mxu0 0.0
          %428 = vmatpush1.msra.mxu0 %v410
          %429 = vmatprep.subr.mxu0 0.0
          %430 = vmatpush1.msra.mxu0 %v411
          %431 = vmatprep.subr.mxu0 0.0
          %432 = vmatpush1.msra.mxu0 %v412
          %433 = vmatprep.subr.mxu0 0.0
          %434 = vmatpush1.msra.mxu0 %v413
          %435 = vmatprep.subr.mxu0 0.0
          %436 = vmatpush1.msra.mxu0 %v414
          %437 = vmatprep.subr.mxu0 0.0
          %438 = vmatpush1.msra.mxu0 %v415
          %439 = vmatprep.subr.mxu0 0.0
          %440 = vmatpush1.msra.mxu0 %v416
          %441 = vmatprep.subr.mxu0 0.0
          %442 = vmatpush1.msra.mxu0 %v417
          %443 = vmatprep.subr.mxu0 0.0
          %444 = vmatpush1.msra.mxu0 %v418
          %445 = vmatprep.subr.mxu0 0.0
          %446 = vmatpush1.msra.mxu0 %v419
          %447 = vmatprep.subr.mxu0 0.0
          %448 = vmatpush1.msra.mxu0 %v420
          %449 = vmatprep.subr.mxu0 0.0
          %450 = vmatpush1.msra.mxu0 %v421
          %451 = vmatprep.subr.mxu0 0.0
          %452 = vmatpush1.msra.mxu0 %v422
          %453 = vmatprep.subr.mxu0 0.0
          %454 = vmatpush1.msra.mxu0 %v423
          %455 = vmatprep.subr.mxu0 0.0
          %456 = vmatpush1.msra.mxu0 %v424
          %457 = vmatprep.subr.mxu0 0.0
          %458 = vmatpush1.msra.mxu0 0.0
          %459 = vmatprep.subr.mxu0 0.0
          %460 = vmatpush1.msra.mxu0 0.0
          %461 = vmatprep.subr.mxu0 0.0
          %462 = vmatpush1.msra.mxu0 0.0
          %463 = vmatprep.subr.mxu0 0.0
          %464 = vmatpush1.msra.mxu0 0.0
          %465 = vmatprep.subr.mxu0 0.0
          %466 = vmatpush1.msra.mxu0 0.0
          %467 = vmatprep.subr.mxu0 0.0
          %468 = vmatpush1.msra.mxu0 0.0
          %469 = vmatprep.subr.mxu0 0.0
          %470 = vmatpush1.msra.mxu0 0.0
          %471 = vmatprep.subr.mxu0 0.0
          %472 = vmatpush1.msra.mxu0 0.0
          %473 = vmatprep.subr.mxu0 0.0
          %474 = vmatpush1.msra.mxu0 0.0
          %475 = vmatprep.subr.mxu0 0.0
          %476 = vmatpush1.msra.mxu0 0.0
          %477 = vmatprep.subr.mxu0 0.0
          %478 = vmatpush1.msra.mxu0 0.0
          %479 = vmatprep.subr.mxu0 0.0
          %480 = vmatpush1.msra.mxu0 0.0
          %481 = vmatprep.subr.mxu0 0.0
          %482 = vmatpush1.msra.mxu0 0.0
          %483 = vmatprep.subr.mxu0 0.0
          %484 = vmatpush1.msra.mxu0 0.0
          %485 = vmatprep.subr.mxu0 0.0
          %486 = vmatpush1.msra.mxu0 0.0
          %487 = vmatprep.subr.mxu0 0.0
          %488 = vmatpush1.msra.mxu0 0.0
          %489 = vmatprep.mubr.f32.mxu0 0.0
          %490 = vmatmul.mubr.f32.gmra.mrb[0].mxu0 %v377
          %v491 = vpop.f32.mrb[0].mxu0
          %v492 = vadd.f32 0.0, %v491
          %v493 = vpop.f32.mrb[0].mxu0
          %494 = vmatprep.mubr.f32.mxu0 0.0
          %495 = vmatmul.mubr.f32.gmra.mrb[0].mxu0 %v378
          %v496 = vpop.f32.mrb[0].mxu0
          %v497 = vadd.f32 0.0, %v496
          %v498 = vpop.f32.mrb[0].mxu0
          %499 = vmatprep.mubr.f32.mxu0 0.0
          %500 = vmatmul.mubr.f32.gmra.mrb[0].mxu0 %v379
          %v501 = vpop.f32.mrb[0].mxu0
          %v502 = vadd.f32 0.0, %v501
          %v503 = vpop.f32.mrb[0].mxu0
          %504 = vmatprep.mubr.f32.mxu0 0.0
          %505 = vmatmul.mubr.f32.gmra.mrb[0].mxu0 %v380
          %v506 = vpop.f32.mrb[0].mxu0
          %v507 = vadd.f32 0.0, %v506
          %v508 = vpop.f32.mrb[0].mxu0
          %509 = vmatprep.mubr.f32.mxu0 0.0
          %510 = vmatmul.mubr.f32.gmra.mrb[0].mxu0 %v381
          %v511 = vpop.f32.mrb[0].mxu0
          %v512 = vadd.f32 0.0, %v511
          %v513 = vpop.f32.mrb[0].mxu0
          %514 = vmatprep.mubr.f32.mxu0 0.0
          %515 = vmatmul.mubr.f32.gmra.mrb[0].mxu0 %v382
          %v516 = vpop.f32.mrb[0].mxu0
          %v517 = vadd.f32 0.0, %v516
          %v518 = vpop.f32.mrb[0].mxu0
          %519 = vmatprep.mubr.f32.mxu0 0.0
          %520 = vmatmul.mubr.f32.gmra.mrb[0].mxu0 %v383
          %v521 = vpop.f32.mrb[0].mxu0
          %v522 = vadd.f32 0.0, %v521
          %v523 = vpop.f32.mrb[0].mxu0
          %524 = vmatprep.mubr.f32.mxu0 0.0
          %525 = vmatmul.mubr.f32.gmra.mrb[0].mxu0 %v384
          %v526 = vpop.f32.mrb[0].mxu0
          %v527 = vadd.f32 0.0, %v526
          %v528 = vpop.f32.mrb[0].mxu0
          %529 = vmatprep.mubr.f32.mxu0 0.0
          %530 = vmatmul.mubr.f32.gmra.mrb[0].mxu0 %v385
          %v531 = vpop.f32.mrb[0].mxu0
          %v532 = vadd.f32 0.0, %v531
          %v533 = vpop.f32.mrb[0].mxu0
          %534 = vmatprep.mubr.f32.mxu0 0.0
          %535 = vmatmul.mubr.f32.gmra.mrb[0].mxu0 %v386
          %v536 = vpop.f32.mrb[0].mxu0
          %v537 = vadd.f32 0.0, %v536
          %v538 = vpop.f32.mrb[0].mxu0
          %539 = vmatprep.mubr.f32.mxu0 0.0
          %540 = vmatmul.mubr.f32.gmra.mrb[0].mxu0 %v387
          %v541 = vpop.f32.mrb[0].mxu0
          %v542 = vadd.f32 0.0, %v541
          %v543 = vpop.f32.mrb[0].mxu0
          %544 = vmatprep.mubr.f32.mxu0 0.0
          %545 = vmatmul.mubr.f32.gmra.mrb[0].mxu0 %v388
          %v546 = vpop.f32.mrb[0].mxu0
          %v547 = vadd.f32 0.0, %v546
          %v548 = vpop.f32.mrb[0].mxu0
          %549 = vmatprep.mubr.f32.mxu0 0.0
          %550 = vmatmul.mubr.f32.gmra.mrb[0].mxu0 %v389
          %v551 = vpop.f32.mrb[0].mxu0
          %v552 = vadd.f32 0.0, %v551
          %v553 = vpop.f32.mrb[0].mxu0
          %554 = vmatprep.mubr.f32.mxu0 0.0
          %555 = vmatmul.mubr.f32.gmra.mrb[0].mxu0 %v390
          %v556 = vpop.f32.mrb[0].mxu0
          %v557 = vadd.f32 0.0, %v556
          %v558 = vpop.f32.mrb[0].mxu0
          %559 = vmatprep.mubr.f32.mxu0 0.0
          %560 = vmatmul.mubr.f32.gmra.mrb[0].mxu0 %v391
          %v561 = vpop.f32.mrb[0].mxu0
          %v562 = vadd.f32 0.0, %v561
          %v563 = vpop.f32.mrb[0].mxu0
          %564 = vmatprep.mubr.f32.mxu0 0.0
          %565 = vmatmul.mubr.f32.gmra.mrb[0].mxu0 %v392
          %v566 = vpop.f32.mrb[0].mxu0
          %v567 = vadd.f32 0.0, %v566
          %v568 = vpop.f32.mrb[0].mxu0
          %569 = vmatprep.mubr.f32.mxu0 0.0
          %570 = vmatmul.mubr.f32.gmra.mrb[0].mxu0 %v393
          %v571 = vpop.f32.mrb[0].mxu0
          %v572 = vadd.f32 0.0, %v571
          %v573 = vpop.f32.mrb[0].mxu0
          %574 = vmatprep.mubr.f32.mxu0 0.0
          %575 = vmatmul.mubr.f32.gmra.mrb[0].mxu0 %v394
          %v576 = vpop.f32.mrb[0].mxu0
          %v577 = vadd.f32 0.0, %v576
          %v578 = vpop.f32.mrb[0].mxu0
          %579 = vmatprep.mubr.f32.mxu0 0.0
          %580 = vmatmul.mubr.f32.gmra.mrb[0].mxu0 %v395
          %v581 = vpop.f32.mrb[0].mxu0
          %v582 = vadd.f32 0.0, %v581
          %v583 = vpop.f32.mrb[0].mxu0
          %584 = vmatprep.mubr.f32.mxu0 0.0
          %585 = vmatmul.mubr.f32.gmra.mrb[0].mxu0 %v396
          %v586 = vpop.f32.mrb[0].mxu0
          %v587 = vadd.f32 0.0, %v586
          %v588 = vpop.f32.mrb[0].mxu0
          %589 = vmatprep.mubr.f32.mxu0 0.0
          %590 = vmatmul.mubr.f32.gmra.mrb[0].mxu0 %v397
          %v591 = vpop.f32.mrb[0].mxu0
          %v592 = vadd.f32 0.0, %v591
          %v593 = vpop.f32.mrb[0].mxu0
          %594 = vmatprep.mubr.f32.mxu0 0.0
          %595 = vmatmul.mubr.f32.gmra.mrb[0].mxu0 %v398
          %v596 = vpop.f32.mrb[0].mxu0
          %v597 = vadd.f32 0.0, %v596
          %v598 = vpop.f32.mrb[0].mxu0
          %599 = vmatprep.mubr.f32.mxu0 0.0
          %600 = vmatmul.mubr.f32.gmra.mrb[0].mxu0 %v399
          %v601 = vpop.f32.mrb[0].mxu0
          %v602 = vadd.f32 0.0, %v601
          %v603 = vpop.f32.mrb[0].mxu0
          %604 = vmatprep.mubr.f32.mxu0 0.0
          %605 = vmatmul.mubr.f32.gmra.mrb[0].mxu0 %v400
          %v606 = vpop.f32.mrb[0].mxu0
          %v607 = vadd.f32 0.0, %v606
          %v608 = vpop.f32.mrb[0].mxu0
          %609 = vmatprep.mubr.f32.mxu0 0.0
          %610 = vmatmul.mubr.f32.gmra.mrb[0].mxu0 %v401
          %v611 = vpop.f32.mrb[0].mxu0
          %v612 = vadd.f32 0.0, %v611
          %v613 = vpop.f32.mrb[0].mxu0
          %614 = vmatprep.mubr.f32.mxu0 0.0
          %615 = vmatmul.mubr.f32.gmra.mrb[0].mxu0 %v402
          %v616 = vpop.f32.mrb[0].mxu0
          %v617 = vadd.f32 0.0, %v616
          %v618 = vpop.f32.mrb[0].mxu0
          %619 = vmatprep.mubr.f32.mxu0 0.0
          %620 = vmatmul.mubr.f32.gmra.mrb[0].mxu0 %v403
          %v621 = vpop.f32.mrb[0].mxu0
          %v622 = vadd.f32 0.0, %v621
          %v623 = vpop.f32.mrb[0].mxu0
          %624 = vmatprep.mubr.f32.mxu0 0.0
          %625 = vmatmul.mubr.f32.gmra.mrb[0].mxu0 %v404
          %v626 = vpop.f32.mrb[0].mxu0
          %v627 = vadd.f32 0.0, %v626
          %v628 = vpop.f32.mrb[0].mxu0
          %629 = vmatprep.mubr.f32.mxu0 0.0
          %630 = vmatmul.mubr.f32.gmra.mrb[0].mxu0 %v405
          %v631 = vpop.f32.mrb[0].mxu0
          %v632 = vadd.f32 0.0, %v631
          %v633 = vpop.f32.mrb[0].mxu0
          %634 = vmatprep.mubr.f32.mxu0 0.0
          %635 = vmatmul.mubr.f32.gmra.mrb[0].mxu0 %v406
          %v636 = vpop.f32.mrb[0].mxu0
          %v637 = vadd.f32 0.0, %v636
          %v638 = vpop.f32.mrb[0].mxu0
          %639 = vmatprep.mubr.f32.mxu0 0.0
          %640 = vmatmul.mubr.f32.gmra.mrb[0].mxu0 %v407
          %v641 = vpop.f32.mrb[0].mxu0
          %v642 = vadd.f32 0.0, %v641
          %v643 = vpop.f32.mrb[0].mxu0
          %644 = vmatprep.mubr.f32.mxu0 0.0
          %645 = vmatmul.mubr.f32.gmra.mrb[0].mxu0 %v408
          %v646 = vpop.f32.mrb[0].mxu0
          %v647 = vadd.f32 0.0, %v646
          %v648 = vpop.f32.mrb[0].mxu0
          %649 = vdwg.mxu0
          %v650 = vld [vmem:[%s2] sm:$0x1]
          %v652 = vlaneseq
          %v653 = vshrl.u32 %v652, 7
          %v654 = vsub.s32 0, %v653
          %v655 = vrot.slane %v650, %v654
          %v657 = vmul.f32 %v492, %v655
          %v658 = vmul.f32 %v497, %v655
          %v659 = vmul.f32 %v502, %v655
          %v660 = vmul.f32 %v507, %v655
          %v661 = vmul.f32 %v512, %v655
          %v662 = vmul.f32 %v517, %v655
          %v663 = vmul.f32 %v522, %v655
          %v664 = vmul.f32 %v527, %v655
          %v665 = vmul.f32 %v532, %v655
          %v666 = vmul.f32 %v537, %v655
          %v667 = vmul.f32 %v542, %v655
          %v668 = vmul.f32 %v547, %v655
          %v669 = vmul.f32 %v552, %v655
          %v670 = vmul.f32 %v557, %v655
          %v671 = vmul.f32 %v562, %v655
          %v672 = vmul.f32 %v567, %v655
          %v673 = vmul.f32 %v572, %v655
          %v674 = vmul.f32 %v577, %v655
          %v675 = vmul.f32 %v582, %v655
          %v676 = vmul.f32 %v587, %v655
          %v677 = vmul.f32 %v592, %v655
          %v678 = vmul.f32 %v597, %v655
          %v679 = vmul.f32 %v602, %v655
          %v680 = vmul.f32 %v607, %v655
          %v681 = vmul.f32 %v612, %v655
          %v682 = vmul.f32 %v617, %v655
          %v683 = vmul.f32 %v622, %v655
          %v684 = vmul.f32 %v627, %v655
          %v685 = vmul.f32 %v632, %v655
          %v686 = vmul.f32 %v637, %v655
          %v687 = vmul.f32 %v642, %v655
          %v688 = vmul.f32 %v647, %v655
          %v689 = vld [vmem:[%s3] sm:$0x1]
          %v691 = vlaneseq
          %v692 = vshrl.u32 %v691, 7
          %v693 = vsub.s32 0, %v692
          %v694 = vrot.slane %v689, %v693
          %v696 = vadd.f32 %v657, %v694
          %v697 = vadd.f32 %v658, %v694
          %v698 = vadd.f32 %v659, %v694
          %v699 = vadd.f32 %v660, %v694
          %v700 = vadd.f32 %v661, %v694
          %v701 = vadd.f32 %v662, %v694
          %v702 = vadd.f32 %v663, %v694
          %v703 = vadd.f32 %v664, %v694
          %v704 = vadd.f32 %v665, %v694
          %v705 = vadd.f32 %v666, %v694
          %v706 = vadd.f32 %v667, %v694
          %v707 = vadd.f32 %v668, %v694
          %v708 = vadd.f32 %v669, %v694
          %v709 = vadd.f32 %v670, %v694
          %v710 = vadd.f32 %v671, %v694
          %v711 = vadd.f32 %v672, %v694
          %v712 = vadd.f32 %v673, %v694
          %v713 = vadd.f32 %v674, %v694
          %v714 = vadd.f32 %v675, %v694
          %v715 = vadd.f32 %v676, %v694
          %v716 = vadd.f32 %v677, %v694
          %v717 = vadd.f32 %v678, %v694
          %v718 = vadd.f32 %v679, %v694
          %v719 = vadd.f32 %v680, %v694
          %v720 = vadd.f32 %v681, %v694
          %v721 = vadd.f32 %v682, %v694
          %v722 = vadd.f32 %v683, %v694
          %v723 = vadd.f32 %v684, %v694
          %v724 = vadd.f32 %v685, %v694
          %v725 = vadd.f32 %v686, %v694
          %v726 = vadd.f32 %v687, %v694
          %v727 = vadd.f32 %v688, %v694
          %v728 = vmax.f32 %v696, 0.0
          %v729 = vmax.f32 %v697, 0.0
          %v730 = vmax.f32 %v698, 0.0
          %v731 = vmax.f32 %v699, 0.0
          %v732 = vmax.f32 %v700, 0.0
          %v733 = vmax.f32 %v701, 0.0
          %v734 = vmax.f32 %v702, 0.0
          %v735 = vmax.f32 %v703, 0.0
          %v736 = vmax.f32 %v704, 0.0
          %v737 = vmax.f32 %v705, 0.0
          %v738 = vmax.f32 %v706, 0.0
          %v739 = vmax.f32 %v707, 0.0
          %v740 = vmax.f32 %v708, 0.0
          %v741 = vmax.f32 %v709, 0.0
          %v742 = vmax.f32 %v710, 0.0
          %v743 = vmax.f32 %v711, 0.0
          %v744 = vmax.f32 %v712, 0.0
          %v745 = vmax.f32 %v713, 0.0
          %v746 = vmax.f32 %v714, 0.0
          %v747 = vmax.f32 %v715, 0.0
          %v748 = vmax.f32 %v716, 0.0
          %v749 = vmax.f32 %v717, 0.0
          %v750 = vmax.f32 %v718, 0.0
          %v751 = vmax.f32 %v719, 0.0
          %v752 = vmax.f32 %v720, 0.0
          %v753 = vmax.f32 %v721, 0.0
          %v754 = vmax.f32 %v722, 0.0
          %v755 = vmax.f32 %v723, 0.0
          %v756 = vmax.f32 %v724, 0.0
          %v757 = vmax.f32 %v725, 0.0
          %v758 = vmax.f32 %v726, 0.0
          %v759 = vmax.f32 %v727, 0.0
          %s760 = scalar_lea.vmem [#allocation2], 32
          %vm761 = vcmask 261120
          %762 = vst.msk [vmem:[%s760 + $0x8] sm:$0xff] %vm761, %v728
          %763 = vst.msk [vmem:[%s760 + $0x10] sm:$0xff] %vm761, %v729
          %764 = vst.msk [vmem:[%s760 + $0x28] sm:$0xff] %vm761, %v730
          %765 = vst.msk [vmem:[%s760 + $0x30] sm:$0xff] %vm761, %v731
          %766 = vst.msk [vmem:[%s760 + $0x48] sm:$0xff] %vm761, %v732
          %767 = vst.msk [vmem:[%s760 + $0x50] sm:$0xff] %vm761, %v733
          %768 = vst.msk [vmem:[%s760 + $0x68] sm:$0xff] %vm761, %v734
          %769 = vst.msk [vmem:[%s760 + $0x70] sm:$0xff] %vm761, %v735
          %770 = vst.msk [vmem:[%s760 + $0x88] sm:$0xff] %vm761, %v736
          %771 = vst.msk [vmem:[%s760 + $0x90] sm:$0xff] %vm761, %v737
          %772 = vst.msk [vmem:[%s760 + $0xa8] sm:$0xff] %vm761, %v738
          %773 = vst.msk [vmem:[%s760 + $0xb0] sm:$0xff] %vm761, %v739
          %774 = vst.msk [vmem:[%s760 + $0xc8] sm:$0xff] %vm761, %v740
          %775 = vst.msk [vmem:[%s760 + $0xd0] sm:$0xff] %vm761, %v741
          %776 = vst.msk [vmem:[%s760 + $0xe8] sm:$0xff] %vm761, %v742
          %777 = vst.msk [vmem:[%s760 + $0xf0] sm:$0xff] %vm761, %v743
          %778 = vst.msk [vmem:[%s760 + $0x108] sm:$0xff] %vm761, %v744
          %779 = vst.msk [vmem:[%s760 + $0x110] sm:$0xff] %vm761, %v745
          %780 = vst.msk [vmem:[%s760 + $0x128] sm:$0xff] %vm761, %v746
          %781 = vst.msk [vmem:[%s760 + $0x130] sm:$0xff] %vm761, %v747
          %782 = vst.msk [vmem:[%s760 + $0x148] sm:$0xff] %vm761, %v748
          %783 = vst.msk [vmem:[%s760 + $0x150] sm:$0xff] %vm761, %v749
          %784 = vst.msk [vmem:[%s760 + $0x168] sm:$0xff] %vm761, %v750
          %785 = vst.msk [vmem:[%s760 + $0x170] sm:$0xff] %vm761, %v751
          %786 = vst.msk [vmem:[%s760 + $0x188] sm:$0xff] %vm761, %v752
          %787 = vst.msk [vmem:[%s760 + $0x190] sm:$0xff] %vm761, %v753
          %788 = vst.msk [vmem:[%s760 + $0x1a8] sm:$0xff] %vm761, %v754
          %789 = vst.msk [vmem:[%s760 + $0x1b0] sm:$0xff] %vm761, %v755
          %790 = vst.msk [vmem:[%s760 + $0x1c8] sm:$0xff] %vm761, %v756
          %791 = vst.msk [vmem:[%s760 + $0x1d0] sm:$0xff] %vm761, %v757
          %792 = vst.msk [vmem:[%s760 + $0x1e8] sm:$0xff] %vm761, %v758
          %793 = vst.msk [vmem:[%s760 + $0x1f0] sm:$0xff] %vm761, %v759
          %794 = vst.msk [vmem:[#allocation2] sm:$0xff] %vm761, 0.0
          %795 = vst.msk [vmem:[#allocation2 + $0x8] sm:$0xff] %vm761, 0.0
          %796 = vst.msk [vmem:[#allocation2 + $0x10] sm:$0xff] %vm761, 0.0
          %797 = vst.msk [vmem:[#allocation2 + $0x18] sm:$0xff] %vm761, 0.0
          %s798 = scalar_lea.vmem [#allocation2], 544
          %799 = vst.msk [vmem:[%s798] sm:$0xff] %vm761, 0.0
          %800 = vst.msk [vmem:[%s798 + $0x8] sm:$0xff] %vm761, 0.0
          %801 = vst.msk [vmem:[%s798 + $0x10] sm:$0xff] %vm761, 0.0
          %802 = vst.msk [vmem:[%s798 + $0x18] sm:$0xff] %vm761, 0.0
          %803 = vst.msk [vmem:[%s760] sm:$0xff] %vm761, 0.0
          %804 = vst.msk [vmem:[%s760 + $0x20] sm:$0xff] %vm761, 0.0
          %805 = vst.msk [vmem:[%s760 + $0x40] sm:$0xff] %vm761, 0.0
          %806 = vst.msk [vmem:[%s760 + $0x60] sm:$0xff] %vm761, 0.0
          %807 = vst.msk [vmem:[%s760 + $0x80] sm:$0xff] %vm761, 0.0
          %808 = vst.msk [vmem:[%s760 + $0xa0] sm:$0xff] %vm761, 0.0
          %809 = vst.msk [vmem:[%s760 + $0xc0] sm:$0xff] %vm761, 0.0
          %810 = vst.msk [vmem:[%s760 + $0xe0] sm:$0xff] %vm761, 0.0
          %811 = vst.msk [vmem:[%s760 + $0x100] sm:$0xff] %vm761, 0.0
          %812 = vst.msk [vmem:[%s760 + $0x120] sm:$0xff] %vm761, 0.0
          %813 = vst.msk [vmem:[%s760 + $0x140] sm:$0xff] %vm761, 0.0
          %814 = vst.msk [vmem:[%s760 + $0x160] sm:$0xff] %vm761, 0.0
          %815 = vst.msk [vmem:[%s760 + $0x180] sm:$0xff] %vm761, 0.0
          %816 = vst.msk [vmem:[%s760 + $0x1a0] sm:$0xff] %vm761, 0.0
          %817 = vst.msk [vmem:[%s760 + $0x1c0] sm:$0xff] %vm761, 0.0
          %818 = vst.msk [vmem:[%s760 + $0x1e0] sm:$0xff] %vm761, 0.0
          %819 = vst.msk [vmem:[%s760 + $0x18] sm:$0xff] %vm761, 0.0
          %820 = vst.msk [vmem:[%s760 + $0x38] sm:$0xff] %vm761, 0.0
          %821 = vst.msk [vmem:[%s760 + $0x58] sm:$0xff] %vm761, 0.0
          %822 = vst.msk [vmem:[%s760 + $0x78] sm:$0xff] %vm761, 0.0
          %823 = vst.msk [vmem:[%s760 + $0x98] sm:$0xff] %vm761, 0.0
          %824 = vst.msk [vmem:[%s760 + $0xb8] sm:$0xff] %vm761, 0.0
          %825 = vst.msk [vmem:[%s760 + $0xd8] sm:$0xff] %vm761, 0.0
          %826 = vst.msk [vmem:[%s760 + $0xf8] sm:$0xff] %vm761, 0.0
          %827 = vst.msk [vmem:[%s760 + $0x118] sm:$0xff] %vm761, 0.0
          %828 = vst.msk [vmem:[%s760 + $0x138] sm:$0xff] %vm761, 0.0
          %829 = vst.msk [vmem:[%s760 + $0x158] sm:$0xff] %vm761, 0.0
          %830 = vst.msk [vmem:[%s760 + $0x178] sm:$0xff] %vm761, 0.0
          %831 = vst.msk [vmem:[%s760 + $0x198] sm:$0xff] %vm761, 0.0
          %832 = vst.msk [vmem:[%s760 + $0x1b8] sm:$0xff] %vm761, 0.0
          %833 = vst.msk [vmem:[%s760 + $0x1d8] sm:$0xff] %vm761, 0.0
          %834 = vst.msk [vmem:[%s760 + $0x1f8] sm:$0xff] %vm761, 0.0
        $region64: #{tpu_custom_call.1} parent=59 // pred_fallthru
          _
        %s835 = smul.u32 %s29, 8
        %s836 = smul.u32 %s835, 32
        %s837 = scalar_lea.vmem [#allocation2], %s836
        %v838 = vld [vmem:[%s837] sm:$0xff]
        %v839 = vld [vmem:[%s837 + $0x8] sm:$0xff]
        %v840 = vld [vmem:[%s837 + $0x10] sm:$0xff]
        %v841 = vld [vmem:[%s837 + $0x18] sm:$0xff]
        %v842 = vld [vmem:[%s837 + $0x20] sm:$0xff]
        %v843 = vld [vmem:[%s837 + $0x28] sm:$0xff]
        %v844 = vld [vmem:[%s837 + $0x30] sm:$0xff]
        %v845 = vld [vmem:[%s837 + $0x38] sm:$0xff]
        %v846 = vld [vmem:[%s837 + $0x40] sm:$0xff]
        %v847 = vld [vmem:[%s837 + $0x48] sm:$0xff]
        %v848 = vld [vmem:[%s837 + $0x50] sm:$0xff]
        %v849 = vld [vmem:[%s837 + $0x58] sm:$0xff]
        %v850 = vld [vmem:[%s837 + $0x60] sm:$0xff]
        %v851 = vld [vmem:[%s837 + $0x68] sm:$0xff]
        %v852 = vld [vmem:[%s837 + $0x70] sm:$0xff]
        %v853 = vld [vmem:[%s837 + $0x78] sm:$0xff]
        %v854 = vld [vmem:[%s837 + $0x80] sm:$0xff]
        %v855 = vld [vmem:[%s837 + $0x88] sm:$0xff]
        %v856 = vld [vmem:[%s837 + $0x90] sm:$0xff]
        %v857 = vld [vmem:[%s837 + $0x98] sm:$0xff]
        %v858 = vld [vmem:[%s837 + $0xa0] sm:$0xff]
        %v859 = vld [vmem:[%s837 + $0xa8] sm:$0xff]
        %v860 = vld [vmem:[%s837 + $0xb0] sm:$0xff]
        %v861 = vld [vmem:[%s837 + $0xb8] sm:$0xff]
        %v862 = vld [vmem:[%s837 + $0xc0] sm:$0xff]
        %v863 = vld [vmem:[%s837 + $0xc8] sm:$0xff]
        %v864 = vld [vmem:[%s837 + $0xd0] sm:$0xff]
        %v865 = vld [vmem:[%s837 + $0xd8] sm:$0xff]
        %v866 = vld [vmem:[%s837 + $0xe0] sm:$0xff]
        %v867 = vld [vmem:[%s837 + $0xe8] sm:$0xff]
        %v868 = vld [vmem:[%s837 + $0xf0] sm:$0xff]
        %v869 = vld [vmem:[%s837 + $0xf8] sm:$0xff]
        %s870 = sadd.s32 %s835, 1
        %s871 = smul.u32 %s870, 32
        %s872 = scalar_lea.vmem [#allocation2], %s871
        %v873 = vld [vmem:[%s872] sm:$0xff]
        %v874 = vld [vmem:[%s872 + $0x8] sm:$0xff]
        %v875 = vld [vmem:[%s872 + $0x10] sm:$0xff]
        %v876 = vld [vmem:[%s872 + $0x18] sm:$0xff]
        %v877 = vld [vmem:[%s872 + $0x20] sm:$0xff]
        %v878 = vld [vmem:[%s872 + $0x28] sm:$0xff]
        %v879 = vld [vmem:[%s872 + $0x30] sm:$0xff]
        %v880 = vld [vmem:[%s872 + $0x38] sm:$0xff]
        %v881 = vld [vmem:[%s872 + $0x40] sm:$0xff]
        %v882 = vld [vmem:[%s872 + $0x48] sm:$0xff]
        %v883 = vld [vmem:[%s872 + $0x50] sm:$0xff]
        %v884 = vld [vmem:[%s872 + $0x58] sm:$0xff]
        %v885 = vld [vmem:[%s872 + $0x60] sm:$0xff]
        %v886 = vld [vmem:[%s872 + $0x68] sm:$0xff]
        %v887 = vld [vmem:[%s872 + $0x70] sm:$0xff]
        %v888 = vld [vmem:[%s872 + $0x78] sm:$0xff]
        %v889 = vld [vmem:[%s872 + $0x80] sm:$0xff]
        %v890 = vld [vmem:[%s872 + $0x88] sm:$0xff]
        %v891 = vld [vmem:[%s872 + $0x90] sm:$0xff]
        %v892 = vld [vmem:[%s872 + $0x98] sm:$0xff]
        %v893 = vld [vmem:[%s872 + $0xa0] sm:$0xff]
        %v894 = vld [vmem:[%s872 + $0xa8] sm:$0xff]
        %v895 = vld [vmem:[%s872 + $0xb0] sm:$0xff]
        %v896 = vld [vmem:[%s872 + $0xb8] sm:$0xff]
        %v897 = vld [vmem:[%s872 + $0xc0] sm:$0xff]
        %v898 = vld [vmem:[%s872 + $0xc8] sm:$0xff]
        %v899 = vld [vmem:[%s872 + $0xd0] sm:$0xff]
        %v900 = vld [vmem:[%s872 + $0xd8] sm:$0xff]
        %v901 = vld [vmem:[%s872 + $0xe0] sm:$0xff]
        %v902 = vld [vmem:[%s872 + $0xe8] sm:$0xff]
        %v903 = vld [vmem:[%s872 + $0xf0] sm:$0xff]
        %v904 = vld [vmem:[%s872 + $0xf8] sm:$0xff]
        %s905 = sadd.s32 %s835, 2
        %s906 = smul.u32 %s905, 32
        %s907 = scalar_lea.vmem [#allocation2], %s906
        %v908 = vld [vmem:[%s907] sm:$0xff]
        %v909 = vld [vmem:[%s907 + $0x8] sm:$0xff]
        %v910 = vld [vmem:[%s907 + $0x10] sm:$0xff]
        %v911 = vld [vmem:[%s907 + $0x18] sm:$0xff]
        %v912 = vld [vmem:[%s907 + $0x20] sm:$0xff]
        %v913 = vld [vmem:[%s907 + $0x28] sm:$0xff]
        %v914 = vld [vmem:[%s907 + $0x30] sm:$0xff]
        %v915 = vld [vmem:[%s907 + $0x38] sm:$0xff]
        %v916 = vld [vmem:[%s907 + $0x40] sm:$0xff]
        %v917 = vld [vmem:[%s907 + $0x48] sm:$0xff]
        %v918 = vld [vmem:[%s907 + $0x50] sm:$0xff]
        %v919 = vld [vmem:[%s907 + $0x58] sm:$0xff]
        %v920 = vld [vmem:[%s907 + $0x60] sm:$0xff]
        %v921 = vld [vmem:[%s907 + $0x68] sm:$0xff]
        %v922 = vld [vmem:[%s907 + $0x70] sm:$0xff]
        %v923 = vld [vmem:[%s907 + $0x78] sm:$0xff]
        %v924 = vld [vmem:[%s907 + $0x80] sm:$0xff]
        %v925 = vld [vmem:[%s907 + $0x88] sm:$0xff]
        %v926 = vld [vmem:[%s907 + $0x90] sm:$0xff]
        %v927 = vld [vmem:[%s907 + $0x98] sm:$0xff]
        %v928 = vld [vmem:[%s907 + $0xa0] sm:$0xff]
        %v929 = vld [vmem:[%s907 + $0xa8] sm:$0xff]
        %v930 = vld [vmem:[%s907 + $0xb0] sm:$0xff]
        %v931 = vld [vmem:[%s907 + $0xb8] sm:$0xff]
        %v932 = vld [vmem:[%s907 + $0xc0] sm:$0xff]
        %v933 = vld [vmem:[%s907 + $0xc8] sm:$0xff]
        %v934 = vld [vmem:[%s907 + $0xd0] sm:$0xff]
        %v935 = vld [vmem:[%s907 + $0xd8] sm:$0xff]
        %v936 = vld [vmem:[%s907 + $0xe0] sm:$0xff]
        %v937 = vld [vmem:[%s907 + $0xe8] sm:$0xff]
        %v938 = vld [vmem:[%s907 + $0xf0] sm:$0xff]
        %v939 = vld [vmem:[%s907 + $0xf8] sm:$0xff]
        %972 = vrot.lane.b32.xlu0 %v873, 32
        %v973 = vpop.permute.xlu0 %972
        %974 = vrot.lane.b32.xlu0 %v874, 32
        %v975 = vpop.permute.xlu0 %974
        %976 = vrot.lane.b32.xlu0 %v875, 32
        %v977 = vpop.permute.xlu0 %976
        %978 = vrot.lane.b32.xlu0 %v876, 32
        %v979 = vpop.permute.xlu0 %978
        %980 = vrot.lane.b32.xlu0 %v877, 32
        %v981 = vpop.permute.xlu0 %980
        %982 = vrot.lane.b32.xlu0 %v878, 32
        %v983 = vpop.permute.xlu0 %982
        %984 = vrot.lane.b32.xlu0 %v879, 32
        %v985 = vpop.permute.xlu0 %984
        %986 = vrot.lane.b32.xlu0 %v880, 32
        %v987 = vpop.permute.xlu0 %986
        %988 = vrot.lane.b32.xlu0 %v881, 32
        %v989 = vpop.permute.xlu0 %988
        %990 = vrot.lane.b32.xlu0 %v882, 32
        %v991 = vpop.permute.xlu0 %990
        %992 = vrot.lane.b32.xlu0 %v883, 32
        %v993 = vpop.permute.xlu0 %992
        %994 = vrot.lane.b32.xlu0 %v884, 32
        %v995 = vpop.permute.xlu0 %994
        %996 = vrot.lane.b32.xlu0 %v885, 32
        %v997 = vpop.permute.xlu0 %996
        %998 = vrot.lane.b32.xlu0 %v886, 32
        %v999 = vpop.permute.xlu0 %998
        %1000 = vrot.lane.b32.xlu0 %v887, 32
        %v1001 = vpop.permute.xlu0 %1000
        %1002 = vrot.lane.b32.xlu0 %v888, 32
        %v1003 = vpop.permute.xlu0 %1002
        %1004 = vrot.lane.b32.xlu0 %v889, 32
        %v1005 = vpop.permute.xlu0 %1004
        %1006 = vrot.lane.b32.xlu0 %v890, 32
        %v1007 = vpop.permute.xlu0 %1006
        %1008 = vrot.lane.b32.xlu0 %v891, 32
        %v1009 = vpop.permute.xlu0 %1008
        %1010 = vrot.lane.b32.xlu0 %v892, 32
        %v1011 = vpop.permute.xlu0 %1010
        %1012 = vrot.lane.b32.xlu0 %v893, 32
        %v1013 = vpop.permute.xlu0 %1012
        %1014 = vrot.lane.b32.xlu0 %v894, 32
        %v1015 = vpop.permute.xlu0 %1014
        %1016 = vrot.lane.b32.xlu0 %v895, 32
        %v1017 = vpop.permute.xlu0 %1016
        %1018 = vrot.lane.b32.xlu0 %v896, 32
        %v1019 = vpop.permute.xlu0 %1018
        %1020 = vrot.lane.b32.xlu0 %v897, 32
        %v1021 = vpop.permute.xlu0 %1020
        %1022 = vrot.lane.b32.xlu0 %v898, 32
        %v1023 = vpop.permute.xlu0 %1022
        %1024 = vrot.lane.b32.xlu0 %v899, 32
        %v1025 = vpop.permute.xlu0 %1024
        %1026 = vrot.lane.b32.xlu0 %v900, 32
        %v1027 = vpop.permute.xlu0 %1026
        %1028 = vrot.lane.b32.xlu0 %v901, 32
        %v1029 = vpop.permute.xlu0 %1028
        %1030 = vrot.lane.b32.xlu0 %v902, 32
        %v1031 = vpop.permute.xlu0 %1030
        %1032 = vrot.lane.b32.xlu0 %v903, 32
        %v1033 = vpop.permute.xlu0 %1032
        %1034 = vrot.lane.b32.xlu0 %v904, 32
        %v1035 = vpop.permute.xlu0 %1034
        %1100 = vrot.lane.b32.xlu0 %v908, 64
        %v1101 = vpop.permute.xlu0 %1100
        %1102 = vrot.lane.b32.xlu0 %v909, 64
        %v1103 = vpop.permute.xlu0 %1102
        %1104 = vrot.lane.b32.xlu0 %v910, 64
        %v1105 = vpop.permute.xlu0 %1104
        %1106 = vrot.lane.b32.xlu0 %v911, 64
        %v1107 = vpop.permute.xlu0 %1106
        %1108 = vrot.lane.b32.xlu0 %v912, 64
        %v1109 = vpop.permute.xlu0 %1108
        %1110 = vrot.lane.b32.xlu0 %v913, 64
        %v1111 = vpop.permute.xlu0 %1110
        %1112 = vrot.lane.b32.xlu0 %v914, 64
        %v1113 = vpop.permute.xlu0 %1112
        %1114 = vrot.lane.b32.xlu0 %v915, 64
        %v1115 = vpop.permute.xlu0 %1114
        %1116 = vrot.lane.b32.xlu0 %v916, 64
        %v1117 = vpop.permute.xlu0 %1116
        %1118 = vrot.lane.b32.xlu0 %v917, 64
        %v1119 = vpop.permute.xlu0 %1118
        %1120 = vrot.lane.b32.xlu0 %v918, 64
        %v1121 = vpop.permute.xlu0 %1120
        %1122 = vrot.lane.b32.xlu0 %v919, 64
        %v1123 = vpop.permute.xlu0 %1122
        %1124 = vrot.lane.b32.xlu0 %v920, 64
        %v1125 = vpop.permute.xlu0 %1124
        %1126 = vrot.lane.b32.xlu0 %v921, 64
        %v1127 = vpop.permute.xlu0 %1126
        %1128 = vrot.lane.b32.xlu0 %v922, 64
        %v1129 = vpop.permute.xlu0 %1128
        %1130 = vrot.lane.b32.xlu0 %v923, 64
        %v1131 = vpop.permute.xlu0 %1130
        %1132 = vrot.lane.b32.xlu0 %v924, 64
        %v1133 = vpop.permute.xlu0 %1132
        %1134 = vrot.lane.b32.xlu0 %v925, 64
        %v1135 = vpop.permute.xlu0 %1134
        %1136 = vrot.lane.b32.xlu0 %v926, 64
        %v1137 = vpop.permute.xlu0 %1136
        %1138 = vrot.lane.b32.xlu0 %v927, 64
        %v1139 = vpop.permute.xlu0 %1138
        %1140 = vrot.lane.b32.xlu0 %v928, 64
        %v1141 = vpop.permute.xlu0 %1140
        %1142 = vrot.lane.b32.xlu0 %v929, 64
        %v1143 = vpop.permute.xlu0 %1142
        %1144 = vrot.lane.b32.xlu0 %v930, 64
        %v1145 = vpop.permute.xlu0 %1144
        %1146 = vrot.lane.b32.xlu0 %v931, 64
        %v1147 = vpop.permute.xlu0 %1146
        %1148 = vrot.lane.b32.xlu0 %v932, 64
        %v1149 = vpop.permute.xlu0 %1148
        %1150 = vrot.lane.b32.xlu0 %v933, 64
        %v1151 = vpop.permute.xlu0 %1150
        %1152 = vrot.lane.b32.xlu0 %v934, 64
        %v1153 = vpop.permute.xlu0 %1152
        %1154 = vrot.lane.b32.xlu0 %v935, 64
        %v1155 = vpop.permute.xlu0 %1154
        %1156 = vrot.lane.b32.xlu0 %v936, 64
        %v1157 = vpop.permute.xlu0 %1156
        %1158 = vrot.lane.b32.xlu0 %v937, 64
        %v1159 = vpop.permute.xlu0 %1158
        %1160 = vrot.lane.b32.xlu0 %v938, 64
        %v1161 = vpop.permute.xlu0 %1160
        %1162 = vrot.lane.b32.xlu0 %v939, 64
        %v1163 = vpop.permute.xlu0 %1162
        %vm1196 = vcmask 261120
        %v1197 = vsel %vm1196, %v838, %v973
        %v1198 = vsel %vm1196, %v839, %v975
        %v1199 = vsel %vm1196, %v840, %v977
        %v1200 = vsel %vm1196, %v841, %v979
        %v1201 = vsel %vm1196, %v842, %v981
        %v1202 = vsel %vm1196, %v843, %v983
        %v1203 = vsel %vm1196, %v844, %v985
        %v1204 = vsel %vm1196, %v845, %v987
        %v1205 = vsel %vm1196, %v846, %v989
        %v1206 = vsel %vm1196, %v847, %v991
        %v1207 = vsel %vm1196, %v848, %v993
        %v1208 = vsel %vm1196, %v849, %v995
        %v1209 = vsel %vm1196, %v850, %v997
        %v1210 = vsel %vm1196, %v851, %v999
        %v1211 = vsel %vm1196, %v852, %v1001
        %v1212 = vsel %vm1196, %v853, %v1003
        %v1213 = vsel %vm1196, %v854, %v1005
        %v1214 = vsel %vm1196, %v855, %v1007
        %v1215 = vsel %vm1196, %v856, %v1009
        %v1216 = vsel %vm1196, %v857, %v1011
        %v1217 = vsel %vm1196, %v858, %v1013
        %v1218 = vsel %vm1196, %v859, %v1015
        %v1219 = vsel %vm1196, %v860, %v1017
        %v1220 = vsel %vm1196, %v861, %v1019
        %v1221 = vsel %vm1196, %v862, %v1021
        %v1222 = vsel %vm1196, %v863, %v1023
        %v1223 = vsel %vm1196, %v864, %v1025
        %v1224 = vsel %vm1196, %v865, %v1027
        %v1225 = vsel %vm1196, %v866, %v1029
        %v1226 = vsel %vm1196, %v867, %v1031
        %v1227 = vsel %vm1196, %v868, %v1033
        %v1228 = vsel %vm1196, %v869, %v1035
        %vm1229 = vcmask 523264
        %v1230 = vsel %vm1229, %v1197, %v1101
        %v1231 = vsel %vm1229, %v1198, %v1103
        %v1232 = vsel %vm1229, %v1199, %v1105
        %v1233 = vsel %vm1229, %v1200, %v1107
        %v1234 = vsel %vm1229, %v1201, %v1109
        %v1235 = vsel %vm1229, %v1202, %v1111
        %v1236 = vsel %vm1229, %v1203, %v1113
        %v1237 = vsel %vm1229, %v1204, %v1115
        %v1238 = vsel %vm1229, %v1205, %v1117
        %v1239 = vsel %vm1229, %v1206, %v1119
        %v1240 = vsel %vm1229, %v1207, %v1121
        %v1241 = vsel %vm1229, %v1208, %v1123
        %v1242 = vsel %vm1229, %v1209, %v1125
        %v1243 = vsel %vm1229, %v1210, %v1127
        %v1244 = vsel %vm1229, %v1211, %v1129
        %v1245 = vsel %vm1229, %v1212, %v1131
        %v1246 = vsel %vm1229, %v1213, %v1133
        %v1247 = vsel %vm1229, %v1214, %v1135
        %v1248 = vsel %vm1229, %v1215, %v1137
        %v1249 = vsel %vm1229, %v1216, %v1139
        %v1250 = vsel %vm1229, %v1217, %v1141
        %v1251 = vsel %vm1229, %v1218, %v1143
        %v1252 = vsel %vm1229, %v1219, %v1145
        %v1253 = vsel %vm1229, %v1220, %v1147
        %v1254 = vsel %vm1229, %v1221, %v1149
        %v1255 = vsel %vm1229, %v1222, %v1151
        %v1256 = vsel %vm1229, %v1223, %v1153
        %v1257 = vsel %vm1229, %v1224, %v1155
        %v1258 = vsel %vm1229, %v1225, %v1157
        %v1259 = vsel %vm1229, %v1226, %v1159
        %v1260 = vsel %vm1229, %v1227, %v1161
        %v1261 = vsel %vm1229, %v1228, %v1163
        %vm1286 = vcmask 1040384
        %v1287 = vrot.slane %v1230, 7
        %v1288 = vrot.slane %v1231, 7
        %v1289 = vsel %vm1286, %v1287, %v1288
        %v1290 = vrot.slane %v1232, 7
        %v1291 = vsel %vm1286, %v1288, %v1290
        %v1292 = vrot.slane %v1234, 7
        %v1293 = vrot.slane %v1235, 7
        %v1294 = vsel %vm1286, %v1292, %v1293
        %v1295 = vrot.slane %v1236, 7
        %v1296 = vsel %vm1286, %v1293, %v1295
        %v1297 = vrot.slane %v1238, 7
        %v1298 = vrot.slane %v1239, 7
        %v1299 = vsel %vm1286, %v1297, %v1298
        %v1300 = vrot.slane %v1240, 7
        %v1301 = vsel %vm1286, %v1298, %v1300
        %v1302 = vrot.slane %v1242, 7
        %v1303 = vrot.slane %v1243, 7
        %v1304 = vsel %vm1286, %v1302, %v1303
        %v1305 = vrot.slane %v1244, 7
        %v1306 = vsel %vm1286, %v1303, %v1305
        %v1307 = vrot.slane %v1246, 7
        %v1308 = vrot.slane %v1247, 7
        %v1309 = vsel %vm1286, %v1307, %v1308
        %v1310 = vrot.slane %v1248, 7
        %v1311 = vsel %vm1286, %v1308, %v1310
        %v1312 = vrot.slane %v1250, 7
        %v1313 = vrot.slane %v1251, 7
        %v1314 = vsel %vm1286, %v1312, %v1313
        %v1315 = vrot.slane %v1252, 7
        %v1316 = vsel %vm1286, %v1313, %v1315
        %v1317 = vrot.slane %v1254, 7
        %v1318 = vrot.slane %v1255, 7
        %v1319 = vsel %vm1286, %v1317, %v1318
        %v1320 = vrot.slane %v1256, 7
        %v1321 = vsel %vm1286, %v1318, %v1320
        %v1322 = vrot.slane %v1258, 7
        %v1323 = vrot.slane %v1259, 7
        %v1324 = vsel %vm1286, %v1322, %v1323
        %v1325 = vrot.slane %v1260, 7
        %v1326 = vsel %vm1286, %v1323, %v1325
        %v1327 = vld [vmem:[%s4] sm:$0xff]
        %v1328 = vld [vmem:[%s4 + $0x8] sm:$0xff]
        %v1329 = vld [vmem:[%s4 + $0x10] sm:$0xff]
        %v1330 = vld [vmem:[%s4 + $0x18] sm:$0xff]
        %v1331 = vld [vmem:[%s4 + $0x20] sm:$0xff]
        %v1332 = vld [vmem:[%s4 + $0x28] sm:$0xff]
        %v1333 = vld [vmem:[%s4 + $0x30] sm:$0xff]
        %v1334 = vld [vmem:[%s4 + $0x38] sm:$0xff]
        %v1335 = vld [vmem:[%s4 + $0x40] sm:$0xff]
        %v1336 = vld [vmem:[%s4 + $0x48] sm:$0xff]
        %v1337 = vld [vmem:[%s4 + $0x50] sm:$0xff]
        %v1338 = vld [vmem:[%s4 + $0x58] sm:$0xff]
        %s1339 = scalar_lea.vmem %s4, 96
        %v1340 = vld [vmem:[%s1339] sm:$0xff]
        %v1341 = vld [vmem:[%s1339 + $0x8] sm:$0xff]
        %v1342 = vld [vmem:[%s1339 + $0x10] sm:$0xff]
        %v1343 = vld [vmem:[%s1339 + $0x18] sm:$0xff]
        %v1344 = vld [vmem:[%s1339 + $0x20] sm:$0xff]
        %v1345 = vld [vmem:[%s1339 + $0x28] sm:$0xff]
        %v1346 = vld [vmem:[%s1339 + $0x30] sm:$0xff]
        %v1347 = vld [vmem:[%s1339 + $0x38] sm:$0xff]
        %v1348 = vld [vmem:[%s1339 + $0x40] sm:$0xff]
        %v1349 = vld [vmem:[%s1339 + $0x48] sm:$0xff]
        %v1350 = vld [vmem:[%s1339 + $0x50] sm:$0xff]
        %v1351 = vld [vmem:[%s1339 + $0x58] sm:$0xff]
        %vm1352 = vcmask 785408
        %v1353 = vsel %vm1352, %v1231, 0
        %v1355 = vsel %vm1352, %v1232, 0
        %v1357 = vsel %vm1352, %v1235, 0
        %v1359 = vsel %vm1352, %v1236, 0
        %v1361 = vsel %vm1352, %v1239, 0
        %v1363 = vsel %vm1352, %v1240, 0
        %v1365 = vsel %vm1352, %v1243, 0
        %v1367 = vsel %vm1352, %v1244, 0
        %v1369 = vsel %vm1352, %v1247, 0
        %v1371 = vsel %vm1352, %v1248, 0
        %v1373 = vsel %vm1352, %v1251, 0
        %v1375 = vsel %vm1352, %v1252, 0
        %v1377 = vsel %vm1352, %v1255, 0
        %v1379 = vsel %vm1352, %v1256, 0
        %v1381 = vsel %vm1352, %v1259, 0
        %v1383 = vsel %vm1352, %v1260, 0
        %1385 = vmatprep.subr.mxu0 0.0
        %1386 = vmatpush1.msra.mxu0 %v1340
        %1387 = vmatprep.subr.mxu0 0.0
        %1388 = vmatpush1.msra.mxu0 %v1341
        %1389 = vmatprep.subr.mxu0 0.0
        %1390 = vmatpush1.msra.mxu0 %v1342
        %1391 = vmatprep.subr.mxu0 0.0
        %1392 = vmatpush1.msra.mxu0 %v1343
        %1393 = vmatprep.subr.mxu0 0.0
        %1394 = vmatpush1.msra.mxu0 %v1344
        %1395 = vmatprep.subr.mxu0 0.0
        %1396 = vmatpush1.msra.mxu0 %v1345
        %1397 = vmatprep.subr.mxu0 0.0
        %1398 = vmatpush1.msra.mxu0 %v1346
        %1399 = vmatprep.subr.mxu0 0.0
        %1400 = vmatpush1.msra.mxu0 %v1347
        %1401 = vmatprep.subr.mxu0 0.0
        %1402 = vmatpush1.msra.mxu0 %v1348
        %1403 = vmatprep.subr.mxu0 0.0
        %1404 = vmatpush1.msra.mxu0 %v1349
        %1405 = vmatprep.subr.mxu0 0.0
        %1406 = vmatpush1.msra.mxu0 %v1350
        %1407 = vmatprep.subr.mxu0 0.0
        %1408 = vmatpush1.msra.mxu0 %v1351
        %1409 = vmatprep.subr.mxu0 0.0
        %1410 = vmatpush1.msra.mxu0 0.0
        %1411 = vmatprep.subr.mxu0 0.0
        %1412 = vmatpush1.msra.mxu0 0.0
        %1413 = vmatprep.subr.mxu0 0.0
        %1414 = vmatpush1.msra.mxu0 0.0
        %1415 = vmatprep.subr.mxu0 0.0
        %1416 = vmatpush1.msra.mxu0 0.0
        %1417 = vmatprep.subr.mxu0 0.0
        %1418 = vmatpush1.msra.mxu0 0.0
        %1419 = vmatprep.subr.mxu0 0.0
        %1420 = vmatpush1.msra.mxu0 0.0
        %1421 = vmatprep.subr.mxu0 0.0
        %1422 = vmatpush1.msra.mxu0 0.0
        %1423 = vmatprep.subr.mxu0 0.0
        %1424 = vmatpush1.msra.mxu0 0.0
        %1425 = vmatprep.subr.mxu0 0.0
        %1426 = vmatpush1.msra.mxu0 0.0
        %1427 = vmatprep.subr.mxu0 0.0
        %1428 = vmatpush1.msra.mxu0 0.0
        %1429 = vmatprep.subr.mxu0 0.0
        %1430 = vmatpush1.msra.mxu0 0.0
        %1431 = vmatprep.subr.mxu0 0.0
        %1432 = vmatpush1.msra.mxu0 0.0
        %1433 = vmatprep.subr.mxu0 0.0
        %1434 = vmatpush1.msra.mxu0 0.0
        %1435 = vmatprep.subr.mxu0 0.0
        %1436 = vmatpush1.msra.mxu0 0.0
        %1437 = vmatprep.subr.mxu0 0.0
        %1438 = vmatpush1.msra.mxu0 0.0
        %1439 = vmatprep.subr.mxu0 0.0
        %1440 = vmatpush1.msra.mxu0 0.0
        %1441 = vmatprep.subr.mxu0 0.0
        %1442 = vmatpush1.msra.mxu0 0.0
        %1443 = vmatprep.subr.mxu0 0.0
        %1444 = vmatpush1.msra.mxu0 0.0
        %1445 = vmatprep.subr.mxu0 0.0
        %1446 = vmatpush1.msra.mxu0 0.0
        %1447 = vmatprep.subr.mxu0 0.0
        %1448 = vmatpush1.msra.mxu0 0.0
        %1449 = vmatprep.mubr.f32.mxu0 0.0
        %1450 = vmatmul.mubr.f32.gmra.mrb[0].mxu0 %v1353
        %v1451 = vpop.f32.mrb[0].mxu0
        %v1452 = vadd.f32 0.0, %v1451
        %v1453 = vpop.f32.mrb[0].mxu0
        %1454 = vmatprep.mubr.f32.mxu0 0.0
        %1455 = vmatmul.mubr.f32.gmra.mrb[0].mxu0 %v1355
        %v1456 = vpop.f32.mrb[0].mxu0
        %v1457 = vadd.f32 0.0, %v1456
        %v1458 = vpop.f32.mrb[0].mxu0
        %1459 = vmatprep.mubr.f32.mxu0 0.0
        %1460 = vmatmul.mubr.f32.gmra.mrb[0].mxu0 %v1357
        %v1461 = vpop.f32.mrb[0].mxu0
        %v1462 = vadd.f32 0.0, %v1461
        %v1463 = vpop.f32.mrb[0].mxu0
        %1464 = vmatprep.mubr.f32.mxu0 0.0
        %1465 = vmatmul.mubr.f32.gmra.mrb[0].mxu0 %v1359
        %v1466 = vpop.f32.mrb[0].mxu0
        %v1467 = vadd.f32 0.0, %v1466
        %v1468 = vpop.f32.mrb[0].mxu0
        %1469 = vmatprep.mubr.f32.mxu0 0.0
        %1470 = vmatmul.mubr.f32.gmra.mrb[0].mxu0 %v1361
        %v1471 = vpop.f32.mrb[0].mxu0
        %v1472 = vadd.f32 0.0, %v1471
        %v1473 = vpop.f32.mrb[0].mxu0
        %1474 = vmatprep.mubr.f32.mxu0 0.0
        %1475 = vmatmul.mubr.f32.gmra.mrb[0].mxu0 %v1363
        %v1476 = vpop.f32.mrb[0].mxu0
        %v1477 = vadd.f32 0.0, %v1476
        %v1478 = vpop.f32.mrb[0].mxu0
        %1479 = vmatprep.mubr.f32.mxu0 0.0
        %1480 = vmatmul.mubr.f32.gmra.mrb[0].mxu0 %v1365
        %v1481 = vpop.f32.mrb[0].mxu0
        %v1482 = vadd.f32 0.0, %v1481
        %v1483 = vpop.f32.mrb[0].mxu0
        %1484 = vmatprep.mubr.f32.mxu0 0.0
        %1485 = vmatmul.mubr.f32.gmra.mrb[0].mxu0 %v1367
        %v1486 = vpop.f32.mrb[0].mxu0
        %v1487 = vadd.f32 0.0, %v1486
        %v1488 = vpop.f32.mrb[0].mxu0
        %1489 = vmatprep.mubr.f32.mxu0 0.0
        %1490 = vmatmul.mubr.f32.gmra.mrb[0].mxu0 %v1369
        %v1491 = vpop.f32.mrb[0].mxu0
        %v1492 = vadd.f32 0.0, %v1491
        %v1493 = vpop.f32.mrb[0].mxu0
        %1494 = vmatprep.mubr.f32.mxu0 0.0
        %1495 = vmatmul.mubr.f32.gmra.mrb[0].mxu0 %v1371
        %v1496 = vpop.f32.mrb[0].mxu0
        %v1497 = vadd.f32 0.0, %v1496
        %v1498 = vpop.f32.mrb[0].mxu0
        %1499 = vmatprep.mubr.f32.mxu0 0.0
        %1500 = vmatmul.mubr.f32.gmra.mrb[0].mxu0 %v1373
        %v1501 = vpop.f32.mrb[0].mxu0
        %v1502 = vadd.f32 0.0, %v1501
        %v1503 = vpop.f32.mrb[0].mxu0
        %1504 = vmatprep.mubr.f32.mxu0 0.0
        %1505 = vmatmul.mubr.f32.gmra.mrb[0].mxu0 %v1375
        %v1506 = vpop.f32.mrb[0].mxu0
        %v1507 = vadd.f32 0.0, %v1506
        %v1508 = vpop.f32.mrb[0].mxu0
        %1509 = vmatprep.mubr.f32.mxu0 0.0
        %1510 = vmatmul.mubr.f32.gmra.mrb[0].mxu0 %v1377
        %v1511 = vpop.f32.mrb[0].mxu0
        %v1512 = vadd.f32 0.0, %v1511
        %v1513 = vpop.f32.mrb[0].mxu0
        %1514 = vmatprep.mubr.f32.mxu0 0.0
        %1515 = vmatmul.mubr.f32.gmra.mrb[0].mxu0 %v1379
        %v1516 = vpop.f32.mrb[0].mxu0
        %v1517 = vadd.f32 0.0, %v1516
        %v1518 = vpop.f32.mrb[0].mxu0
        %1519 = vmatprep.mubr.f32.mxu0 0.0
        %1520 = vmatmul.mubr.f32.gmra.mrb[0].mxu0 %v1381
        %v1521 = vpop.f32.mrb[0].mxu0
        %v1522 = vadd.f32 0.0, %v1521
        %v1523 = vpop.f32.mrb[0].mxu0
        %1524 = vmatprep.mubr.f32.mxu0 0.0
        %1525 = vmatmul.mubr.f32.gmra.mrb[0].mxu0 %v1383
        %v1526 = vpop.f32.mrb[0].mxu0
        %v1527 = vadd.f32 0.0, %v1526
        %v1528 = vpop.f32.mrb[0].mxu0
        %1529 = vdwg.mxu0
        %v1530 = vsel %vm1352, %v1289, 0
        %v1532 = vsel %vm1352, %v1291, 0
        %v1534 = vsel %vm1352, %v1294, 0
        %v1536 = vsel %vm1352, %v1296, 0
        %v1538 = vsel %vm1352, %v1299, 0
        %v1540 = vsel %vm1352, %v1301, 0
        %v1542 = vsel %vm1352, %v1304, 0
        %v1544 = vsel %vm1352, %v1306, 0
        %v1546 = vsel %vm1352, %v1309, 0
        %v1548 = vsel %vm1352, %v1311, 0
        %v1550 = vsel %vm1352, %v1314, 0
        %v1552 = vsel %vm1352, %v1316, 0
        %v1554 = vsel %vm1352, %v1319, 0
        %v1556 = vsel %vm1352, %v1321, 0
        %v1558 = vsel %vm1352, %v1324, 0
        %v1560 = vsel %vm1352, %v1326, 0
        %1562 = vmatprep.subr.mxu0 0.0
        %1563 = vmatpush1.msra.mxu0 %v1327
        %1564 = vmatprep.subr.mxu0 0.0
        %1565 = vmatpush1.msra.mxu0 %v1328
        %1566 = vmatprep.subr.mxu0 0.0
        %1567 = vmatpush1.msra.mxu0 %v1329
        %1568 = vmatprep.subr.mxu0 0.0
        %1569 = vmatpush1.msra.mxu0 %v1330
        %1570 = vmatprep.subr.mxu0 0.0
        %1571 = vmatpush1.msra.mxu0 %v1331
        %1572 = vmatprep.subr.mxu0 0.0
        %1573 = vmatpush1.msra.mxu0 %v1332
        %1574 = vmatprep.subr.mxu0 0.0
        %1575 = vmatpush1.msra.mxu0 %v1333
        %1576 = vmatprep.subr.mxu0 0.0
        %1577 = vmatpush1.msra.mxu0 %v1334
        %1578 = vmatprep.subr.mxu0 0.0
        %1579 = vmatpush1.msra.mxu0 %v1335
        %1580 = vmatprep.subr.mxu0 0.0
        %1581 = vmatpush1.msra.mxu0 %v1336
        %1582 = vmatprep.subr.mxu0 0.0
        %1583 = vmatpush1.msra.mxu0 %v1337
        %1584 = vmatprep.subr.mxu0 0.0
        %1585 = vmatpush1.msra.mxu0 %v1338
        %1586 = vmatprep.subr.mxu0 0.0
        %1587 = vmatpush1.msra.mxu0 0.0
        %1588 = vmatprep.subr.mxu0 0.0
        %1589 = vmatpush1.msra.mxu0 0.0
        %1590 = vmatprep.subr.mxu0 0.0
        %1591 = vmatpush1.msra.mxu0 0.0
        %1592 = vmatprep.subr.mxu0 0.0
        %1593 = vmatpush1.msra.mxu0 0.0
        %1594 = vmatprep.subr.mxu0 0.0
        %1595 = vmatpush1.msra.mxu0 0.0
        %1596 = vmatprep.subr.mxu0 0.0
        %1597 = vmatpush1.msra.mxu0 0.0
        %1598 = vmatprep.subr.mxu0 0.0
        %1599 = vmatpush1.msra.mxu0 0.0
        %1600 = vmatprep.subr.mxu0 0.0
        %1601 = vmatpush1.msra.mxu0 0.0
        %1602 = vmatprep.subr.mxu0 0.0
        %1603 = vmatpush1.msra.mxu0 0.0
        %1604 = vmatprep.subr.mxu0 0.0
        %1605 = vmatpush1.msra.mxu0 0.0
        %1606 = vmatprep.subr.mxu0 0.0
        %1607 = vmatpush1.msra.mxu0 0.0
        %1608 = vmatprep.subr.mxu0 0.0
        %1609 = vmatpush1.msra.mxu0 0.0
        %1610 = vmatprep.subr.mxu0 0.0
        %1611 = vmatpush1.msra.mxu0 0.0
        %1612 = vmatprep.subr.mxu0 0.0
        %1613 = vmatpush1.msra.mxu0 0.0
        %1614 = vmatprep.subr.mxu0 0.0
        %1615 = vmatpush1.msra.mxu0 0.0
        %1616 = vmatprep.subr.mxu0 0.0
        %1617 = vmatpush1.msra.mxu0 0.0
        %1618 = vmatprep.subr.mxu0 0.0
        %1619 = vmatpush1.msra.mxu0 0.0
        %1620 = vmatprep.subr.mxu0 0.0
        %1621 = vmatpush1.msra.mxu0 0.0
        %1622 = vmatprep.subr.mxu0 0.0
        %1623 = vmatpush1.msra.mxu0 0.0
        %1624 = vmatprep.subr.mxu0 0.0
        %1625 = vmatpush1.msra.mxu0 0.0
        %1626 = vmatprep.mubr.f32.mxu0 0.0
        %1627 = vmatmul.mubr.f32.gmra.mrb[0].mxu0 %v1530
        %v1628 = vpop.f32.mrb[0].mxu0
        %v1629 = vadd.f32 %v1452, %v1628
        %v1630 = vpop.f32.mrb[0].mxu0
        %1631 = vmatprep.mubr.f32.mxu0 0.0
        %1632 = vmatmul.mubr.f32.gmra.mrb[0].mxu0 %v1532
        %v1633 = vpop.f32.mrb[0].mxu0
        %v1634 = vadd.f32 %v1457, %v1633
        %v1635 = vpop.f32.mrb[0].mxu0
        %1636 = vmatprep.mubr.f32.mxu0 0.0
        %1637 = vmatmul.mubr.f32.gmra.mrb[0].mxu0 %v1534
        %v1638 = vpop.f32.mrb[0].mxu0
        %v1639 = vadd.f32 %v1462, %v1638
        %v1640 = vpop.f32.mrb[0].mxu0
        %1641 = vmatprep.mubr.f32.mxu0 0.0
        %1642 = vmatmul.mubr.f32.gmra.mrb[0].mxu0 %v1536
        %v1643 = vpop.f32.mrb[0].mxu0
        %v1644 = vadd.f32 %v1467, %v1643
        %v1645 = vpop.f32.mrb[0].mxu0
        %1646 = vmatprep.mubr.f32.mxu0 0.0
        %1647 = vmatmul.mubr.f32.gmra.mrb[0].mxu0 %v1538
        %v1648 = vpop.f32.mrb[0].mxu0
        %v1649 = vadd.f32 %v1472, %v1648
        %v1650 = vpop.f32.mrb[0].mxu0
        %1651 = vmatprep.mubr.f32.mxu0 0.0
        %1652 = vmatmul.mubr.f32.gmra.mrb[0].mxu0 %v1540
        %v1653 = vpop.f32.mrb[0].mxu0
        %v1654 = vadd.f32 %v1477, %v1653
        %v1655 = vpop.f32.mrb[0].mxu0
        %1656 = vmatprep.mubr.f32.mxu0 0.0
        %1657 = vmatmul.mubr.f32.gmra.mrb[0].mxu0 %v1542
        %v1658 = vpop.f32.mrb[0].mxu0
        %v1659 = vadd.f32 %v1482, %v1658
        %v1660 = vpop.f32.mrb[0].mxu0
        %1661 = vmatprep.mubr.f32.mxu0 0.0
        %1662 = vmatmul.mubr.f32.gmra.mrb[0].mxu0 %v1544
        %v1663 = vpop.f32.mrb[0].mxu0
        %v1664 = vadd.f32 %v1487, %v1663
        %v1665 = vpop.f32.mrb[0].mxu0
        %1666 = vmatprep.mubr.f32.mxu0 0.0
        %1667 = vmatmul.mubr.f32.gmra.mrb[0].mxu0 %v1546
        %v1668 = vpop.f32.mrb[0].mxu0
        %v1669 = vadd.f32 %v1492, %v1668
        %v1670 = vpop.f32.mrb[0].mxu0
        %1671 = vmatprep.mubr.f32.mxu0 0.0
        %1672 = vmatmul.mubr.f32.gmra.mrb[0].mxu0 %v1548
        %v1673 = vpop.f32.mrb[0].mxu0
        %v1674 = vadd.f32 %v1497, %v1673
        %v1675 = vpop.f32.mrb[0].mxu0
        %1676 = vmatprep.mubr.f32.mxu0 0.0
        %1677 = vmatmul.mubr.f32.gmra.mrb[0].mxu0 %v1550
        %v1678 = vpop.f32.mrb[0].mxu0
        %v1679 = vadd.f32 %v1502, %v1678
        %v1680 = vpop.f32.mrb[0].mxu0
        %1681 = vmatprep.mubr.f32.mxu0 0.0
        %1682 = vmatmul.mubr.f32.gmra.mrb[0].mxu0 %v1552
        %v1683 = vpop.f32.mrb[0].mxu0
        %v1684 = vadd.f32 %v1507, %v1683
        %v1685 = vpop.f32.mrb[0].mxu0
        %1686 = vmatprep.mubr.f32.mxu0 0.0
        %1687 = vmatmul.mubr.f32.gmra.mrb[0].mxu0 %v1554
        %v1688 = vpop.f32.mrb[0].mxu0
        %v1689 = vadd.f32 %v1512, %v1688
        %v1690 = vpop.f32.mrb[0].mxu0
        %1691 = vmatprep.mubr.f32.mxu0 0.0
        %1692 = vmatmul.mubr.f32.gmra.mrb[0].mxu0 %v1556
        %v1693 = vpop.f32.mrb[0].mxu0
        %v1694 = vadd.f32 %v1517, %v1693
        %v1695 = vpop.f32.mrb[0].mxu0
        %1696 = vmatprep.mubr.f32.mxu0 0.0
        %1697 = vmatmul.mubr.f32.gmra.mrb[0].mxu0 %v1558
        %v1698 = vpop.f32.mrb[0].mxu0
        %v1699 = vadd.f32 %v1522, %v1698
        %v1700 = vpop.f32.mrb[0].mxu0
        %1701 = vmatprep.mubr.f32.mxu0 0.0
        %1702 = vmatmul.mubr.f32.gmra.mrb[0].mxu0 %v1560
        %v1703 = vpop.f32.mrb[0].mxu0
        %v1704 = vadd.f32 %v1527, %v1703
        %v1705 = vpop.f32.mrb[0].mxu0
        %1706 = vdwg.mxu0
        %vm1715 = vcmask 1046528
        %v1716 = vrot.slane %v1231, 1
        %v1717 = vrot.slane %v1232, 1
        %v1718 = vsel %vm1715, %v1716, %v1717
        %v1719 = vrot.slane %v1233, 1
        %v1720 = vsel %vm1715, %v1717, %v1719
        %v1721 = vrot.slane %v1235, 1
        %v1722 = vrot.slane %v1236, 1
        %v1723 = vsel %vm1715, %v1721, %v1722
        %v1724 = vrot.slane %v1237, 1
        %v1725 = vsel %vm1715, %v1722, %v1724
        %v1726 = vrot.slane %v1239, 1
        %v1727 = vrot.slane %v1240, 1
        %v1728 = vsel %vm1715, %v1726, %v1727
        %v1729 = vrot.slane %v1241, 1
        %v1730 = vsel %vm1715, %v1727, %v1729
        %v1731 = vrot.slane %v1243, 1
        %v1732 = vrot.slane %v1244, 1
        %v1733 = vsel %vm1715, %v1731, %v1732
        %v1734 = vrot.slane %v1245, 1
        %v1735 = vsel %vm1715, %v1732, %v1734
        %v1736 = vrot.slane %v1247, 1
        %v1737 = vrot.slane %v1248, 1
        %v1738 = vsel %vm1715, %v1736, %v1737
        %v1739 = vrot.slane %v1249, 1
        %v1740 = vsel %vm1715, %v1737, %v1739
        %v1741 = vrot.slane %v1251, 1
        %v1742 = vrot.slane %v1252, 1
        %v1743 = vsel %vm1715, %v1741, %v1742
        %v1744 = vrot.slane %v1253, 1
        %v1745 = vsel %vm1715, %v1742, %v1744
        %v1746 = vrot.slane %v1255, 1
        %v1747 = vrot.slane %v1256, 1
        %v1748 = vsel %vm1715, %v1746, %v1747
        %v1749 = vrot.slane %v1257, 1
        %v1750 = vsel %vm1715, %v1747, %v1749
        %v1751 = vrot.slane %v1259, 1
        %v1752 = vrot.slane %v1260, 1
        %v1753 = vsel %vm1715, %v1751, %v1752
        %v1754 = vrot.slane %v1261, 1
        %v1755 = vsel %vm1715, %v1752, %v1754
        %s1756 = scalar_lea.vmem %s4, 192
        %v1757 = vld [vmem:[%s1756] sm:$0xff]
        %v1758 = vld [vmem:[%s1756 + $0x8] sm:$0xff]
        %v1759 = vld [vmem:[%s1756 + $0x10] sm:$0xff]
        %v1760 = vld [vmem:[%s1756 + $0x18] sm:$0xff]
        %v1761 = vld [vmem:[%s1756 + $0x20] sm:$0xff]
        %v1762 = vld [vmem:[%s1756 + $0x28] sm:$0xff]
        %v1763 = vld [vmem:[%s1756 + $0x30] sm:$0xff]
        %v1764 = vld [vmem:[%s1756 + $0x38] sm:$0xff]
        %v1765 = vld [vmem:[%s1756 + $0x40] sm:$0xff]
        %v1766 = vld [vmem:[%s1756 + $0x48] sm:$0xff]
        %v1767 = vld [vmem:[%s1756 + $0x50] sm:$0xff]
        %v1768 = vld [vmem:[%s1756 + $0x58] sm:$0xff]
        %v1769 = vsel %vm1352, %v1718, 0
        %v1771 = vsel %vm1352, %v1720, 0
        %v1773 = vsel %vm1352, %v1723, 0
        %v1775 = vsel %vm1352, %v1725, 0
        %v1777 = vsel %vm1352, %v1728, 0
        %v1779 = vsel %vm1352, %v1730, 0
        %v1781 = vsel %vm1352, %v1733, 0
        %v1783 = vsel %vm1352, %v1735, 0
        %v1785 = vsel %vm1352, %v1738, 0
        %v1787 = vsel %vm1352, %v1740, 0
        %v1789 = vsel %vm1352, %v1743, 0
        %v1791 = vsel %vm1352, %v1745, 0
        %v1793 = vsel %vm1352, %v1748, 0
        %v1795 = vsel %vm1352, %v1750, 0
        %v1797 = vsel %vm1352, %v1753, 0
        %v1799 = vsel %vm1352, %v1755, 0
        %1801 = vmatprep.subr.mxu0 0.0
        %1802 = vmatpush1.msra.mxu0 %v1757
        %1803 = vmatprep.subr.mxu0 0.0
        %1804 = vmatpush1.msra.mxu0 %v1758
        %1805 = vmatprep.subr.mxu0 0.0
        %1806 = vmatpush1.msra.mxu0 %v1759
        %1807 = vmatprep.subr.mxu0 0.0
        %1808 = vmatpush1.msra.mxu0 %v1760
        %1809 = vmatprep.subr.mxu0 0.0
        %1810 = vmatpush1.msra.mxu0 %v1761
        %1811 = vmatprep.subr.mxu0 0.0
        %1812 = vmatpush1.msra.mxu0 %v1762
        %1813 = vmatprep.subr.mxu0 0.0
        %1814 = vmatpush1.msra.mxu0 %v1763
        %1815 = vmatprep.subr.mxu0 0.0
        %1816 = vmatpush1.msra.mxu0 %v1764
        %1817 = vmatprep.subr.mxu0 0.0
        %1818 = vmatpush1.msra.mxu0 %v1765
        %1819 = vmatprep.subr.mxu0 0.0
        %1820 = vmatpush1.msra.mxu0 %v1766
        %1821 = vmatprep.subr.mxu0 0.0
        %1822 = vmatpush1.msra.mxu0 %v1767
        %1823 = vmatprep.subr.mxu0 0.0
        %1824 = vmatpush1.msra.mxu0 %v1768
        %1825 = vmatprep.subr.mxu0 0.0
        %1826 = vmatpush1.msra.mxu0 0.0
        %1827 = vmatprep.subr.mxu0 0.0
        %1828 = vmatpush1.msra.mxu0 0.0
        %1829 = vmatprep.subr.mxu0 0.0
        %1830 = vmatpush1.msra.mxu0 0.0
        %1831 = vmatprep.subr.mxu0 0.0
        %1832 = vmatpush1.msra.mxu0 0.0
        %1833 = vmatprep.subr.mxu0 0.0
        %1834 = vmatpush1.msra.mxu0 0.0
        %1835 = vmatprep.subr.mxu0 0.0
        %1836 = vmatpush1.msra.mxu0 0.0
        %1837 = vmatprep.subr.mxu0 0.0
        %1838 = vmatpush1.msra.mxu0 0.0
        %1839 = vmatprep.subr.mxu0 0.0
        %1840 = vmatpush1.msra.mxu0 0.0
        %1841 = vmatprep.subr.mxu0 0.0
        %1842 = vmatpush1.msra.mxu0 0.0
        %1843 = vmatprep.subr.mxu0 0.0
        %1844 = vmatpush1.msra.mxu0 0.0
        %1845 = vmatprep.subr.mxu0 0.0
        %1846 = vmatpush1.msra.mxu0 0.0
        %1847 = vmatprep.subr.mxu0 0.0
        %1848 = vmatpush1.msra.mxu0 0.0
        %1849 = vmatprep.subr.mxu0 0.0
        %1850 = vmatpush1.msra.mxu0 0.0
        %1851 = vmatprep.subr.mxu0 0.0
        %1852 = vmatpush1.msra.mxu0 0.0
        %1853 = vmatprep.subr.mxu0 0.0
        %1854 = vmatpush1.msra.mxu0 0.0
        %1855 = vmatprep.subr.mxu0 0.0
        %1856 = vmatpush1.msra.mxu0 0.0
        %1857 = vmatprep.subr.mxu0 0.0
        %1858 = vmatpush1.msra.mxu0 0.0
        %1859 = vmatprep.subr.mxu0 0.0
        %1860 = vmatpush1.msra.mxu0 0.0
        %1861 = vmatprep.subr.mxu0 0.0
        %1862 = vmatpush1.msra.mxu0 0.0
        %1863 = vmatprep.subr.mxu0 0.0
        %1864 = vmatpush1.msra.mxu0 0.0
        %1865 = vmatprep.mubr.f32.mxu0 0.0
        %1866 = vmatmul.mubr.f32.gmra.mrb[0].mxu0 %v1769
        %v1867 = vpop.f32.mrb[0].mxu0
        %v1868 = vadd.f32 0.0, %v1867
        %v1869 = vpop.f32.mrb[0].mxu0
        %1870 = vmatprep.mubr.f32.mxu0 0.0
        %1871 = vmatmul.mubr.f32.gmra.mrb[0].mxu0 %v1771
        %v1872 = vpop.f32.mrb[0].mxu0
        %v1873 = vadd.f32 0.0, %v1872
        %v1874 = vpop.f32.mrb[0].mxu0
        %1875 = vmatprep.mubr.f32.mxu0 0.0
        %1876 = vmatmul.mubr.f32.gmra.mrb[0].mxu0 %v1773
        %v1877 = vpop.f32.mrb[0].mxu0
        %v1878 = vadd.f32 0.0, %v1877
        %v1879 = vpop.f32.mrb[0].mxu0
        %1880 = vmatprep.mubr.f32.mxu0 0.0
        %1881 = vmatmul.mubr.f32.gmra.mrb[0].mxu0 %v1775
        %v1882 = vpop.f32.mrb[0].mxu0
        %v1883 = vadd.f32 0.0, %v1882
        %v1884 = vpop.f32.mrb[0].mxu0
        %1885 = vmatprep.mubr.f32.mxu0 0.0
        %1886 = vmatmul.mubr.f32.gmra.mrb[0].mxu0 %v1777
        %v1887 = vpop.f32.mrb[0].mxu0
        %v1888 = vadd.f32 0.0, %v1887
        %v1889 = vpop.f32.mrb[0].mxu0
        %1890 = vmatprep.mubr.f32.mxu0 0.0
        %1891 = vmatmul.mubr.f32.gmra.mrb[0].mxu0 %v1779
        %v1892 = vpop.f32.mrb[0].mxu0
        %v1893 = vadd.f32 0.0, %v1892
        %v1894 = vpop.f32.mrb[0].mxu0
        %1895 = vmatprep.mubr.f32.mxu0 0.0
        %1896 = vmatmul.mubr.f32.gmra.mrb[0].mxu0 %v1781
        %v1897 = vpop.f32.mrb[0].mxu0
        %v1898 = vadd.f32 0.0, %v1897
        %v1899 = vpop.f32.mrb[0].mxu0
        %1900 = vmatprep.mubr.f32.mxu0 0.0
        %1901 = vmatmul.mubr.f32.gmra.mrb[0].mxu0 %v1783
        %v1902 = vpop.f32.mrb[0].mxu0
        %v1903 = vadd.f32 0.0, %v1902
        %v1904 = vpop.f32.mrb[0].mxu0
        %1905 = vmatprep.mubr.f32.mxu0 0.0
        %1906 = vmatmul.mubr.f32.gmra.mrb[0].mxu0 %v1785
        %v1907 = vpop.f32.mrb[0].mxu0
        %v1908 = vadd.f32 0.0, %v1907
        %v1909 = vpop.f32.mrb[0].mxu0
        %1910 = vmatprep.mubr.f32.mxu0 0.0
        %1911 = vmatmul.mubr.f32.gmra.mrb[0].mxu0 %v1787
        %v1912 = vpop.f32.mrb[0].mxu0
        %v1913 = vadd.f32 0.0, %v1912
        %v1914 = vpop.f32.mrb[0].mxu0
        %1915 = vmatprep.mubr.f32.mxu0 0.0
        %1916 = vmatmul.mubr.f32.gmra.mrb[0].mxu0 %v1789
        %v1917 = vpop.f32.mrb[0].mxu0
        %v1918 = vadd.f32 0.0, %v1917
        %v1919 = vpop.f32.mrb[0].mxu0
        %1920 = vmatprep.mubr.f32.mxu0 0.0
        %1921 = vmatmul.mubr.f32.gmra.mrb[0].mxu0 %v1791
        %v1922 = vpop.f32.mrb[0].mxu0
        %v1923 = vadd.f32 0.0, %v1922
        %v1924 = vpop.f32.mrb[0].mxu0
        %1925 = vmatprep.mubr.f32.mxu0 0.0
        %1926 = vmatmul.mubr.f32.gmra.mrb[0].mxu0 %v1793
        %v1927 = vpop.f32.mrb[0].mxu0
        %v1928 = vadd.f32 0.0, %v1927
        %v1929 = vpop.f32.mrb[0].mxu0
        %1930 = vmatprep.mubr.f32.mxu0 0.0
        %1931 = vmatmul.mubr.f32.gmra.mrb[0].mxu0 %v1795
        %v1932 = vpop.f32.mrb[0].mxu0
        %v1933 = vadd.f32 0.0, %v1932
        %v1934 = vpop.f32.mrb[0].mxu0
        %1935 = vmatprep.mubr.f32.mxu0 0.0
        %1936 = vmatmul.mubr.f32.gmra.mrb[0].mxu0 %v1797
        %v1937 = vpop.f32.mrb[0].mxu0
        %v1938 = vadd.f32 0.0, %v1937
        %v1939 = vpop.f32.mrb[0].mxu0
        %1940 = vmatprep.mubr.f32.mxu0 0.0
        %1941 = vmatmul.mubr.f32.gmra.mrb[0].mxu0 %v1799
        %v1942 = vpop.f32.mrb[0].mxu0
        %v1943 = vadd.f32 0.0, %v1942
        %v1944 = vpop.f32.mrb[0].mxu0
        %1945 = vdwg.mxu0
        %v1946 = vadd.f32 %v1629, %v1868
        %v1947 = vadd.f32 %v1634, %v1873
        %v1948 = vadd.f32 %v1639, %v1878
        %v1949 = vadd.f32 %v1644, %v1883
        %v1950 = vadd.f32 %v1649, %v1888
        %v1951 = vadd.f32 %v1654, %v1893
        %v1952 = vadd.f32 %v1659, %v1898
        %v1953 = vadd.f32 %v1664, %v1903
        %v1954 = vadd.f32 %v1669, %v1908
        %v1955 = vadd.f32 %v1674, %v1913
        %v1956 = vadd.f32 %v1679, %v1918
        %v1957 = vadd.f32 %v1684, %v1923
        %v1958 = vadd.f32 %v1689, %v1928
        %v1959 = vadd.f32 %v1694, %v1933
        %v1960 = vadd.f32 %v1699, %v1938
        %v1961 = vadd.f32 %v1704, %v1943
        %v1962 = vld [vmem:[%s5] sm:$0x1]
        %v1964 = vlaneseq
        %v1965 = vshrl.u32 %v1964, 7
        %v1966 = vsub.s32 0, %v1965
        %v1967 = vrot.slane %v1962, %v1966
        %v1969 = vmul.f32 %v1946, %v1967
        %v1970 = vmul.f32 %v1947, %v1967
        %v1971 = vmul.f32 %v1948, %v1967
        %v1972 = vmul.f32 %v1949, %v1967
        %v1973 = vmul.f32 %v1950, %v1967
        %v1974 = vmul.f32 %v1951, %v1967
        %v1975 = vmul.f32 %v1952, %v1967
        %v1976 = vmul.f32 %v1953, %v1967
        %v1977 = vmul.f32 %v1954, %v1967
        %v1978 = vmul.f32 %v1955, %v1967
        %v1979 = vmul.f32 %v1956, %v1967
        %v1980 = vmul.f32 %v1957, %v1967
        %v1981 = vmul.f32 %v1958, %v1967
        %v1982 = vmul.f32 %v1959, %v1967
        %v1983 = vmul.f32 %v1960, %v1967
        %v1984 = vmul.f32 %v1961, %v1967
        %v1985 = vld [vmem:[%s6] sm:$0x1]
        %v1987 = vlaneseq
        %v1988 = vshrl.u32 %v1987, 7
        %v1989 = vsub.s32 0, %v1988
        %v1990 = vrot.slane %v1985, %v1989
        %v1992 = vadd.f32 %v1969, %v1990
        %v1993 = vadd.f32 %v1970, %v1990
        %v1994 = vadd.f32 %v1971, %v1990
        %v1995 = vadd.f32 %v1972, %v1990
        %v1996 = vadd.f32 %v1973, %v1990
        %v1997 = vadd.f32 %v1974, %v1990
        %v1998 = vadd.f32 %v1975, %v1990
        %v1999 = vadd.f32 %v1976, %v1990
        %v2000 = vadd.f32 %v1977, %v1990
        %v2001 = vadd.f32 %v1978, %v1990
        %v2002 = vadd.f32 %v1979, %v1990
        %v2003 = vadd.f32 %v1980, %v1990
        %v2004 = vadd.f32 %v1981, %v1990
        %v2005 = vadd.f32 %v1982, %v1990
        %v2006 = vadd.f32 %v1983, %v1990
        %v2007 = vadd.f32 %v1984, %v1990
        %v2008 = vmax.f32 %v1992, 0.0
        %v2009 = vmax.f32 %v1993, 0.0
        %v2010 = vmax.f32 %v1994, 0.0
        %v2011 = vmax.f32 %v1995, 0.0
        %v2012 = vmax.f32 %v1996, 0.0
        %v2013 = vmax.f32 %v1997, 0.0
        %v2014 = vmax.f32 %v1998, 0.0
        %v2015 = vmax.f32 %v1999, 0.0
        %v2016 = vmax.f32 %v2000, 0.0
        %v2017 = vmax.f32 %v2001, 0.0
        %v2018 = vmax.f32 %v2002, 0.0
        %v2019 = vmax.f32 %v2003, 0.0
        %v2020 = vmax.f32 %v2004, 0.0
        %v2021 = vmax.f32 %v2005, 0.0
        %v2022 = vmax.f32 %v2006, 0.0
        %v2023 = vmax.f32 %v2007, 0.0
        %v2024 = vld [vmem:[%s7] sm:$0xff]
        %v2025 = vld [vmem:[%s7 + $0x8] sm:$0xff]
        %v2026 = vld [vmem:[%s7 + $0x10] sm:$0xff]
        %v2027 = vld [vmem:[%s7 + $0x18] sm:$0xff]
        %v2029 = vsel %vm1196, %v2008, 0
        %v2032 = vsel %vm1196, %v2009, 0
        %v2035 = vsel %vm1196, %v2010, 0
        %v2038 = vsel %vm1196, %v2011, 0
        %v2041 = vsel %vm1196, %v2012, 0
        %v2044 = vsel %vm1196, %v2013, 0
        %v2047 = vsel %vm1196, %v2014, 0
        %v2050 = vsel %vm1196, %v2015, 0
        %v2053 = vsel %vm1196, %v2016, 0
        %v2056 = vsel %vm1196, %v2017, 0
        %v2059 = vsel %vm1196, %v2018, 0
        %v2062 = vsel %vm1196, %v2019, 0
        %v2065 = vsel %vm1196, %v2020, 0
        %v2068 = vsel %vm1196, %v2021, 0
        %v2071 = vsel %vm1196, %v2022, 0
        %v2074 = vsel %vm1196, %v2023, 0
        %2076 = vmatprep.subr.mxu0 0.0
        %2077 = vmatpush1.msra.mxu0 %v2024
        %2078 = vmatprep.subr.mxu0 0.0
        %2079 = vmatpush1.msra.mxu0 %v2025
        %2080 = vmatprep.subr.mxu0 0.0
        %2081 = vmatpush1.msra.mxu0 %v2026
        %2082 = vmatprep.subr.mxu0 0.0
        %2083 = vmatpush1.msra.mxu0 %v2027
        %2084 = vmatprep.subr.mxu0 0.0
        %2085 = vmatpush1.msra.mxu0 0.0
        %2086 = vmatprep.subr.mxu0 0.0
        %2087 = vmatpush1.msra.mxu0 0.0
        %2088 = vmatprep.subr.mxu0 0.0
        %2089 = vmatpush1.msra.mxu0 0.0
        %2090 = vmatprep.subr.mxu0 0.0
        %2091 = vmatpush1.msra.mxu0 0.0
        %2092 = vmatprep.subr.mxu0 0.0
        %2093 = vmatpush1.msra.mxu0 0.0
        %2094 = vmatprep.subr.mxu0 0.0
        %2095 = vmatpush1.msra.mxu0 0.0
        %2096 = vmatprep.subr.mxu0 0.0
        %2097 = vmatpush1.msra.mxu0 0.0
        %2098 = vmatprep.subr.mxu0 0.0
        %2099 = vmatpush1.msra.mxu0 0.0
        %2100 = vmatprep.subr.mxu0 0.0
        %2101 = vmatpush1.msra.mxu0 0.0
        %2102 = vmatprep.subr.mxu0 0.0
        %2103 = vmatpush1.msra.mxu0 0.0
        %2104 = vmatprep.subr.mxu0 0.0
        %2105 = vmatpush1.msra.mxu0 0.0
        %2106 = vmatprep.subr.mxu0 0.0
        %2107 = vmatpush1.msra.mxu0 0.0
        %2108 = vmatprep.subr.mxu0 0.0
        %2109 = vmatpush1.msra.mxu0 0.0
        %2110 = vmatprep.subr.mxu0 0.0
        %2111 = vmatpush1.msra.mxu0 0.0
        %2112 = vmatprep.subr.mxu0 0.0
        %2113 = vmatpush1.msra.mxu0 0.0
        %2114 = vmatprep.subr.mxu0 0.0
        %2115 = vmatpush1.msra.mxu0 0.0
        %2116 = vmatprep.subr.mxu0 0.0
        %2117 = vmatpush1.msra.mxu0 0.0
        %2118 = vmatprep.subr.mxu0 0.0
        %2119 = vmatpush1.msra.mxu0 0.0
        %2120 = vmatprep.subr.mxu0 0.0
        %2121 = vmatpush1.msra.mxu0 0.0
        %2122 = vmatprep.subr.mxu0 0.0
        %2123 = vmatpush1.msra.mxu0 0.0
        %2124 = vmatprep.subr.mxu0 0.0
        %2125 = vmatpush1.msra.mxu0 0.0
        %2126 = vmatprep.subr.mxu0 0.0
        %2127 = vmatpush1.msra.mxu0 0.0
        %2128 = vmatprep.subr.mxu0 0.0
        %2129 = vmatpush1.msra.mxu0 0.0
        %2130 = vmatprep.subr.mxu0 0.0
        %2131 = vmatpush1.msra.mxu0 0.0
        %2132 = vmatprep.subr.mxu0 0.0
        %2133 = vmatpush1.msra.mxu0 0.0
        %2134 = vmatprep.subr.mxu0 0.0
        %2135 = vmatpush1.msra.mxu0 0.0
        %2136 = vmatprep.subr.mxu0 0.0
        %2137 = vmatpush1.msra.mxu0 0.0
        %2138 = vmatprep.subr.mxu0 0.0
        %2139 = vmatpush1.msra.mxu0 0.0
        %2140 = vmatprep.mubr.f32.mxu0 0.0
        %2141 = vmatmul.mubr.f32.gmra.mrb[0].mxu0 %v2029
        %v2142 = vpop.f32.mrb[0].mxu0
        %v2143 = vadd.f32 0.0, %v2142
        %v2144 = vpop.f32.mrb[0].mxu0
        %2145 = vmatprep.mubr.f32.mxu0 0.0
        %2146 = vmatmul.mubr.f32.gmra.mrb[0].mxu0 %v2032
        %v2147 = vpop.f32.mrb[0].mxu0
        %v2148 = vadd.f32 0.0, %v2147
        %v2149 = vpop.f32.mrb[0].mxu0
        %2150 = vmatprep.mubr.f32.mxu0 0.0
        %2151 = vmatmul.mubr.f32.gmra.mrb[0].mxu0 %v2035
        %v2152 = vpop.f32.mrb[0].mxu0
        %v2153 = vadd.f32 0.0, %v2152
        %v2154 = vpop.f32.mrb[0].mxu0
        %2155 = vmatprep.mubr.f32.mxu0 0.0
        %2156 = vmatmul.mubr.f32.gmra.mrb[0].mxu0 %v2038
        %v2157 = vpop.f32.mrb[0].mxu0
        %v2158 = vadd.f32 0.0, %v2157
        %v2159 = vpop.f32.mrb[0].mxu0
        %2160 = vmatprep.mubr.f32.mxu0 0.0
        %2161 = vmatmul.mubr.f32.gmra.mrb[0].mxu0 %v2041
        %v2162 = vpop.f32.mrb[0].mxu0
        %v2163 = vadd.f32 0.0, %v2162
        %v2164 = vpop.f32.mrb[0].mxu0
        %2165 = vmatprep.mubr.f32.mxu0 0.0
        %2166 = vmatmul.mubr.f32.gmra.mrb[0].mxu0 %v2044
        %v2167 = vpop.f32.mrb[0].mxu0
        %v2168 = vadd.f32 0.0, %v2167
        %v2169 = vpop.f32.mrb[0].mxu0
        %2170 = vmatprep.mubr.f32.mxu0 0.0
        %2171 = vmatmul.mubr.f32.gmra.mrb[0].mxu0 %v2047
        %v2172 = vpop.f32.mrb[0].mxu0
        %v2173 = vadd.f32 0.0, %v2172
        %v2174 = vpop.f32.mrb[0].mxu0
        %2175 = vmatprep.mubr.f32.mxu0 0.0
        %2176 = vmatmul.mubr.f32.gmra.mrb[0].mxu0 %v2050
        %v2177 = vpop.f32.mrb[0].mxu0
        %v2178 = vadd.f32 0.0, %v2177
        %v2179 = vpop.f32.mrb[0].mxu0
        %2180 = vmatprep.mubr.f32.mxu0 0.0
        %2181 = vmatmul.mubr.f32.gmra.mrb[0].mxu0 %v2053
        %v2182 = vpop.f32.mrb[0].mxu0
        %v2183 = vadd.f32 0.0, %v2182
        %v2184 = vpop.f32.mrb[0].mxu0
        %2185 = vmatprep.mubr.f32.mxu0 0.0
        %2186 = vmatmul.mubr.f32.gmra.mrb[0].mxu0 %v2056
        %v2187 = vpop.f32.mrb[0].mxu0
        %v2188 = vadd.f32 0.0, %v2187
        %v2189 = vpop.f32.mrb[0].mxu0
        %2190 = vmatprep.mubr.f32.mxu0 0.0
        %2191 = vmatmul.mubr.f32.gmra.mrb[0].mxu0 %v2059
        %v2192 = vpop.f32.mrb[0].mxu0
        %v2193 = vadd.f32 0.0, %v2192
        %v2194 = vpop.f32.mrb[0].mxu0
        %2195 = vmatprep.mubr.f32.mxu0 0.0
        %2196 = vmatmul.mubr.f32.gmra.mrb[0].mxu0 %v2062
        %v2197 = vpop.f32.mrb[0].mxu0
        %v2198 = vadd.f32 0.0, %v2197
        %v2199 = vpop.f32.mrb[0].mxu0
        %2200 = vmatprep.mubr.f32.mxu0 0.0
        %2201 = vmatmul.mubr.f32.gmra.mrb[0].mxu0 %v2065
        %v2202 = vpop.f32.mrb[0].mxu0
        %v2203 = vadd.f32 0.0, %v2202
        %v2204 = vpop.f32.mrb[0].mxu0
        %2205 = vmatprep.mubr.f32.mxu0 0.0
        %2206 = vmatmul.mubr.f32.gmra.mrb[0].mxu0 %v2068
        %v2207 = vpop.f32.mrb[0].mxu0
        %v2208 = vadd.f32 0.0, %v2207
        %v2209 = vpop.f32.mrb[0].mxu0
        %2210 = vmatprep.mubr.f32.mxu0 0.0
        %2211 = vmatmul.mubr.f32.gmra.mrb[0].mxu0 %v2071
        %v2212 = vpop.f32.mrb[0].mxu0
        %v2213 = vadd.f32 0.0, %v2212
        %v2214 = vpop.f32.mrb[0].mxu0
        %2215 = vmatprep.mubr.f32.mxu0 0.0
        %2216 = vmatmul.mubr.f32.gmra.mrb[0].mxu0 %v2074
        %v2217 = vpop.f32.mrb[0].mxu0
        %v2218 = vadd.f32 0.0, %v2217
        %v2219 = vpop.f32.mrb[0].mxu0
        %2220 = vdwg.mxu0
        %s2221 = smul.u32 %s29, 128
        %s2222 = scalar_lea.vmem %s371, %s2221
        %v2223 = vld [vmem:[%s2222] sm:$0xff]
        %v2224 = vld [vmem:[%s2222 + $0x8] sm:$0xff]
        %v2225 = vld [vmem:[%s2222 + $0x10] sm:$0xff]
        %v2226 = vld [vmem:[%s2222 + $0x18] sm:$0xff]
        %v2227 = vld [vmem:[%s2222 + $0x20] sm:$0xff]
        %v2228 = vld [vmem:[%s2222 + $0x28] sm:$0xff]
        %v2229 = vld [vmem:[%s2222 + $0x30] sm:$0xff]
        %v2230 = vld [vmem:[%s2222 + $0x38] sm:$0xff]
        %v2231 = vld [vmem:[%s2222 + $0x40] sm:$0xff]
        %v2232 = vld [vmem:[%s2222 + $0x48] sm:$0xff]
        %v2233 = vld [vmem:[%s2222 + $0x50] sm:$0xff]
        %v2234 = vld [vmem:[%s2222 + $0x58] sm:$0xff]
        %v2235 = vld [vmem:[%s2222 + $0x60] sm:$0xff]
        %v2236 = vld [vmem:[%s2222 + $0x68] sm:$0xff]
        %v2237 = vld [vmem:[%s2222 + $0x70] sm:$0xff]
        %v2238 = vld [vmem:[%s2222 + $0x78] sm:$0xff]
        %v2239 = vld [vmem:[%s8] sm:$0x1]
        %v2241 = vlaneseq
        %v2242 = vshrl.u32 %v2241, 7
        %v2243 = vsub.s32 0, %v2242
        %v2244 = vrot.slane %v2239, %v2243
        %v2246 = vmul.f32 %v2143, %v2244
        %v2247 = vmul.f32 %v2148, %v2244
        %v2248 = vmul.f32 %v2153, %v2244
        %v2249 = vmul.f32 %v2158, %v2244
        %v2250 = vmul.f32 %v2163, %v2244
        %v2251 = vmul.f32 %v2168, %v2244
        %v2252 = vmul.f32 %v2173, %v2244
        %v2253 = vmul.f32 %v2178, %v2244
        %v2254 = vmul.f32 %v2183, %v2244
        %v2255 = vmul.f32 %v2188, %v2244
        %v2256 = vmul.f32 %v2193, %v2244
        %v2257 = vmul.f32 %v2198, %v2244
        %v2258 = vmul.f32 %v2203, %v2244
        %v2259 = vmul.f32 %v2208, %v2244
        %v2260 = vmul.f32 %v2213, %v2244
        %v2261 = vmul.f32 %v2218, %v2244
        %v2262 = vld [vmem:[%s9] sm:$0x1]
        %v2264 = vlaneseq
        %v2265 = vshrl.u32 %v2264, 7
        %v2266 = vsub.s32 0, %v2265
        %v2267 = vrot.slane %v2262, %v2266
        %v2269 = vadd.f32 %v2246, %v2267
        %v2270 = vadd.f32 %v2247, %v2267
        %v2271 = vadd.f32 %v2248, %v2267
        %v2272 = vadd.f32 %v2249, %v2267
        %v2273 = vadd.f32 %v2250, %v2267
        %v2274 = vadd.f32 %v2251, %v2267
        %v2275 = vadd.f32 %v2252, %v2267
        %v2276 = vadd.f32 %v2253, %v2267
        %v2277 = vadd.f32 %v2254, %v2267
        %v2278 = vadd.f32 %v2255, %v2267
        %v2279 = vadd.f32 %v2256, %v2267
        %v2280 = vadd.f32 %v2257, %v2267
        %v2281 = vadd.f32 %v2258, %v2267
        %v2282 = vadd.f32 %v2259, %v2267
        %v2283 = vadd.f32 %v2260, %v2267
        %v2284 = vadd.f32 %v2261, %v2267
        %v2285 = vadd.f32 %v2269, %v2223
        %v2286 = vadd.f32 %v2270, %v2224
        %v2287 = vadd.f32 %v2271, %v2225
        %v2288 = vadd.f32 %v2272, %v2226
        %v2289 = vadd.f32 %v2273, %v2227
        %v2290 = vadd.f32 %v2274, %v2228
        %v2291 = vadd.f32 %v2275, %v2229
        %v2292 = vadd.f32 %v2276, %v2230
        %v2293 = vadd.f32 %v2277, %v2231
        %v2294 = vadd.f32 %v2278, %v2232
        %v2295 = vadd.f32 %v2279, %v2233
        %v2296 = vadd.f32 %v2280, %v2234
        %v2297 = vadd.f32 %v2281, %v2235
        %v2298 = vadd.f32 %v2282, %v2236
        %v2299 = vadd.f32 %v2283, %v2237
        %v2300 = vadd.f32 %v2284, %v2238
        %v2301 = vmax.f32 %v2285, 0.0
        %v2302 = vmax.f32 %v2286, 0.0
        %v2303 = vmax.f32 %v2287, 0.0
        %v2304 = vmax.f32 %v2288, 0.0
        %v2305 = vmax.f32 %v2289, 0.0
        %v2306 = vmax.f32 %v2290, 0.0
        %v2307 = vmax.f32 %v2291, 0.0
        %v2308 = vmax.f32 %v2292, 0.0
        %v2309 = vmax.f32 %v2293, 0.0
        %v2310 = vmax.f32 %v2294, 0.0
        %v2311 = vmax.f32 %v2295, 0.0
        %v2312 = vmax.f32 %v2296, 0.0
        %v2313 = vmax.f32 %v2297, 0.0
        %v2314 = vmax.f32 %v2298, 0.0
        %v2315 = vmax.f32 %v2299, 0.0
        %v2316 = vmax.f32 %v2300, 0.0
        %2317 = vst [vmem:[%s366] sm:$0xff] %v2301
        %2318 = vst [vmem:[%s366 + $0x8] sm:$0xff] %v2302
        %2319 = vst [vmem:[%s366 + $0x10] sm:$0xff] %v2303
        %2320 = vst [vmem:[%s366 + $0x18] sm:$0xff] %v2304
        %2321 = vst [vmem:[%s366 + $0x20] sm:$0xff] %v2305
        %2322 = vst [vmem:[%s366 + $0x28] sm:$0xff] %v2306
        %2323 = vst [vmem:[%s366 + $0x30] sm:$0xff] %v2307
        %2324 = vst [vmem:[%s366 + $0x38] sm:$0xff] %v2308
        %2325 = vst [vmem:[%s366 + $0x40] sm:$0xff] %v2309
        %2326 = vst [vmem:[%s366 + $0x48] sm:$0xff] %v2310
        %2327 = vst [vmem:[%s366 + $0x50] sm:$0xff] %v2311
        %2328 = vst [vmem:[%s366 + $0x58] sm:$0xff] %v2312
        %2329 = vst [vmem:[%s366 + $0x60] sm:$0xff] %v2313
        %2330 = vst [vmem:[%s366 + $0x68] sm:$0xff] %v2314
        %2331 = vst [vmem:[%s366 + $0x70] sm:$0xff] %v2315
        %2332 = vst [vmem:[%s366 + $0x78] sm:$0xff] %v2316
        %s2333 = sand.u32 %s261, 1
        %s2334 = scalar_lea.sflag [#allocation4], %s2333
        %s2335 = sand.u32 %s261, 1
        %s2336 = smul.addr %s2335, 128
        %s2337 = scalar_lea.vmem [#allocation3], %s2336
        // Predicated region
        $region65: #{tpu_custom_call.1} parent=59 // pred_check
          %p2338 = pneg %p271
        $region66: #{tpu_custom_call.1} parent=59 // pred_check_branch
          %2340 = sbr.rel (%p2338) target = $region68
        $region67: #{tpu_custom_call.1} parent=59 // pred_region
          %s2341 = smul.u32 16, %s29
          %s2343 = ssub.s32 2048, 2048
          %2344 = vsyncadd %s2334, %s2343
          %s2345 = smul.addr %s28, 32
          %s2346 = sadd.s32 %s2341, %s2345
          %s2347 = smul.addr %s2346, 128
          %s2348 = scalar_lea.hbm %s10, %s2347
          %s2349 = sshll.u32 %s2337, 4
          %s2350 = int_to_ptr.vmem [resolvable:$true] %s2349
          %2355 = dma.vmem_to_hbm [thread:$0]  %s2350, 2048, %s2348, %s2334, 128, 128, 8
        $region68: #{tpu_custom_call.1} parent=59 // pred_fallthru
          _
      $region60: #{tpu_custom_call.1} parent=5 // pred_fallthru
        _
      %p2356 = scmp.le.s32.totalorder 2, %s19
      // Predicated region
      $region69: #{tpu_custom_call.1} parent=5 // pred_check
        %p2357 = pneg %p2356
      $region70: #{tpu_custom_call.1} parent=5 // pred_check_branch
        %2359 = sbr.rel (%p2357) target = $region72
      $region71: #{tpu_custom_call.1} parent=5 // pred_region
        %s2360 = ssub.s32 %s19, 2
        // Predicated region
        $region73: #{tpu_custom_call.1} parent=71 // pred_check
          %p2361 = pneg %p277
        $region74: #{tpu_custom_call.1} parent=71 // pred_check_branch
          %2363 = sbr.rel (%p2361) target = $region76
        $region75: #{tpu_custom_call.1} parent=71 // pred_region
          %s2364 = sand.u32 %s262, 1
          %s2365 = scalar_lea.sflag [#allocation4], %s2364
          %s2366 = sand.u32 %s262, 1
          %s2367 = smul.addr %s2366, 128
          %s2368 = scalar_lea.vmem [#allocation3], %s2367
          %2369 = dma.done %s2365, 2048
        $region76: #{tpu_custom_call.1} parent=71 // pred_fallthru
          _
      $region72: #{tpu_custom_call.1} parent=5 // pred_fallthru
        _
    $region6: #{tpu_custom_call.1} parent=1 // loop_footer
      %s23 = sadd.s32 1, %s19
    $region7: #{tpu_custom_call.1} parent=1 // loop_footer_branch
      %18 = sbr.rel target = $region3
    $region8: #{tpu_custom_call.1} parent=1 // loop_exit
      _
    %2370 = vsyncpa [#allocation4], 1
    %s2371 = scalar_lea.sflag [#allocation4], 1
    %2372 = vsyncpa %s2371, 1

</llo_original>
